<compile_context>
chip_gen: v7x
topology: tpu7x:2x2x1
jax: 0.10.0
libtpu: 0.0.40
codegen_flags: <defaults>
</compile_context>

<pallas_src>
import jax
import jax.numpy as jnp
import numpy as np
from jax.experimental import pallas as pl
from jax.experimental.pallas import tpu as pltpu

CFG = {
    "block_size": 32,
    "embedding_size": 64,
    "attention_head_count": 4,
    "layer_count": 4,
}
E = CFG["embedding_size"]
H = CFG["attention_head_count"]
HS = E // H
L = CFG["layer_count"]
LN_EPS = 1e-5


def _layernorm(x, g, b):
    mu = jnp.mean(x, axis=-1, keepdims=True)
    var = jnp.mean((x - mu) ** 2, axis=-1, keepdims=True)
    return (x - mu) * jax.lax.rsqrt(var + LN_EPS) * g + b


def _kernel(x_ref, kvmask_ref, summat_ref, cbias_ref,
            ln1g_ref, ln1b_ref, wqkv_ref, wpr_ref, bpr_ref,
            ln2g_ref, ln2b_ref, w1_ref, b1_ref, w2_ref, b2_ref,
            lnfg_ref, lnfb_ref, wlm_ref, blm_ref, out_ref):
    bf = jnp.bfloat16
    trans_b = (((1,), (1,)), ((), ()))   # contract last dims (q @ k^T, no transpose)

    kvmask = kvmask_ref[...]             # (H*MB, E)    bf16 0/1 head block-diag
    summat = summat_ref[...]             # (H*MB, H*MB) bf16 chunk-sum block-diag
    cbias = cbias_ref[...]               # (MB, H*MB)   f32 additive causal+batch mask

    x = x_ref[...]                       # (MB, E) f32 residual stream (tok+pos pre-added)

    for l in range(L):                   # static unroll over transformer blocks
        # ---- multi-head causal self-attention (residual branch) ----
        xl = _layernorm(x, ln1g_ref[l], ln1b_ref[l])
        qkv = jnp.dot(xl.astype(bf), wqkv_ref[l],
                      preferred_element_type=jnp.float32)          # (MB, 3E)
        q = qkv[:, :E].astype(bf)        # score scale already folded into wq
        k = qkv[:, E:2 * E].astype(bf)
        v = qkv[:, 2 * E:].astype(bf)

        # Block-diagonal K / V over (head, batch): row block h keeps only head-h
        # features.  bf16 masking halves VPU work / vreg pressure (v6e/v7x).
        k_bd = jnp.concatenate([k] * H, axis=0) * kvmask            # (H*MB, E)
        v_bd = jnp.concatenate([v] * H, axis=0) * kvmask            # (H*MB, E)

        # Scores for all heads AND all batch elements of this step at once.
        s = jax.lax.dot_general(q, k_bd, trans_b,
                                preferred_element_type=jnp.float32)  # (MB, H*MB)
        s = s + cbias                    # causal + cross-batch mask (0 / -1e30)
        # Per-row (cross-head) shift is an exact softmax shift per T-chunk.
        s = s - jnp.max(s, axis=-1, keepdims=True)
        p = jnp.exp(s)                   # masked entries underflow to exactly 0
        den = jnp.dot(p.astype(bf), summat,
                      preferred_element_type=jnp.float32)            # chunk sums
        # +1e-30: fully-masked cross-batch chunks have den == 0; keeps 0*inf -> 0.
        pn = (p * pl.reciprocal(den + 1e-30, approx=False)).astype(bf)
        # attention @ V lands head-concatenated in the correct lane positions.
        sa = jnp.dot(pn, v_bd, preferred_element_type=jnp.float32)   # (MB, E)
        x = x + jnp.dot(sa.astype(bf), wpr_ref[l],
                        preferred_element_type=jnp.float32) + bpr_ref[l]

        # ---- feed-forward (residual branch) ----
        xl2 = _layernorm(x, ln2g_ref[l], ln2b_ref[l])
        hdn = jnp.dot(xl2.astype(bf), w1_ref[l],
                      preferred_element_type=jnp.float32) + b1_ref[l]
        hdn = jnp.maximum(hdn, 0.0)
        x = x + jnp.dot(hdn.astype(bf), w2_ref[l],
                        preferred_element_type=jnp.float32) + b2_ref[l]

    # ---- final layernorm + lm_head (vocab padded to a lane-dense width) ----
    xf = _layernorm(x, lnfg_ref[0], lnfb_ref[0])
    out_ref[...] = jnp.dot(xf.astype(bf), wlm_ref[...],
                           preferred_element_type=jnp.float32) + blm_ref[0]


def _const_spec(arr):
    shape = arr.shape
    return pl.BlockSpec(shape, lambda i, _n=len(shape): (0,) * _n)


def _choose_bb(B, T, target_rows=256):
    """Largest divisor BB of B with BB*T <= target_rows; when the grid has more
    than one step, MB must stay sublane-friendly (multiple of 8).  Falls back to
    a single grid step (BB = B)."""
    cands = [d for d in range(1, B + 1)
             if B % d == 0 and d * T <= target_rows
             and (d == B or (d * T) % 8 == 0)]
    return max(cands) if cands else B


def bigram_lm_forward(index, params, targets=None):
    """index: (B, T) int32 token ids. Returns (logits, loss) like the PyTorch module."""
    B, T = index.shape
    V = params["wlm"].shape[1]
    VP = ((V + 127) // 128) * 128        # lane-dense (multiple-of-128) vocab padding
    bf = jnp.bfloat16

    # Embedding gather (data-dependent, plain-JAX glue); pos add hoisted here so
    # the kernel never re-materializes a constant concatenate per grid step.
    x0 = (params["tok_emb"][index] + params["pos_emb"][:T][None, :, :])
    x0 = x0.astype(jnp.float32).reshape(B * T, E)

    # Fixed-MB grid: keeps MXU rows full at small B (single step, no per-step
    # overhead on 1-TC chips) and bounds per-step VMEM at large B while exposing
    # a "parallel" axis for v7x's two TensorCores.
    BB = _choose_bb(B, T)
    MB = BB * T
    n_blocks = B // BB
    HM = H * MB

    # Static block-diagonal helper matrices (tiny, built once on host).
    kvmask = jnp.asarray(np.kron(np.eye(H), np.ones((MB, HS))), bf)        # (HM, E)
    summat = jnp.asarray(np.kron(np.eye(H * BB), np.ones((T, T))), bf)     # (HM, HM)
    tril = np.tril(np.ones((T, T)))
    cb_block = np.where(np.kron(np.eye(BB), tril) > 0, 0.0, -1e30)         # (MB, MB)
    cbias = jnp.asarray(np.tile(cb_block, (1, H)), jnp.float32)            # (MB, HM)

    # bf16 matmul weights (f32 MXU accumulation); LN params / biases stay f32.
    # QKV fused into one (E, 3E) weight; E**-0.5 score scale folded into Q columns.
    wqkv = jnp.concatenate(
        [params["wq"] * (E ** -0.5), params["wk"], params["wv"]], axis=-1).astype(bf)
    wlm = jnp.pad(params["wlm"], ((0, 0), (0, VP - V))).astype(bf)
    blm = jnp.pad(params["blm"], ((0, 0), (0, VP - V)))
    weights = [
        params["ln1g"], params["ln1b"], wqkv,
        params["wpr"].astype(bf), params["bpr"],
        params["ln2g"], params["ln2b"],
        params["w1"].astype(bf), params["b1"],
        params["w2"].astype(bf), params["b2"],
        params["lnfg"], params["lnfb"], wlm, blm,
    ]

    consts = [kvmask, summat, cbias]
    in_specs = [pl.BlockSpec((MB, E), lambda i: (i, 0))]
    in_specs += [_const_spec(a) for a in consts + weights]

    logits_padded = pl.pallas_call(
        _kernel,
        out_shape=jax.ShapeDtypeStruct((B * T, VP), jnp.float32),
        grid_spec=pltpu.PrefetchScalarGridSpec(
            num_scalar_prefetch=0,
            grid=(n_blocks,),
            in_specs=in_specs,
            out_specs=pl.BlockSpec((MB, VP), lambda i: (i, 0)),
        ),
        compiler_params=pltpu.CompilerParams(
            dimension_semantics=("parallel",),
            vmem_limit_bytes=32 * 1024 * 1024,
        ),
    )(x0, *consts, *weights)

    logits = logits_padded.reshape(B, T, VP)[:, :, :V]

    loss = None
    if targets is not None:
        # cross-entropy in plain JAX glue, matching torch.nn.functional.cross_entropy
        lf = logits.reshape(-1, V)
        tf = targets.reshape(-1)
        logp = jax.nn.log_softmax(lf, axis=-1)
        loss = -jnp.take_along_axis(logp, tf[:, None], axis=1).mean()
    return logits, loss


def init_params(key, vocab_size):
    ks = jax.random.split(key, 13)

    def lin_w(k, fan_in, shape):
        bound = 1.0 / (fan_in ** 0.5)   # PyTorch nn.Linear default init range
        return jax.random.uniform(k, shape, jnp.float32, -bound, bound)

    return {
        "tok_emb": jax.random.normal(ks[0], (vocab_size, E), jnp.float32),
        "pos_emb": jax.random.normal(ks[1], (CFG["block_size"], E), jnp.float32),
        "ln1g": jnp.ones((L, E), jnp.float32), "ln1b": jnp.zeros((L, E), jnp.float32),
        "wq": lin_w(ks[2], E, (L, E, E)),
        "wk": lin_w(ks[3], E, (L, E, E)),
        "wv": lin_w(ks[4], E, (L, E, E)),
        "wpr": lin_w(ks[5], E, (L, E, E)),
        "bpr": lin_w(ks[6], E, (L, E)),
        "ln2g": jnp.ones((L, E), jnp.float32), "ln2b": jnp.zeros((L, E), jnp.float32),
        "w1": lin_w(ks[7], E, (L, E, 4 * E)),
        "b1": lin_w(ks[8], E, (L, 4 * E)),
        "w2": lin_w(ks[9], 4 * E, (L, 4 * E, E)),
        "b2": lin_w(ks[10], 4 * E, (L, E)),
        "lnfg": jnp.ones((1, E), jnp.float32), "lnfb": jnp.zeros((1, E), jnp.float32),
        "wlm": lin_w(ks[11], E, (E, vocab_size)),
        "blm": lin_w(ks[12], E, (1, vocab_size)),
    }


def reference_forward(index, p):
    """Plain-JAX transcription of the PyTorch forward, with the same bf16
    matmul-operand casts (f32 accumulation) the kernel uses, for validation."""
    bf = jnp.bfloat16
    B, T = index.shape
    x = (p["tok_emb"][index] + p["pos_emb"][:T][None]).astype(jnp.float32)
    mask = jnp.tril(jnp.ones((T, T), bool))

    def ln(x, g, b):
        mu = x.mean(-1, keepdims=True)
        var = ((x - mu) ** 2).mean(-1, keepdims=True)
        return (x - mu) / jnp.sqrt(var + LN_EPS) * g + b

    def mm(a, w):   # bf16 operands, f32 accumulation
        return jnp.einsum("...ij,jk->...ik", a.astype(bf), w.astype(bf),
                          preferred_element_type=jnp.float32)

    for l in range(L):
        xl = ln(x, p["ln1g"][l], p["ln1b"][l])
        # scale folded into wq before the bf16 cast, matching the kernel
        q = mm(xl, p["wq"][l] * (E ** -0.5)).reshape(B, T, H, HS).transpose(0, 2, 1, 3)
        k = mm(xl, p["wk"][l]).reshape(B, T, H, HS).transpose(0, 2, 1, 3)
        v = mm(xl, p["wv"][l]).reshape(B, T, H, HS).transpose(0, 2, 1, 3)
        s = jnp.einsum("bhqd,bhkd->bhqk", q.astype(bf), k.astype(bf),
                       preferred_element_type=jnp.float32)
        s = jnp.where(mask, s, -jnp.inf)
        s = s - s.max(-1, keepdims=True)
        pr = jnp.exp(s)
        den = pr.astype(bf).astype(jnp.float32).sum(-1, keepdims=True)
        att = pr / den
        o = jnp.einsum("bhqk,bhkd->bhqd", att.astype(bf), v.astype(bf),
                       preferred_element_type=jnp.float32)
        o = o.transpose(0, 2, 1, 3).reshape(B, T, E)
        x = x + mm(o, p["wpr"][l]) + p["bpr"][l]
        xl2 = ln(x, p["ln2g"][l], p["ln2b"][l])
        h1 = jax.nn.relu(mm(xl2, p["w1"][l]) + p["b1"][l])
        x = x + mm(h1, p["w2"][l]) + p["b2"][l]
    xf = ln(x, p["lnfg"][0], p["lnfb"][0])
    return mm(xf, p["wlm"]) + p["blm"][0]


if __name__ == "__main__":
    vocab_size = 65
    B, T = 2, 8            # T <= block_size (32)

    key = jax.random.PRNGKey(0)
    pkey, ikey, tkey = jax.random.split(key, 3)
    params = init_params(pkey, vocab_size)
    index = jax.random.randint(ikey, (B, T), 0, vocab_size, dtype=jnp.int32)
    targets = jax.random.randint(tkey, (B, T), 0, vocab_size, dtype=jnp.int32)

    logits, loss = bigram_lm_forward(index, params, targets=targets)
    logits = jax.block_until_ready(logits)
    loss = jax.block_until_ready(loss)

    assert logits.shape == (B, T, vocab_size)
    assert logits.dtype == jnp.float32
    assert bool(jnp.isfinite(loss))

    ref = reference_forward(index, params)
    if not bool(jnp.allclose(logits, ref, atol=3e-2, rtol=3e-2)):
        raise AssertionError("Pallas kernel output mismatch vs pure-JAX reference")

    # TODO(synk): `generate()` (torch.multinomial sampling loop) is host-side control
    # flow and is not part of the kernel.
    print("KERNEL_OK")
</pallas_src>

<mosaic_0001>
module attributes {stable_mosaic.version = 11 : i64} {
  func.func @_kernel(%arg0: i32, %arg1: memref<16x64xf32, #tpu.memory_space<vmem>>, %arg2: memref<64x64xbf16, #tpu.memory_space<vmem>>, %arg3: memref<64x64xbf16, #tpu.memory_space<vmem>>, %arg4: memref<16x64xf32, #tpu.memory_space<vmem>>, %arg5: memref<4x64xf32, #tpu.memory_space<vmem>>, %arg6: memref<4x64xf32, #tpu.memory_space<vmem>>, %arg7: memref<4x64x192xbf16, #tpu.memory_space<vmem>>, %arg8: memref<4x64x64xbf16, #tpu.memory_space<vmem>>, %arg9: memref<4x64xf32, #tpu.memory_space<vmem>>, %arg10: memref<4x64xf32, #tpu.memory_space<vmem>>, %arg11: memref<4x64xf32, #tpu.memory_space<vmem>>, %arg12: memref<4x64x256xbf16, #tpu.memory_space<vmem>>, %arg13: memref<4x256xf32, #tpu.memory_space<vmem>>, %arg14: memref<4x256x64xbf16, #tpu.memory_space<vmem>>, %arg15: memref<4x64xf32, #tpu.memory_space<vmem>>, %arg16: memref<1x64xf32, #tpu.memory_space<vmem>>, %arg17: memref<1x64xf32, #tpu.memory_space<vmem>>, %arg18: memref<64x128xbf16, #tpu.memory_space<vmem>>, %arg19: memref<1x128xf32, #tpu.memory_space<vmem>>, %arg20: memref<16x128xf32, #tpu.memory_space<vmem>>) attributes {dimension_semantics = [#tpu.dimension_semantics<parallel>], iteration_bounds = array<i64: 1>, scalar_prefetch = 0 : i64, scratch_operands = 0 : i64, tpu.core_type = #tpu.core_type<tc>, window_params = [{transform_indices = @transform_0, window_bounds = array<i64: 16, 64>}, {pipeline_mode = #tpu.pipeline_mode<synchronous>, transform_indices = @transform_1, window_bounds = array<i64: 64, 64>}, {pipeline_mode = #tpu.pipeline_mode<synchronous>, transform_indices = @transform_2, window_bounds = array<i64: 64, 64>}, {pipeline_mode = #tpu.pipeline_mode<synchronous>, transform_indices = @transform_3, window_bounds = array<i64: 16, 64>}, {pipeline_mode = #tpu.pipeline_mode<synchronous>, transform_indices = @transform_4, window_bounds = array<i64: 4, 64>}, {pipeline_mode = #tpu.pipeline_mode<synchronous>, transform_indices = @transform_5, window_bounds = array<i64: 4, 64>}, {pipeline_mode = #tpu.pipeline_mode<synchronous>, transform_indices = @transform_6, window_bounds = array<i64: 4, 64, 192>}, {pipeline_mode = #tpu.pipeline_mode<synchronous>, transform_indices = @transform_7, window_bounds = array<i64: 4, 64, 64>}, {pipeline_mode = #tpu.pipeline_mode<synchronous>, transform_indices = @transform_8, window_bounds = array<i64: 4, 64>}, {pipeline_mode = #tpu.pipeline_mode<synchronous>, transform_indices = @transform_9, window_bounds = array<i64: 4, 64>}, {pipeline_mode = #tpu.pipeline_mode<synchronous>, transform_indices = @transform_10, window_bounds = array<i64: 4, 64>}, {pipeline_mode = #tpu.pipeline_mode<synchronous>, transform_indices = @transform_11, window_bounds = array<i64: 4, 64, 256>}, {pipeline_mode = #tpu.pipeline_mode<synchronous>, transform_indices = @transform_12, window_bounds = array<i64: 4, 256>}, {pipeline_mode = #tpu.pipeline_mode<synchronous>, transform_indices = @transform_13, window_bounds = array<i64: 4, 256, 64>}, {pipeline_mode = #tpu.pipeline_mode<synchronous>, transform_indices = @transform_14, window_bounds = array<i64: 4, 64>}, {pipeline_mode = #tpu.pipeline_mode<synchronous>, transform_indices = @transform_15, window_bounds = array<i64: 1, 64>}, {pipeline_mode = #tpu.pipeline_mode<synchronous>, transform_indices = @transform_16, window_bounds = array<i64: 1, 64>}, {pipeline_mode = #tpu.pipeline_mode<synchronous>, transform_indices = @transform_17, window_bounds = array<i64: 64, 128>}, {pipeline_mode = #tpu.pipeline_mode<synchronous>, transform_indices = @transform_18, window_bounds = array<i64: 1, 128>}, {transform_indices = @transform_19, window_bounds = array<i64: 16, 128>}]} {
    %c0 = arith.constant 0 : index
    %c0_0 = arith.constant 0 : index
    %0 = vector.load %arg2[%c0, %c0_0] : memref<64x64xbf16, #tpu.memory_space<vmem>>, vector<64x64xbf16>
    %c0_1 = arith.constant 0 : index
    %c0_2 = arith.constant 0 : index
    %1 = vector.load %arg3[%c0_1, %c0_2] : memref<64x64xbf16, #tpu.memory_space<vmem>>, vector<64x64xbf16>
    %c0_3 = arith.constant 0 : index
    %c0_4 = arith.constant 0 : index
    %2 = vector.load %arg4[%c0_3, %c0_4] : memref<16x64xf32, #tpu.memory_space<vmem>>, vector<16x64xf32>
    %c0_5 = arith.constant 0 : index
    %c0_6 = arith.constant 0 : index
    %3 = vector.load %arg1[%c0_5, %c0_6] : memref<16x64xf32, #tpu.memory_space<vmem>>, vector<16x64xf32>
    %c0_7 = arith.constant 0 : index
    %c0_8 = arith.constant 0 : index
    %4 = vector.load %arg5[%c0_7, %c0_8] : memref<4x64xf32, #tpu.memory_space<vmem>>, vector<1x64xf32>
    %5 = vector.shape_cast %4 : vector<1x64xf32> to vector<64xf32>
    %c0_9 = arith.constant 0 : index
    %c0_10 = arith.constant 0 : index
    %6 = vector.load %arg6[%c0_9, %c0_10] : memref<4x64xf32, #tpu.memory_space<vmem>>, vector<1x64xf32>
    %7 = vector.shape_cast %6 : vector<1x64xf32> to vector<64xf32>
    %cst = arith.constant dense<0.000000e+00> : vector<16xf32>
    %8 = vector.multi_reduction <add>, %3, %cst [1] : vector<16x64xf32> to vector<16xf32>
    %9 = vector.shape_cast %8 : vector<16xf32> to vector<16x1xf32>
    %cst_11 = arith.constant 6.400000e+01 : f32
    %10 = vector.broadcast %cst_11 : f32 to vector<16x1xf32>
    %11 = arith.divf %9, %10 : vector<16x1xf32>
    %12 = vector.broadcast %11 : vector<16x1xf32> to vector<16x64xf32>
    %13 = arith.subf %3, %12 : vector<16x64xf32>
    %14 = arith.mulf %13, %13 : vector<16x64xf32>
    %cst_12 = arith.constant dense<0.000000e+00> : vector<16xf32>
    %15 = vector.multi_reduction <add>, %14, %cst_12 [1] : vector<16x64xf32> to vector<16xf32>
    %16 = vector.shape_cast %15 : vector<16xf32> to vector<16x1xf32>
    %cst_13 = arith.constant 6.400000e+01 : f32
    %17 = vector.broadcast %cst_13 : f32 to vector<16x1xf32>
    %18 = arith.divf %16, %17 : vector<16x1xf32>
    %19 = vector.broadcast %11 : vector<16x1xf32> to vector<16x64xf32>
    %20 = arith.subf %3, %19 : vector<16x64xf32>
    %cst_14 = arith.constant 9.99999974E-6 : f32
    %21 = vector.broadcast %cst_14 : f32 to vector<16x1xf32>
    %22 = arith.addf %18, %21 : vector<16x1xf32>
    %23 = math.rsqrt %22 : vector<16x1xf32>
    %24 = vector.broadcast %23 : vector<16x1xf32> to vector<16x64xf32>
    %25 = arith.mulf %20, %24 : vector<16x64xf32>
    %26 = vector.shape_cast %5 : vector<64xf32> to vector<1x64xf32>
    %27 = vector.broadcast %26 : vector<1x64xf32> to vector<16x64xf32>
    %28 = arith.mulf %25, %27 : vector<16x64xf32>
    %29 = vector.shape_cast %7 : vector<64xf32> to vector<1x64xf32>
    %30 = vector.broadcast %29 : vector<1x64xf32> to vector<16x64xf32>
    %31 = arith.addf %28, %30 : vector<16x64xf32>
    %32 = arith.truncf %31 : vector<16x64xf32> to vector<16x64xbf16>
    %c0_15 = arith.constant 0 : index
    %c0_16 = arith.constant 0 : index
    %c0_17 = arith.constant 0 : index
    %33 = vector.load %arg7[%c0_15, %c0_16, %c0_17] : memref<4x64x192xbf16, #tpu.memory_space<vmem>>, vector<1x64x192xbf16>
    %34 = vector.shape_cast %33 : vector<1x64x192xbf16> to vector<64x192xbf16>
    %cst_18 = arith.constant dense<0.000000e+00> : vector<16x192xf32>
    %35 = tpu.matmul %32, %34, %cst_18 {dimension_numbers = #tpu.dot_dimension_numbers<[1], [0], [0], [1], [0, 0, 1, 1], [], []>} : vector<16x64xbf16>, vector<64x192xbf16>, vector<16x192xf32> -> vector<16x192xf32>
    %36 = vector.extract_strided_slice %35 {offsets = [0, 0], sizes = [16, 64], strides = [1, 1]} : vector<16x192xf32> to vector<16x64xf32>
    %37 = arith.truncf %36 : vector<16x64xf32> to vector<16x64xbf16>
    %38 = vector.extract_strided_slice %35 {offsets = [0, 64], sizes = [16, 64], strides = [1, 1]} : vector<16x192xf32> to vector<16x64xf32>
    %39 = arith.truncf %38 : vector<16x64xf32> to vector<16x64xbf16>
    %40 = vector.extract_strided_slice %35 {offsets = [0, 128], sizes = [16, 64], strides = [1, 1]} : vector<16x192xf32> to vector<16x64xf32>
    %41 = arith.truncf %40 : vector<16x64xf32> to vector<16x64xbf16>
    %42 = tpu.concatenate %39, %39, %39, %39 in 0 : vector<16x64xbf16>, vector<16x64xbf16>, vector<16x64xbf16>, vector<16x64xbf16> -> vector<64x64xbf16>
    %43 = arith.mulf %42, %0 : vector<64x64xbf16>
    %44 = tpu.concatenate %41, %41, %41, %41 in 0 : vector<16x64xbf16>, vector<16x64xbf16>, vector<16x64xbf16>, vector<16x64xbf16> -> vector<64x64xbf16>
    %45 = arith.mulf %44, %0 : vector<64x64xbf16>
    %cst_19 = arith.constant dense<0.000000e+00> : vector<16x64xf32>
    %46 = tpu.matmul %37, %43, %cst_19 {dimension_numbers = #tpu.dot_dimension_numbers<[1], [1], [0], [0], [0, 0, 1, 0], [], []>} : vector<16x64xbf16>, vector<64x64xbf16>, vector<16x64xf32> -> vector<16x64xf32>
    %47 = arith.addf %46, %2 : vector<16x64xf32>
    %cst_20 = arith.constant dense<0xFF800000> : vector<16xf32>
    %48 = vector.multi_reduction <maximumf>, %47, %cst_20 [1] : vector<16x64xf32> to vector<16xf32>
    %49 = vector.shape_cast %48 : vector<16xf32> to vector<16x1xf32>
    %50 = vector.broadcast %49 : vector<16x1xf32> to vector<16x64xf32>
    %51 = arith.subf %47, %50 : vector<16x64xf32>
    %52 = math.exp %51 : vector<16x64xf32>
    %53 = arith.truncf %52 : vector<16x64xf32> to vector<16x64xbf16>
    %cst_21 = arith.constant dense<0.000000e+00> : vector<16x64xf32>
    %54 = tpu.matmul %53, %1, %cst_21 {dimension_numbers = #tpu.dot_dimension_numbers<[1], [0], [0], [1], [0, 0, 1, 1], [], []>} : vector<16x64xbf16>, vector<64x64xbf16>, vector<16x64xf32> -> vector<16x64xf32>
    %cst_22 = arith.constant 1.000000e-30 : f32
    %55 = vector.broadcast %cst_22 : f32 to vector<16x64xf32>
    %56 = arith.addf %54, %55 : vector<16x64xf32>
    %57 = tpu.reciprocal %56 : vector<16x64xf32> -> vector<16x64xf32>
    %58 = arith.mulf %52, %57 : vector<16x64xf32>
    %59 = arith.truncf %58 : vector<16x64xf32> to vector<16x64xbf16>
    %cst_23 = arith.constant dense<0.000000e+00> : vector<16x64xf32>
    %60 = tpu.matmul %59, %45, %cst_23 {dimension_numbers = #tpu.dot_dimension_numbers<[1], [0], [0], [1], [0, 0, 1, 1], [], []>} : vector<16x64xbf16>, vector<64x64xbf16>, vector<16x64xf32> -> vector<16x64xf32>
    %61 = arith.truncf %60 : vector<16x64xf32> to vector<16x64xbf16>
    %c0_24 = arith.constant 0 : index
    %c0_25 = arith.constant 0 : index
    %c0_26 = arith.constant 0 : index
    %62 = vector.load %arg8[%c0_24, %c0_25, %c0_26] : memref<4x64x64xbf16, #tpu.memory_space<vmem>>, vector<1x64x64xbf16>
    %63 = vector.shape_cast %62 : vector<1x64x64xbf16> to vector<64x64xbf16>
    %cst_27 = arith.constant dense<0.000000e+00> : vector<16x64xf32>
    %64 = tpu.matmul %61, %63, %cst_27 {dimension_numbers = #tpu.dot_dimension_numbers<[1], [0], [0], [1], [0, 0, 1, 1], [], []>} : vector<16x64xbf16>, vector<64x64xbf16>, vector<16x64xf32> -> vector<16x64xf32>
    %65 = arith.addf %3, %64 : vector<16x64xf32>
    %c0_28 = arith.constant 0 : index
    %c0_29 = arith.constant 0 : index
    %66 = vector.load %arg9[%c0_28, %c0_29] : memref<4x64xf32, #tpu.memory_space<vmem>>, vector<1x64xf32>
    %67 = vector.shape_cast %66 : vector<1x64xf32> to vector<64xf32>
    %68 = vector.shape_cast %67 : vector<64xf32> to vector<1x64xf32>
    %69 = vector.broadcast %68 : vector<1x64xf32> to vector<16x64xf32>
    %70 = arith.addf %65, %69 : vector<16x64xf32>
    %c0_30 = arith.constant 0 : index
    %c0_31 = arith.constant 0 : index
    %71 = vector.load %arg10[%c0_30, %c0_31] : memref<4x64xf32, #tpu.memory_space<vmem>>, vector<1x64xf32>
    %72 = vector.shape_cast %71 : vector<1x64xf32> to vector<64xf32>
    %c0_32 = arith.constant 0 : index
    %c0_33 = arith.constant 0 : index
    %73 = vector.load %arg11[%c0_32, %c0_33] : memref<4x64xf32, #tpu.memory_space<vmem>>, vector<1x64xf32>
    %74 = vector.shape_cast %73 : vector<1x64xf32> to vector<64xf32>
    %cst_34 = arith.constant dense<0.000000e+00> : vector<16xf32>
    %75 = vector.multi_reduction <add>, %70, %cst_34 [1] : vector<16x64xf32> to vector<16xf32>
    %76 = vector.shape_cast %75 : vector<16xf32> to vector<16x1xf32>
    %cst_35 = arith.constant 6.400000e+01 : f32
    %77 = vector.broadcast %cst_35 : f32 to vector<16x1xf32>
    %78 = arith.divf %76, %77 : vector<16x1xf32>
    %79 = vector.broadcast %78 : vector<16x1xf32> to vector<16x64xf32>
    %80 = arith.subf %70, %79 : vector<16x64xf32>
    %81 = arith.mulf %80, %80 : vector<16x64xf32>
    %cst_36 = arith.constant dense<0.000000e+00> : vector<16xf32>
    %82 = vector.multi_reduction <add>, %81, %cst_36 [1] : vector<16x64xf32> to vector<16xf32>
    %83 = vector.shape_cast %82 : vector<16xf32> to vector<16x1xf32>
    %cst_37 = arith.constant 6.400000e+01 : f32
    %84 = vector.broadcast %cst_37 : f32 to vector<16x1xf32>
    %85 = arith.divf %83, %84 : vector<16x1xf32>
    %86 = vector.broadcast %78 : vector<16x1xf32> to vector<16x64xf32>
    %87 = arith.subf %70, %86 : vector<16x64xf32>
    %cst_38 = arith.constant 9.99999974E-6 : f32
    %88 = vector.broadcast %cst_38 : f32 to vector<16x1xf32>
    %89 = arith.addf %85, %88 : vector<16x1xf32>
    %90 = math.rsqrt %89 : vector<16x1xf32>
    %91 = vector.broadcast %90 : vector<16x1xf32> to vector<16x64xf32>
    %92 = arith.mulf %87, %91 : vector<16x64xf32>
    %93 = vector.shape_cast %72 : vector<64xf32> to vector<1x64xf32>
    %94 = vector.broadcast %93 : vector<1x64xf32> to vector<16x64xf32>
    %95 = arith.mulf %92, %94 : vector<16x64xf32>
    %96 = vector.shape_cast %74 : vector<64xf32> to vector<1x64xf32>
    %97 = vector.broadcast %96 : vector<1x64xf32> to vector<16x64xf32>
    %98 = arith.addf %95, %97 : vector<16x64xf32>
    %99 = arith.truncf %98 : vector<16x64xf32> to vector<16x64xbf16>
    %c0_39 = arith.constant 0 : index
    %c0_40 = arith.constant 0 : index
    %c0_41 = arith.constant 0 : index
    %100 = vector.load %arg12[%c0_39, %c0_40, %c0_41] : memref<4x64x256xbf16, #tpu.memory_space<vmem>>, vector<1x64x256xbf16>
    %101 = vector.shape_cast %100 : vector<1x64x256xbf16> to vector<64x256xbf16>
    %cst_42 = arith.constant dense<0.000000e+00> : vector<16x256xf32>
    %102 = tpu.matmul %99, %101, %cst_42 {dimension_numbers = #tpu.dot_dimension_numbers<[1], [0], [0], [1], [0, 0, 1, 1], [], []>} : vector<16x64xbf16>, vector<64x256xbf16>, vector<16x256xf32> -> vector<16x256xf32>
    %c0_43 = arith.constant 0 : index
    %c0_44 = arith.constant 0 : index
    %103 = vector.load %arg13[%c0_43, %c0_44] : memref<4x256xf32, #tpu.memory_space<vmem>>, vector<1x256xf32>
    %104 = vector.shape_cast %103 : vector<1x256xf32> to vector<256xf32>
    %105 = vector.shape_cast %104 : vector<256xf32> to vector<1x256xf32>
    %106 = vector.broadcast %105 : vector<1x256xf32> to vector<16x256xf32>
    %107 = arith.addf %102, %106 : vector<16x256xf32>
    %cst_45 = arith.constant 0.000000e+00 : f32
    %108 = vector.broadcast %cst_45 : f32 to vector<16x256xf32>
    %109 = arith.maximumf %107, %108 : vector<16x256xf32>
    %110 = arith.truncf %109 : vector<16x256xf32> to vector<16x256xbf16>
    %c0_46 = arith.constant 0 : index
    %c0_47 = arith.constant 0 : index
    %c0_48 = arith.constant 0 : index
    %111 = vector.load %arg14[%c0_46, %c0_47, %c0_48] : memref<4x256x64xbf16, #tpu.memory_space<vmem>>, vector<1x256x64xbf16>
    %112 = vector.shape_cast %111 : vector<1x256x64xbf16> to vector<256x64xbf16>
    %cst_49 = arith.constant dense<0.000000e+00> : vector<16x64xf32>
    %113 = tpu.matmul %110, %112, %cst_49 {dimension_numbers = #tpu.dot_dimension_numbers<[1], [0], [0], [1], [0, 0, 1, 1], [], []>} : vector<16x256xbf16>, vector<256x64xbf16>, vector<16x64xf32> -> vector<16x64xf32>
    %114 = arith.addf %70, %113 : vector<16x64xf32>
    %c0_50 = arith.constant 0 : index
    %c0_51 = arith.constant 0 : index
    %115 = vector.load %arg15[%c0_50, %c0_51] : memref<4x64xf32, #tpu.memory_space<vmem>>, vector<1x64xf32>
    %116 = vector.shape_cast %115 : vector<1x64xf32> to vector<64xf32>
    %117 = vector.shape_cast %116 : vector<64xf32> to vector<1x64xf32>
    %118 = vector.broadcast %117 : vector<1x64xf32> to vector<16x64xf32>
    %119 = arith.addf %114, %118 : vector<16x64xf32>
    %c1 = arith.constant 1 : index
    %c0_52 = arith.constant 0 : index
    %120 = vector.load %arg5[%c1, %c0_52] : memref<4x64xf32, #tpu.memory_space<vmem>>, vector<1x64xf32>
    %121 = vector.shape_cast %120 : vector<1x64xf32> to vector<64xf32>
    %c1_53 = arith.constant 1 : index
    %c0_54 = arith.constant 0 : index
    %122 = vector.load %arg6[%c1_53, %c0_54] : memref<4x64xf32, #tpu.memory_space<vmem>>, vector<1x64xf32>
    %123 = vector.shape_cast %122 : vector<1x64xf32> to vector<64xf32>
    %cst_55 = arith.constant dense<0.000000e+00> : vector<16xf32>
    %124 = vector.multi_reduction <add>, %119, %cst_55 [1] : vector<16x64xf32> to vector<16xf32>
    %125 = vector.shape_cast %124 : vector<16xf32> to vector<16x1xf32>
    %cst_56 = arith.constant 6.400000e+01 : f32
    %126 = vector.broadcast %cst_56 : f32 to vector<16x1xf32>
    %127 = arith.divf %125, %126 : vector<16x1xf32>
    %128 = vector.broadcast %127 : vector<16x1xf32> to vector<16x64xf32>
    %129 = arith.subf %119, %128 : vector<16x64xf32>
    %130 = arith.mulf %129, %129 : vector<16x64xf32>
    %cst_57 = arith.constant dense<0.000000e+00> : vector<16xf32>
    %131 = vector.multi_reduction <add>, %130, %cst_57 [1] : vector<16x64xf32> to vector<16xf32>
    %132 = vector.shape_cast %131 : vector<16xf32> to vector<16x1xf32>
    %cst_58 = arith.constant 6.400000e+01 : f32
    %133 = vector.broadcast %cst_58 : f32 to vector<16x1xf32>
    %134 = arith.divf %132, %133 : vector<16x1xf32>
    %135 = vector.broadcast %127 : vector<16x1xf32> to vector<16x64xf32>
    %136 = arith.subf %119, %135 : vector<16x64xf32>
    %cst_59 = arith.constant 9.99999974E-6 : f32
    %137 = vector.broadcast %cst_59 : f32 to vector<16x1xf32>
    %138 = arith.addf %134, %137 : vector<16x1xf32>
    %139 = math.rsqrt %138 : vector<16x1xf32>
    %140 = vector.broadcast %139 : vector<16x1xf32> to vector<16x64xf32>
    %141 = arith.mulf %136, %140 : vector<16x64xf32>
    %142 = vector.shape_cast %121 : vector<64xf32> to vector<1x64xf32>
    %143 = vector.broadcast %142 : vector<1x64xf32> to vector<16x64xf32>
    %144 = arith.mulf %141, %143 : vector<16x64xf32>
    %145 = vector.shape_cast %123 : vector<64xf32> to vector<1x64xf32>
    %146 = vector.broadcast %145 : vector<1x64xf32> to vector<16x64xf32>
    %147 = arith.addf %144, %146 : vector<16x64xf32>
    %148 = arith.truncf %147 : vector<16x64xf32> to vector<16x64xbf16>
    %c1_60 = arith.constant 1 : index
    %c0_61 = arith.constant 0 : index
    %c0_62 = arith.constant 0 : index
    %149 = vector.load %arg7[%c1_60, %c0_61, %c0_62] : memref<4x64x192xbf16, #tpu.memory_space<vmem>>, vector<1x64x192xbf16>
    %150 = vector.shape_cast %149 : vector<1x64x192xbf16> to vector<64x192xbf16>
    %cst_63 = arith.constant dense<0.000000e+00> : vector<16x192xf32>
    %151 = tpu.matmul %148, %150, %cst_63 {dimension_numbers = #tpu.dot_dimension_numbers<[1], [0], [0], [1], [0, 0, 1, 1], [], []>} : vector<16x64xbf16>, vector<64x192xbf16>, vector<16x192xf32> -> vector<16x192xf32>
    %152 = vector.extract_strided_slice %151 {offsets = [0, 0], sizes = [16, 64], strides = [1, 1]} : vector<16x192xf32> to vector<16x64xf32>
    %153 = arith.truncf %152 : vector<16x64xf32> to vector<16x64xbf16>
    %154 = vector.extract_strided_slice %151 {offsets = [0, 64], sizes = [16, 64], strides = [1, 1]} : vector<16x192xf32> to vector<16x64xf32>
    %155 = arith.truncf %154 : vector<16x64xf32> to vector<16x64xbf16>
    %156 = vector.extract_strided_slice %151 {offsets = [0, 128], sizes = [16, 64], strides = [1, 1]} : vector<16x192xf32> to vector<16x64xf32>
    %157 = arith.truncf %156 : vector<16x64xf32> to vector<16x64xbf16>
    %158 = tpu.concatenate %155, %155, %155, %155 in 0 : vector<16x64xbf16>, vector<16x64xbf16>, vector<16x64xbf16>, vector<16x64xbf16> -> vector<64x64xbf16>
    %159 = arith.mulf %158, %0 : vector<64x64xbf16>
    %160 = tpu.concatenate %157, %157, %157, %157 in 0 : vector<16x64xbf16>, vector<16x64xbf16>, vector<16x64xbf16>, vector<16x64xbf16> -> vector<64x64xbf16>
    %161 = arith.mulf %160, %0 : vector<64x64xbf16>
    %cst_64 = arith.constant dense<0.000000e+00> : vector<16x64xf32>
    %162 = tpu.matmul %153, %159, %cst_64 {dimension_numbers = #tpu.dot_dimension_numbers<[1], [1], [0], [0], [0, 0, 1, 0], [], []>} : vector<16x64xbf16>, vector<64x64xbf16>, vector<16x64xf32> -> vector<16x64xf32>
    %163 = arith.addf %162, %2 : vector<16x64xf32>
    %cst_65 = arith.constant dense<0xFF800000> : vector<16xf32>
    %164 = vector.multi_reduction <maximumf>, %163, %cst_65 [1] : vector<16x64xf32> to vector<16xf32>
    %165 = vector.shape_cast %164 : vector<16xf32> to vector<16x1xf32>
    %166 = vector.broadcast %165 : vector<16x1xf32> to vector<16x64xf32>
    %167 = arith.subf %163, %166 : vector<16x64xf32>
    %168 = math.exp %167 : vector<16x64xf32>
    %169 = arith.truncf %168 : vector<16x64xf32> to vector<16x64xbf16>
    %cst_66 = arith.constant dense<0.000000e+00> : vector<16x64xf32>
    %170 = tpu.matmul %169, %1, %cst_66 {dimension_numbers = #tpu.dot_dimension_numbers<[1], [0], [0], [1], [0, 0, 1, 1], [], []>} : vector<16x64xbf16>, vector<64x64xbf16>, vector<16x64xf32> -> vector<16x64xf32>
    %cst_67 = arith.constant 1.000000e-30 : f32
    %171 = vector.broadcast %cst_67 : f32 to vector<16x64xf32>
    %172 = arith.addf %170, %171 : vector<16x64xf32>
    %173 = tpu.reciprocal %172 : vector<16x64xf32> -> vector<16x64xf32>
    %174 = arith.mulf %168, %173 : vector<16x64xf32>
    %175 = arith.truncf %174 : vector<16x64xf32> to vector<16x64xbf16>
    %cst_68 = arith.constant dense<0.000000e+00> : vector<16x64xf32>
    %176 = tpu.matmul %175, %161, %cst_68 {dimension_numbers = #tpu.dot_dimension_numbers<[1], [0], [0], [1], [0, 0, 1, 1], [], []>} : vector<16x64xbf16>, vector<64x64xbf16>, vector<16x64xf32> -> vector<16x64xf32>
    %177 = arith.truncf %176 : vector<16x64xf32> to vector<16x64xbf16>
    %c1_69 = arith.constant 1 : index
    %c0_70 = arith.constant 0 : index
    %c0_71 = arith.constant 0 : index
    %178 = vector.load %arg8[%c1_69, %c0_70, %c0_71] : memref<4x64x64xbf16, #tpu.memory_space<vmem>>, vector<1x64x64xbf16>
    %179 = vector.shape_cast %178 : vector<1x64x64xbf16> to vector<64x64xbf16>
    %cst_72 = arith.constant dense<0.000000e+00> : vector<16x64xf32>
    %180 = tpu.matmul %177, %179, %cst_72 {dimension_numbers = #tpu.dot_dimension_numbers<[1], [0], [0], [1], [0, 0, 1, 1], [], []>} : vector<16x64xbf16>, vector<64x64xbf16>, vector<16x64xf32> -> vector<16x64xf32>
    %181 = arith.addf %119, %180 : vector<16x64xf32>
    %c1_73 = arith.constant 1 : index
    %c0_74 = arith.constant 0 : index
    %182 = vector.load %arg9[%c1_73, %c0_74] : memref<4x64xf32, #tpu.memory_space<vmem>>, vector<1x64xf32>
    %183 = vector.shape_cast %182 : vector<1x64xf32> to vector<64xf32>
    %184 = vector.shape_cast %183 : vector<64xf32> to vector<1x64xf32>
    %185 = vector.broadcast %184 : vector<1x64xf32> to vector<16x64xf32>
    %186 = arith.addf %181, %185 : vector<16x64xf32>
    %c1_75 = arith.constant 1 : index
    %c0_76 = arith.constant 0 : index
    %187 = vector.load %arg10[%c1_75, %c0_76] : memref<4x64xf32, #tpu.memory_space<vmem>>, vector<1x64xf32>
    %188 = vector.shape_cast %187 : vector<1x64xf32> to vector<64xf32>
    %c1_77 = arith.constant 1 : index
    %c0_78 = arith.constant 0 : index
    %189 = vector.load %arg11[%c1_77, %c0_78] : memref<4x64xf32, #tpu.memory_space<vmem>>, vector<1x64xf32>
    %190 = vector.shape_cast %189 : vector<1x64xf32> to vector<64xf32>
    %cst_79 = arith.constant dense<0.000000e+00> : vector<16xf32>
    %191 = vector.multi_reduction <add>, %186, %cst_79 [1] : vector<16x64xf32> to vector<16xf32>
    %192 = vector.shape_cast %191 : vector<16xf32> to vector<16x1xf32>
    %cst_80 = arith.constant 6.400000e+01 : f32
    %193 = vector.broadcast %cst_80 : f32 to vector<16x1xf32>
    %194 = arith.divf %192, %193 : vector<16x1xf32>
    %195 = vector.broadcast %194 : vector<16x1xf32> to vector<16x64xf32>
    %196 = arith.subf %186, %195 : vector<16x64xf32>
    %197 = arith.mulf %196, %196 : vector<16x64xf32>
    %cst_81 = arith.constant dense<0.000000e+00> : vector<16xf32>
    %198 = vector.multi_reduction <add>, %197, %cst_81 [1] : vector<16x64xf32> to vector<16xf32>
    %199 = vector.shape_cast %198 : vector<16xf32> to vector<16x1xf32>
    %cst_82 = arith.constant 6.400000e+01 : f32
    %200 = vector.broadcast %cst_82 : f32 to vector<16x1xf32>
    %201 = arith.divf %199, %200 : vector<16x1xf32>
    %202 = vector.broadcast %194 : vector<16x1xf32> to vector<16x64xf32>
    %203 = arith.subf %186, %202 : vector<16x64xf32>
    %cst_83 = arith.constant 9.99999974E-6 : f32
    %204 = vector.broadcast %cst_83 : f32 to vector<16x1xf32>
    %205 = arith.addf %201, %204 : vector<16x1xf32>
    %206 = math.rsqrt %205 : vector<16x1xf32>
    %207 = vector.broadcast %206 : vector<16x1xf32> to vector<16x64xf32>
    %208 = arith.mulf %203, %207 : vector<16x64xf32>
    %209 = vector.shape_cast %188 : vector<64xf32> to vector<1x64xf32>
    %210 = vector.broadcast %209 : vector<1x64xf32> to vector<16x64xf32>
    %211 = arith.mulf %208, %210 : vector<16x64xf32>
    %212 = vector.shape_cast %190 : vector<64xf32> to vector<1x64xf32>
    %213 = vector.broadcast %212 : vector<1x64xf32> to vector<16x64xf32>
    %214 = arith.addf %211, %213 : vector<16x64xf32>
    %215 = arith.truncf %214 : vector<16x64xf32> to vector<16x64xbf16>
    %c1_84 = arith.constant 1 : index
    %c0_85 = arith.constant 0 : index
    %c0_86 = arith.constant 0 : index
    %216 = vector.load %arg12[%c1_84, %c0_85, %c0_86] : memref<4x64x256xbf16, #tpu.memory_space<vmem>>, vector<1x64x256xbf16>
    %217 = vector.shape_cast %216 : vector<1x64x256xbf16> to vector<64x256xbf16>
    %cst_87 = arith.constant dense<0.000000e+00> : vector<16x256xf32>
    %218 = tpu.matmul %215, %217, %cst_87 {dimension_numbers = #tpu.dot_dimension_numbers<[1], [0], [0], [1], [0, 0, 1, 1], [], []>} : vector<16x64xbf16>, vector<64x256xbf16>, vector<16x256xf32> -> vector<16x256xf32>
    %c1_88 = arith.constant 1 : index
    %c0_89 = arith.constant 0 : index
    %219 = vector.load %arg13[%c1_88, %c0_89] : memref<4x256xf32, #tpu.memory_space<vmem>>, vector<1x256xf32>
    %220 = vector.shape_cast %219 : vector<1x256xf32> to vector<256xf32>
    %221 = vector.shape_cast %220 : vector<256xf32> to vector<1x256xf32>
    %222 = vector.broadcast %221 : vector<1x256xf32> to vector<16x256xf32>
    %223 = arith.addf %218, %222 : vector<16x256xf32>
    %cst_90 = arith.constant 0.000000e+00 : f32
    %224 = vector.broadcast %cst_90 : f32 to vector<16x256xf32>
    %225 = arith.maximumf %223, %224 : vector<16x256xf32>
    %226 = arith.truncf %225 : vector<16x256xf32> to vector<16x256xbf16>
    %c1_91 = arith.constant 1 : index
    %c0_92 = arith.constant 0 : index
    %c0_93 = arith.constant 0 : index
    %227 = vector.load %arg14[%c1_91, %c0_92, %c0_93] : memref<4x256x64xbf16, #tpu.memory_space<vmem>>, vector<1x256x64xbf16>
    %228 = vector.shape_cast %227 : vector<1x256x64xbf16> to vector<256x64xbf16>
    %cst_94 = arith.constant dense<0.000000e+00> : vector<16x64xf32>
    %229 = tpu.matmul %226, %228, %cst_94 {dimension_numbers = #tpu.dot_dimension_numbers<[1], [0], [0], [1], [0, 0, 1, 1], [], []>} : vector<16x256xbf16>, vector<256x64xbf16>, vector<16x64xf32> -> vector<16x64xf32>
    %230 = arith.addf %186, %229 : vector<16x64xf32>
    %c1_95 = arith.constant 1 : index
    %c0_96 = arith.constant 0 : index
    %231 = vector.load %arg15[%c1_95, %c0_96] : memref<4x64xf32, #tpu.memory_space<vmem>>, vector<1x64xf32>
    %232 = vector.shape_cast %231 : vector<1x64xf32> to vector<64xf32>
    %233 = vector.shape_cast %232 : vector<64xf32> to vector<1x64xf32>
    %234 = vector.broadcast %233 : vector<1x64xf32> to vector<16x64xf32>
    %235 = arith.addf %230, %234 : vector<16x64xf32>
    %c2 = arith.constant 2 : index
    %c0_97 = arith.constant 0 : index
    %236 = vector.load %arg5[%c2, %c0_97] : memref<4x64xf32, #tpu.memory_space<vmem>>, vector<1x64xf32>
    %237 = vector.shape_cast %236 : vector<1x64xf32> to vector<64xf32>
    %c2_98 = arith.constant 2 : index
    %c0_99 = arith.constant 0 : index
    %238 = vector.load %arg6[%c2_98, %c0_99] : memref<4x64xf32, #tpu.memory_space<vmem>>, vector<1x64xf32>
    %239 = vector.shape_cast %238 : vector<1x64xf32> to vector<64xf32>
    %cst_100 = arith.constant dense<0.000000e+00> : vector<16xf32>
    %240 = vector.multi_reduction <add>, %235, %cst_100 [1] : vector<16x64xf32> to vector<16xf32>
    %241 = vector.shape_cast %240 : vector<16xf32> to vector<16x1xf32>
    %cst_101 = arith.constant 6.400000e+01 : f32
    %242 = vector.broadcast %cst_101 : f32 to vector<16x1xf32>
    %243 = arith.divf %241, %242 : vector<16x1xf32>
    %244 = vector.broadcast %243 : vector<16x1xf32> to vector<16x64xf32>
    %245 = arith.subf %235, %244 : vector<16x64xf32>
    %246 = arith.mulf %245, %245 : vector<16x64xf32>
    %cst_102 = arith.constant dense<0.000000e+00> : vector<16xf32>
    %247 = vector.multi_reduction <add>, %246, %cst_102 [1] : vector<16x64xf32> to vector<16xf32>
    %248 = vector.shape_cast %247 : vector<16xf32> to vector<16x1xf32>
    %cst_103 = arith.constant 6.400000e+01 : f32
    %249 = vector.broadcast %cst_103 : f32 to vector<16x1xf32>
    %250 = arith.divf %248, %249 : vector<16x1xf32>
    %251 = vector.broadcast %243 : vector<16x1xf32> to vector<16x64xf32>
    %252 = arith.subf %235, %251 : vector<16x64xf32>
    %cst_104 = arith.constant 9.99999974E-6 : f32
    %253 = vector.broadcast %cst_104 : f32 to vector<16x1xf32>
    %254 = arith.addf %250, %253 : vector<16x1xf32>
    %255 = math.rsqrt %254 : vector<16x1xf32>
    %256 = vector.broadcast %255 : vector<16x1xf32> to vector<16x64xf32>
    %257 = arith.mulf %252, %256 : vector<16x64xf32>
    %258 = vector.shape_cast %237 : vector<64xf32> to vector<1x64xf32>
    %259 = vector.broadcast %258 : vector<1x64xf32> to vector<16x64xf32>
    %260 = arith.mulf %257, %259 : vector<16x64xf32>
    %261 = vector.shape_cast %239 : vector<64xf32> to vector<1x64xf32>
    %262 = vector.broadcast %261 : vector<1x64xf32> to vector<16x64xf32>
    %263 = arith.addf %260, %262 : vector<16x64xf32>
    %264 = arith.truncf %263 : vector<16x64xf32> to vector<16x64xbf16>
    %c2_105 = arith.constant 2 : index
    %c0_106 = arith.constant 0 : index
    %c0_107 = arith.constant 0 : index
    %265 = vector.load %arg7[%c2_105, %c0_106, %c0_107] : memref<4x64x192xbf16, #tpu.memory_space<vmem>>, vector<1x64x192xbf16>
    %266 = vector.shape_cast %265 : vector<1x64x192xbf16> to vector<64x192xbf16>
    %cst_108 = arith.constant dense<0.000000e+00> : vector<16x192xf32>
    %267 = tpu.matmul %264, %266, %cst_108 {dimension_numbers = #tpu.dot_dimension_numbers<[1], [0], [0], [1], [0, 0, 1, 1], [], []>} : vector<16x64xbf16>, vector<64x192xbf16>, vector<16x192xf32> -> vector<16x192xf32>
    %268 = vector.extract_strided_slice %267 {offsets = [0, 0], sizes = [16, 64], strides = [1, 1]} : vector<16x192xf32> to vector<16x64xf32>
    %269 = arith.truncf %268 : vector<16x64xf32> to vector<16x64xbf16>
    %270 = vector.extract_strided_slice %267 {offsets = [0, 64], sizes = [16, 64], strides = [1, 1]} : vector<16x192xf32> to vector<16x64xf32>
    %271 = arith.truncf %270 : vector<16x64xf32> to vector<16x64xbf16>
    %272 = vector.extract_strided_slice %267 {offsets = [0, 128], sizes = [16, 64], strides = [1, 1]} : vector<16x192xf32> to vector<16x64xf32>
    %273 = arith.truncf %272 : vector<16x64xf32> to vector<16x64xbf16>
    %274 = tpu.concatenate %271, %271, %271, %271 in 0 : vector<16x64xbf16>, vector<16x64xbf16>, vector<16x64xbf16>, vector<16x64xbf16> -> vector<64x64xbf16>
    %275 = arith.mulf %274, %0 : vector<64x64xbf16>
    %276 = tpu.concatenate %273, %273, %273, %273 in 0 : vector<16x64xbf16>, vector<16x64xbf16>, vector<16x64xbf16>, vector<16x64xbf16> -> vector<64x64xbf16>
    %277 = arith.mulf %276, %0 : vector<64x64xbf16>
    %cst_109 = arith.constant dense<0.000000e+00> : vector<16x64xf32>
    %278 = tpu.matmul %269, %275, %cst_109 {dimension_numbers = #tpu.dot_dimension_numbers<[1], [1], [0], [0], [0, 0, 1, 0], [], []>} : vector<16x64xbf16>, vector<64x64xbf16>, vector<16x64xf32> -> vector<16x64xf32>
    %279 = arith.addf %278, %2 : vector<16x64xf32>
    %cst_110 = arith.constant dense<0xFF800000> : vector<16xf32>
    %280 = vector.multi_reduction <maximumf>, %279, %cst_110 [1] : vector<16x64xf32> to vector<16xf32>
    %281 = vector.shape_cast %280 : vector<16xf32> to vector<16x1xf32>
    %282 = vector.broadcast %281 : vector<16x1xf32> to vector<16x64xf32>
    %283 = arith.subf %279, %282 : vector<16x64xf32>
    %284 = math.exp %283 : vector<16x64xf32>
    %285 = arith.truncf %284 : vector<16x64xf32> to vector<16x64xbf16>
    %cst_111 = arith.constant dense<0.000000e+00> : vector<16x64xf32>
    %286 = tpu.matmul %285, %1, %cst_111 {dimension_numbers = #tpu.dot_dimension_numbers<[1], [0], [0], [1], [0, 0, 1, 1], [], []>} : vector<16x64xbf16>, vector<64x64xbf16>, vector<16x64xf32> -> vector<16x64xf32>
    %cst_112 = arith.constant 1.000000e-30 : f32
    %287 = vector.broadcast %cst_112 : f32 to vector<16x64xf32>
    %288 = arith.addf %286, %287 : vector<16x64xf32>
    %289 = tpu.reciprocal %288 : vector<16x64xf32> -> vector<16x64xf32>
    %290 = arith.mulf %284, %289 : vector<16x64xf32>
    %291 = arith.truncf %290 : vector<16x64xf32> to vector<16x64xbf16>
    %cst_113 = arith.constant dense<0.000000e+00> : vector<16x64xf32>
    %292 = tpu.matmul %291, %277, %cst_113 {dimension_numbers = #tpu.dot_dimension_numbers<[1], [0], [0], [1], [0, 0, 1, 1], [], []>} : vector<16x64xbf16>, vector<64x64xbf16>, vector<16x64xf32> -> vector<16x64xf32>
    %293 = arith.truncf %292 : vector<16x64xf32> to vector<16x64xbf16>
    %c2_114 = arith.constant 2 : index
    %c0_115 = arith.constant 0 : index
    %c0_116 = arith.constant 0 : index
    %294 = vector.load %arg8[%c2_114, %c0_115, %c0_116] : memref<4x64x64xbf16, #tpu.memory_space<vmem>>, vector<1x64x64xbf16>
    %295 = vector.shape_cast %294 : vector<1x64x64xbf16> to vector<64x64xbf16>
    %cst_117 = arith.constant dense<0.000000e+00> : vector<16x64xf32>
    %296 = tpu.matmul %293, %295, %cst_117 {dimension_numbers = #tpu.dot_dimension_numbers<[1], [0], [0], [1], [0, 0, 1, 1], [], []>} : vector<16x64xbf16>, vector<64x64xbf16>, vector<16x64xf32> -> vector<16x64xf32>
    %297 = arith.addf %235, %296 : vector<16x64xf32>
    %c2_118 = arith.constant 2 : index
    %c0_119 = arith.constant 0 : index
    %298 = vector.load %arg9[%c2_118, %c0_119] : memref<4x64xf32, #tpu.memory_space<vmem>>, vector<1x64xf32>
    %299 = vector.shape_cast %298 : vector<1x64xf32> to vector<64xf32>
    %300 = vector.shape_cast %299 : vector<64xf32> to vector<1x64xf32>
    %301 = vector.broadcast %300 : vector<1x64xf32> to vector<16x64xf32>
    %302 = arith.addf %297, %301 : vector<16x64xf32>
    %c2_120 = arith.constant 2 : index
    %c0_121 = arith.constant 0 : index
    %303 = vector.load %arg10[%c2_120, %c0_121] : memref<4x64xf32, #tpu.memory_space<vmem>>, vector<1x64xf32>
    %304 = vector.shape_cast %303 : vector<1x64xf32> to vector<64xf32>
    %c2_122 = arith.constant 2 : index
    %c0_123 = arith.constant 0 : index
    %305 = vector.load %arg11[%c2_122, %c0_123] : memref<4x64xf32, #tpu.memory_space<vmem>>, vector<1x64xf32>
    %306 = vector.shape_cast %305 : vector<1x64xf32> to vector<64xf32>
    %cst_124 = arith.constant dense<0.000000e+00> : vector<16xf32>
    %307 = vector.multi_reduction <add>, %302, %cst_124 [1] : vector<16x64xf32> to vector<16xf32>
    %308 = vector.shape_cast %307 : vector<16xf32> to vector<16x1xf32>
    %cst_125 = arith.constant 6.400000e+01 : f32
    %309 = vector.broadcast %cst_125 : f32 to vector<16x1xf32>
    %310 = arith.divf %308, %309 : vector<16x1xf32>
    %311 = vector.broadcast %310 : vector<16x1xf32> to vector<16x64xf32>
    %312 = arith.subf %302, %311 : vector<16x64xf32>
    %313 = arith.mulf %312, %312 : vector<16x64xf32>
    %cst_126 = arith.constant dense<0.000000e+00> : vector<16xf32>
    %314 = vector.multi_reduction <add>, %313, %cst_126 [1] : vector<16x64xf32> to vector<16xf32>
    %315 = vector.shape_cast %314 : vector<16xf32> to vector<16x1xf32>
    %cst_127 = arith.constant 6.400000e+01 : f32
    %316 = vector.broadcast %cst_127 : f32 to vector<16x1xf32>
    %317 = arith.divf %315, %316 : vector<16x1xf32>
    %318 = vector.broadcast %310 : vector<16x1xf32> to vector<16x64xf32>
    %319 = arith.subf %302, %318 : vector<16x64xf32>
    %cst_128 = arith.constant 9.99999974E-6 : f32
    %320 = vector.broadcast %cst_128 : f32 to vector<16x1xf32>
    %321 = arith.addf %317, %320 : vector<16x1xf32>
    %322 = math.rsqrt %321 : vector<16x1xf32>
    %323 = vector.broadcast %322 : vector<16x1xf32> to vector<16x64xf32>
    %324 = arith.mulf %319, %323 : vector<16x64xf32>
    %325 = vector.shape_cast %304 : vector<64xf32> to vector<1x64xf32>
    %326 = vector.broadcast %325 : vector<1x64xf32> to vector<16x64xf32>
    %327 = arith.mulf %324, %326 : vector<16x64xf32>
    %328 = vector.shape_cast %306 : vector<64xf32> to vector<1x64xf32>
    %329 = vector.broadcast %328 : vector<1x64xf32> to vector<16x64xf32>
    %330 = arith.addf %327, %329 : vector<16x64xf32>
    %331 = arith.truncf %330 : vector<16x64xf32> to vector<16x64xbf16>
    %c2_129 = arith.constant 2 : index
    %c0_130 = arith.constant 0 : index
    %c0_131 = arith.constant 0 : index
    %332 = vector.load %arg12[%c2_129, %c0_130, %c0_131] : memref<4x64x256xbf16, #tpu.memory_space<vmem>>, vector<1x64x256xbf16>
    %333 = vector.shape_cast %332 : vector<1x64x256xbf16> to vector<64x256xbf16>
    %cst_132 = arith.constant dense<0.000000e+00> : vector<16x256xf32>
    %334 = tpu.matmul %331, %333, %cst_132 {dimension_numbers = #tpu.dot_dimension_numbers<[1], [0], [0], [1], [0, 0, 1, 1], [], []>} : vector<16x64xbf16>, vector<64x256xbf16>, vector<16x256xf32> -> vector<16x256xf32>
    %c2_133 = arith.constant 2 : index
    %c0_134 = arith.constant 0 : index
    %335 = vector.load %arg13[%c2_133, %c0_134] : memref<4x256xf32, #tpu.memory_space<vmem>>, vector<1x256xf32>
    %336 = vector.shape_cast %335 : vector<1x256xf32> to vector<256xf32>
    %337 = vector.shape_cast %336 : vector<256xf32> to vector<1x256xf32>
    %338 = vector.broadcast %337 : vector<1x256xf32> to vector<16x256xf32>
    %339 = arith.addf %334, %338 : vector<16x256xf32>
    %cst_135 = arith.constant 0.000000e+00 : f32
    %340 = vector.broadcast %cst_135 : f32 to vector<16x256xf32>
    %341 = arith.maximumf %339, %340 : vector<16x256xf32>
    %342 = arith.truncf %341 : vector<16x256xf32> to vector<16x256xbf16>
    %c2_136 = arith.constant 2 : index
    %c0_137 = arith.constant 0 : index
    %c0_138 = arith.constant 0 : index
    %343 = vector.load %arg14[%c2_136, %c0_137, %c0_138] : memref<4x256x64xbf16, #tpu.memory_space<vmem>>, vector<1x256x64xbf16>
    %344 = vector.shape_cast %343 : vector<1x256x64xbf16> to vector<256x64xbf16>
    %cst_139 = arith.constant dense<0.000000e+00> : vector<16x64xf32>
    %345 = tpu.matmul %342, %344, %cst_139 {dimension_numbers = #tpu.dot_dimension_numbers<[1], [0], [0], [1], [0, 0, 1, 1], [], []>} : vector<16x256xbf16>, vector<256x64xbf16>, vector<16x64xf32> -> vector<16x64xf32>
    %346 = arith.addf %302, %345 : vector<16x64xf32>
    %c2_140 = arith.constant 2 : index
    %c0_141 = arith.constant 0 : index
    %347 = vector.load %arg15[%c2_140, %c0_141] : memref<4x64xf32, #tpu.memory_space<vmem>>, vector<1x64xf32>
    %348 = vector.shape_cast %347 : vector<1x64xf32> to vector<64xf32>
    %349 = vector.shape_cast %348 : vector<64xf32> to vector<1x64xf32>
    %350 = vector.broadcast %349 : vector<1x64xf32> to vector<16x64xf32>
    %351 = arith.addf %346, %350 : vector<16x64xf32>
    %c3 = arith.constant 3 : index
    %c0_142 = arith.constant 0 : index
    %352 = vector.load %arg5[%c3, %c0_142] : memref<4x64xf32, #tpu.memory_space<vmem>>, vector<1x64xf32>
    %353 = vector.shape_cast %352 : vector<1x64xf32> to vector<64xf32>
    %c3_143 = arith.constant 3 : index
    %c0_144 = arith.constant 0 : index
    %354 = vector.load %arg6[%c3_143, %c0_144] : memref<4x64xf32, #tpu.memory_space<vmem>>, vector<1x64xf32>
    %355 = vector.shape_cast %354 : vector<1x64xf32> to vector<64xf32>
    %cst_145 = arith.constant dense<0.000000e+00> : vector<16xf32>
    %356 = vector.multi_reduction <add>, %351, %cst_145 [1] : vector<16x64xf32> to vector<16xf32>
    %357 = vector.shape_cast %356 : vector<16xf32> to vector<16x1xf32>
    %cst_146 = arith.constant 6.400000e+01 : f32
    %358 = vector.broadcast %cst_146 : f32 to vector<16x1xf32>
    %359 = arith.divf %357, %358 : vector<16x1xf32>
    %360 = vector.broadcast %359 : vector<16x1xf32> to vector<16x64xf32>
    %361 = arith.subf %351, %360 : vector<16x64xf32>
    %362 = arith.mulf %361, %361 : vector<16x64xf32>
    %cst_147 = arith.constant dense<0.000000e+00> : vector<16xf32>
    %363 = vector.multi_reduction <add>, %362, %cst_147 [1] : vector<16x64xf32> to vector<16xf32>
    %364 = vector.shape_cast %363 : vector<16xf32> to vector<16x1xf32>
    %cst_148 = arith.constant 6.400000e+01 : f32
    %365 = vector.broadcast %cst_148 : f32 to vector<16x1xf32>
    %366 = arith.divf %364, %365 : vector<16x1xf32>
    %367 = vector.broadcast %359 : vector<16x1xf32> to vector<16x64xf32>
    %368 = arith.subf %351, %367 : vector<16x64xf32>
    %cst_149 = arith.constant 9.99999974E-6 : f32
    %369 = vector.broadcast %cst_149 : f32 to vector<16x1xf32>
    %370 = arith.addf %366, %369 : vector<16x1xf32>
    %371 = math.rsqrt %370 : vector<16x1xf32>
    %372 = vector.broadcast %371 : vector<16x1xf32> to vector<16x64xf32>
    %373 = arith.mulf %368, %372 : vector<16x64xf32>
    %374 = vector.shape_cast %353 : vector<64xf32> to vector<1x64xf32>
    %375 = vector.broadcast %374 : vector<1x64xf32> to vector<16x64xf32>
    %376 = arith.mulf %373, %375 : vector<16x64xf32>
    %377 = vector.shape_cast %355 : vector<64xf32> to vector<1x64xf32>
    %378 = vector.broadcast %377 : vector<1x64xf32> to vector<16x64xf32>
    %379 = arith.addf %376, %378 : vector<16x64xf32>
    %380 = arith.truncf %379 : vector<16x64xf32> to vector<16x64xbf16>
    %c3_150 = arith.constant 3 : index
    %c0_151 = arith.constant 0 : index
    %c0_152 = arith.constant 0 : index
    %381 = vector.load %arg7[%c3_150, %c0_151, %c0_152] : memref<4x64x192xbf16, #tpu.memory_space<vmem>>, vector<1x64x192xbf16>
    %382 = vector.shape_cast %381 : vector<1x64x192xbf16> to vector<64x192xbf16>
    %cst_153 = arith.constant dense<0.000000e+00> : vector<16x192xf32>
    %383 = tpu.matmul %380, %382, %cst_153 {dimension_numbers = #tpu.dot_dimension_numbers<[1], [0], [0], [1], [0, 0, 1, 1], [], []>} : vector<16x64xbf16>, vector<64x192xbf16>, vector<16x192xf32> -> vector<16x192xf32>
    %384 = vector.extract_strided_slice %383 {offsets = [0, 0], sizes = [16, 64], strides = [1, 1]} : vector<16x192xf32> to vector<16x64xf32>
    %385 = arith.truncf %384 : vector<16x64xf32> to vector<16x64xbf16>
    %386 = vector.extract_strided_slice %383 {offsets = [0, 64], sizes = [16, 64], strides = [1, 1]} : vector<16x192xf32> to vector<16x64xf32>
    %387 = arith.truncf %386 : vector<16x64xf32> to vector<16x64xbf16>
    %388 = vector.extract_strided_slice %383 {offsets = [0, 128], sizes = [16, 64], strides = [1, 1]} : vector<16x192xf32> to vector<16x64xf32>
    %389 = arith.truncf %388 : vector<16x64xf32> to vector<16x64xbf16>
    %390 = tpu.concatenate %387, %387, %387, %387 in 0 : vector<16x64xbf16>, vector<16x64xbf16>, vector<16x64xbf16>, vector<16x64xbf16> -> vector<64x64xbf16>
    %391 = arith.mulf %390, %0 : vector<64x64xbf16>
    %392 = tpu.concatenate %389, %389, %389, %389 in 0 : vector<16x64xbf16>, vector<16x64xbf16>, vector<16x64xbf16>, vector<16x64xbf16> -> vector<64x64xbf16>
    %393 = arith.mulf %392, %0 : vector<64x64xbf16>
    %cst_154 = arith.constant dense<0.000000e+00> : vector<16x64xf32>
    %394 = tpu.matmul %385, %391, %cst_154 {dimension_numbers = #tpu.dot_dimension_numbers<[1], [1], [0], [0], [0, 0, 1, 0], [], []>} : vector<16x64xbf16>, vector<64x64xbf16>, vector<16x64xf32> -> vector<16x64xf32>
    %395 = arith.addf %394, %2 : vector<16x64xf32>
    %cst_155 = arith.constant dense<0xFF800000> : vector<16xf32>
    %396 = vector.multi_reduction <maximumf>, %395, %cst_155 [1] : vector<16x64xf32> to vector<16xf32>
    %397 = vector.shape_cast %396 : vector<16xf32> to vector<16x1xf32>
    %398 = vector.broadcast %397 : vector<16x1xf32> to vector<16x64xf32>
    %399 = arith.subf %395, %398 : vector<16x64xf32>
    %400 = math.exp %399 : vector<16x64xf32>
    %401 = arith.truncf %400 : vector<16x64xf32> to vector<16x64xbf16>
    %cst_156 = arith.constant dense<0.000000e+00> : vector<16x64xf32>
    %402 = tpu.matmul %401, %1, %cst_156 {dimension_numbers = #tpu.dot_dimension_numbers<[1], [0], [0], [1], [0, 0, 1, 1], [], []>} : vector<16x64xbf16>, vector<64x64xbf16>, vector<16x64xf32> -> vector<16x64xf32>
    %cst_157 = arith.constant 1.000000e-30 : f32
    %403 = vector.broadcast %cst_157 : f32 to vector<16x64xf32>
    %404 = arith.addf %402, %403 : vector<16x64xf32>
    %405 = tpu.reciprocal %404 : vector<16x64xf32> -> vector<16x64xf32>
    %406 = arith.mulf %400, %405 : vector<16x64xf32>
    %407 = arith.truncf %406 : vector<16x64xf32> to vector<16x64xbf16>
    %cst_158 = arith.constant dense<0.000000e+00> : vector<16x64xf32>
    %408 = tpu.matmul %407, %393, %cst_158 {dimension_numbers = #tpu.dot_dimension_numbers<[1], [0], [0], [1], [0, 0, 1, 1], [], []>} : vector<16x64xbf16>, vector<64x64xbf16>, vector<16x64xf32> -> vector<16x64xf32>
    %409 = arith.truncf %408 : vector<16x64xf32> to vector<16x64xbf16>
    %c3_159 = arith.constant 3 : index
    %c0_160 = arith.constant 0 : index
    %c0_161 = arith.constant 0 : index
    %410 = vector.load %arg8[%c3_159, %c0_160, %c0_161] : memref<4x64x64xbf16, #tpu.memory_space<vmem>>, vector<1x64x64xbf16>
    %411 = vector.shape_cast %410 : vector<1x64x64xbf16> to vector<64x64xbf16>
    %cst_162 = arith.constant dense<0.000000e+00> : vector<16x64xf32>
    %412 = tpu.matmul %409, %411, %cst_162 {dimension_numbers = #tpu.dot_dimension_numbers<[1], [0], [0], [1], [0, 0, 1, 1], [], []>} : vector<16x64xbf16>, vector<64x64xbf16>, vector<16x64xf32> -> vector<16x64xf32>
    %413 = arith.addf %351, %412 : vector<16x64xf32>
    %c3_163 = arith.constant 3 : index
    %c0_164 = arith.constant 0 : index
    %414 = vector.load %arg9[%c3_163, %c0_164] : memref<4x64xf32, #tpu.memory_space<vmem>>, vector<1x64xf32>
    %415 = vector.shape_cast %414 : vector<1x64xf32> to vector<64xf32>
    %416 = vector.shape_cast %415 : vector<64xf32> to vector<1x64xf32>
    %417 = vector.broadcast %416 : vector<1x64xf32> to vector<16x64xf32>
    %418 = arith.addf %413, %417 : vector<16x64xf32>
    %c3_165 = arith.constant 3 : index
    %c0_166 = arith.constant 0 : index
    %419 = vector.load %arg10[%c3_165, %c0_166] : memref<4x64xf32, #tpu.memory_space<vmem>>, vector<1x64xf32>
    %420 = vector.shape_cast %419 : vector<1x64xf32> to vector<64xf32>
    %c3_167 = arith.constant 3 : index
    %c0_168 = arith.constant 0 : index
    %421 = vector.load %arg11[%c3_167, %c0_168] : memref<4x64xf32, #tpu.memory_space<vmem>>, vector<1x64xf32>
    %422 = vector.shape_cast %421 : vector<1x64xf32> to vector<64xf32>
    %cst_169 = arith.constant dense<0.000000e+00> : vector<16xf32>
    %423 = vector.multi_reduction <add>, %418, %cst_169 [1] : vector<16x64xf32> to vector<16xf32>
    %424 = vector.shape_cast %423 : vector<16xf32> to vector<16x1xf32>
    %cst_170 = arith.constant 6.400000e+01 : f32
    %425 = vector.broadcast %cst_170 : f32 to vector<16x1xf32>
    %426 = arith.divf %424, %425 : vector<16x1xf32>
    %427 = vector.broadcast %426 : vector<16x1xf32> to vector<16x64xf32>
    %428 = arith.subf %418, %427 : vector<16x64xf32>
    %429 = arith.mulf %428, %428 : vector<16x64xf32>
    %cst_171 = arith.constant dense<0.000000e+00> : vector<16xf32>
    %430 = vector.multi_reduction <add>, %429, %cst_171 [1] : vector<16x64xf32> to vector<16xf32>
    %431 = vector.shape_cast %430 : vector<16xf32> to vector<16x1xf32>
    %cst_172 = arith.constant 6.400000e+01 : f32
    %432 = vector.broadcast %cst_172 : f32 to vector<16x1xf32>
    %433 = arith.divf %431, %432 : vector<16x1xf32>
    %434 = vector.broadcast %426 : vector<16x1xf32> to vector<16x64xf32>
    %435 = arith.subf %418, %434 : vector<16x64xf32>
    %cst_173 = arith.constant 9.99999974E-6 : f32
    %436 = vector.broadcast %cst_173 : f32 to vector<16x1xf32>
    %437 = arith.addf %433, %436 : vector<16x1xf32>
    %438 = math.rsqrt %437 : vector<16x1xf32>
    %439 = vector.broadcast %438 : vector<16x1xf32> to vector<16x64xf32>
    %440 = arith.mulf %435, %439 : vector<16x64xf32>
    %441 = vector.shape_cast %420 : vector<64xf32> to vector<1x64xf32>
    %442 = vector.broadcast %441 : vector<1x64xf32> to vector<16x64xf32>
    %443 = arith.mulf %440, %442 : vector<16x64xf32>
    %444 = vector.shape_cast %422 : vector<64xf32> to vector<1x64xf32>
    %445 = vector.broadcast %444 : vector<1x64xf32> to vector<16x64xf32>
    %446 = arith.addf %443, %445 : vector<16x64xf32>
    %447 = arith.truncf %446 : vector<16x64xf32> to vector<16x64xbf16>
    %c3_174 = arith.constant 3 : index
    %c0_175 = arith.constant 0 : index
    %c0_176 = arith.constant 0 : index
    %448 = vector.load %arg12[%c3_174, %c0_175, %c0_176] : memref<4x64x256xbf16, #tpu.memory_space<vmem>>, vector<1x64x256xbf16>
    %449 = vector.shape_cast %448 : vector<1x64x256xbf16> to vector<64x256xbf16>
    %cst_177 = arith.constant dense<0.000000e+00> : vector<16x256xf32>
    %450 = tpu.matmul %447, %449, %cst_177 {dimension_numbers = #tpu.dot_dimension_numbers<[1], [0], [0], [1], [0, 0, 1, 1], [], []>} : vector<16x64xbf16>, vector<64x256xbf16>, vector<16x256xf32> -> vector<16x256xf32>
    %c3_178 = arith.constant 3 : index
    %c0_179 = arith.constant 0 : index
    %451 = vector.load %arg13[%c3_178, %c0_179] : memref<4x256xf32, #tpu.memory_space<vmem>>, vector<1x256xf32>
    %452 = vector.shape_cast %451 : vector<1x256xf32> to vector<256xf32>
    %453 = vector.shape_cast %452 : vector<256xf32> to vector<1x256xf32>
    %454 = vector.broadcast %453 : vector<1x256xf32> to vector<16x256xf32>
    %455 = arith.addf %450, %454 : vector<16x256xf32>
    %cst_180 = arith.constant 0.000000e+00 : f32
    %456 = vector.broadcast %cst_180 : f32 to vector<16x256xf32>
    %457 = arith.maximumf %455, %456 : vector<16x256xf32>
    %458 = arith.truncf %457 : vector<16x256xf32> to vector<16x256xbf16>
    %c3_181 = arith.constant 3 : index
    %c0_182 = arith.constant 0 : index
    %c0_183 = arith.constant 0 : index
    %459 = vector.load %arg14[%c3_181, %c0_182, %c0_183] : memref<4x256x64xbf16, #tpu.memory_space<vmem>>, vector<1x256x64xbf16>
    %460 = vector.shape_cast %459 : vector<1x256x64xbf16> to vector<256x64xbf16>
    %cst_184 = arith.constant dense<0.000000e+00> : vector<16x64xf32>
    %461 = tpu.matmul %458, %460, %cst_184 {dimension_numbers = #tpu.dot_dimension_numbers<[1], [0], [0], [1], [0, 0, 1, 1], [], []>} : vector<16x256xbf16>, vector<256x64xbf16>, vector<16x64xf32> -> vector<16x64xf32>
    %462 = arith.addf %418, %461 : vector<16x64xf32>
    %c3_185 = arith.constant 3 : index
    %c0_186 = arith.constant 0 : index
    %463 = vector.load %arg15[%c3_185, %c0_186] : memref<4x64xf32, #tpu.memory_space<vmem>>, vector<1x64xf32>
    %464 = vector.shape_cast %463 : vector<1x64xf32> to vector<64xf32>
    %465 = vector.shape_cast %464 : vector<64xf32> to vector<1x64xf32>
    %466 = vector.broadcast %465 : vector<1x64xf32> to vector<16x64xf32>
    %467 = arith.addf %462, %466 : vector<16x64xf32>
    %c0_187 = arith.constant 0 : index
    %c0_188 = arith.constant 0 : index
    %468 = vector.load %arg16[%c0_187, %c0_188] : memref<1x64xf32, #tpu.memory_space<vmem>>, vector<1x64xf32>
    %469 = vector.shape_cast %468 : vector<1x64xf32> to vector<64xf32>
    %c0_189 = arith.constant 0 : index
    %c0_190 = arith.constant 0 : index
    %470 = vector.load %arg17[%c0_189, %c0_190] : memref<1x64xf32, #tpu.memory_space<vmem>>, vector<1x64xf32>
    %471 = vector.shape_cast %470 : vector<1x64xf32> to vector<64xf32>
    %cst_191 = arith.constant dense<0.000000e+00> : vector<16xf32>
    %472 = vector.multi_reduction <add>, %467, %cst_191 [1] : vector<16x64xf32> to vector<16xf32>
    %473 = vector.shape_cast %472 : vector<16xf32> to vector<16x1xf32>
    %cst_192 = arith.constant 6.400000e+01 : f32
    %474 = vector.broadcast %cst_192 : f32 to vector<16x1xf32>
    %475 = arith.divf %473, %474 : vector<16x1xf32>
    %476 = vector.broadcast %475 : vector<16x1xf32> to vector<16x64xf32>
    %477 = arith.subf %467, %476 : vector<16x64xf32>
    %478 = arith.mulf %477, %477 : vector<16x64xf32>
    %cst_193 = arith.constant dense<0.000000e+00> : vector<16xf32>
    %479 = vector.multi_reduction <add>, %478, %cst_193 [1] : vector<16x64xf32> to vector<16xf32>
    %480 = vector.shape_cast %479 : vector<16xf32> to vector<16x1xf32>
    %cst_194 = arith.constant 6.400000e+01 : f32
    %481 = vector.broadcast %cst_194 : f32 to vector<16x1xf32>
    %482 = arith.divf %480, %481 : vector<16x1xf32>
    %483 = vector.broadcast %475 : vector<16x1xf32> to vector<16x64xf32>
    %484 = arith.subf %467, %483 : vector<16x64xf32>
    %cst_195 = arith.constant 9.99999974E-6 : f32
    %485 = vector.broadcast %cst_195 : f32 to vector<16x1xf32>
    %486 = arith.addf %482, %485 : vector<16x1xf32>
    %487 = math.rsqrt %486 : vector<16x1xf32>
    %488 = vector.broadcast %487 : vector<16x1xf32> to vector<16x64xf32>
    %489 = arith.mulf %484, %488 : vector<16x64xf32>
    %490 = vector.shape_cast %469 : vector<64xf32> to vector<1x64xf32>
    %491 = vector.broadcast %490 : vector<1x64xf32> to vector<16x64xf32>
    %492 = arith.mulf %489, %491 : vector<16x64xf32>
    %493 = vector.shape_cast %471 : vector<64xf32> to vector<1x64xf32>
    %494 = vector.broadcast %493 : vector<1x64xf32> to vector<16x64xf32>
    %495 = arith.addf %492, %494 : vector<16x64xf32>
    %496 = arith.truncf %495 : vector<16x64xf32> to vector<16x64xbf16>
    %c0_196 = arith.constant 0 : index
    %c0_197 = arith.constant 0 : index
    %497 = vector.load %arg18[%c0_196, %c0_197] : memref<64x128xbf16, #tpu.memory_space<vmem>>, vector<64x128xbf16>
    %cst_198 = arith.constant dense<0.000000e+00> : vector<16x128xf32>
    %498 = tpu.matmul %496, %497, %cst_198 {dimension_numbers = #tpu.dot_dimension_numbers<[1], [0], [0], [1], [0, 0, 1, 1], [], []>} : vector<16x64xbf16>, vector<64x128xbf16>, vector<16x128xf32> -> vector<16x128xf32>
    %c0_199 = arith.constant 0 : index
    %c0_200 = arith.constant 0 : index
    %499 = vector.load %arg19[%c0_199, %c0_200] : memref<1x128xf32, #tpu.memory_space<vmem>>, vector<1x128xf32>
    %500 = vector.shape_cast %499 : vector<1x128xf32> to vector<128xf32>
    %501 = vector.shape_cast %500 : vector<128xf32> to vector<1x128xf32>
    %502 = vector.broadcast %501 : vector<1x128xf32> to vector<16x128xf32>
    %503 = arith.addf %498, %502 : vector<16x128xf32>
    %c0_201 = arith.constant 0 : index
    %c0_202 = arith.constant 0 : index
    %504 = vector.load %arg20[%c0_201, %c0_202] : memref<16x128xf32, #tpu.memory_space<vmem>>, vector<16x128xf32>
    tpu.vector_store %arg20[%c0_201, %c0_202], %503 {strides = array<i32>} : memref<16x128xf32, #tpu.memory_space<vmem>>, vector<16x128xf32>,
    return
  }
  func.func @transform_0(%arg0: i32) -> (i32, i32) {
    %c0_i32 = arith.constant 0 : i32
    %c0_i32_0 = arith.constant 0 : i32
    return %arg0, %c0_i32 : i32, i32
  }
  func.func @transform_1(%arg0: i32) -> (i32, i32) {
    %c0_i32 = arith.constant 0 : i32
    %c0_i32_0 = arith.constant 0 : i32
    %c0_i32_1 = arith.constant 0 : i32
    return %c0_i32, %c0_i32_0 : i32, i32
  }
  func.func @transform_2(%arg0: i32) -> (i32, i32) {
    %c0_i32 = arith.constant 0 : i32
    %c0_i32_0 = arith.constant 0 : i32
    %c0_i32_1 = arith.constant 0 : i32
    return %c0_i32, %c0_i32_0 : i32, i32
  }
  func.func @transform_3(%arg0: i32) -> (i32, i32) {
    %c0_i32 = arith.constant 0 : i32
    %c0_i32_0 = arith.constant 0 : i32
    %c0_i32_1 = arith.constant 0 : i32
    return %c0_i32, %c0_i32_0 : i32, i32
  }
  func.func @transform_4(%arg0: i32) -> (i32, i32) {
    %c0_i32 = arith.constant 0 : i32
    %c0_i32_0 = arith.constant 0 : i32
    %c0_i32_1 = arith.constant 0 : i32
    return %c0_i32, %c0_i32_0 : i32, i32
  }
  func.func @transform_5(%arg0: i32) -> (i32, i32) {
    %c0_i32 = arith.constant 0 : i32
    %c0_i32_0 = arith.constant 0 : i32
    %c0_i32_1 = arith.constant 0 : i32
    return %c0_i32, %c0_i32_0 : i32, i32
  }
  func.func @transform_6(%arg0: i32) -> (i32, i32, i32) {
    %c0_i32 = arith.constant 0 : i32
    %c0_i32_0 = arith.constant 0 : i32
    %c0_i32_1 = arith.constant 0 : i32
    %c0_i32_2 = arith.constant 0 : i32
    return %c0_i32, %c0_i32_0, %c0_i32_1 : i32, i32, i32
  }
  func.func @transform_7(%arg0: i32) -> (i32, i32, i32) {
    %c0_i32 = arith.constant 0 : i32
    %c0_i32_0 = arith.constant 0 : i32
    %c0_i32_1 = arith.constant 0 : i32
    %c0_i32_2 = arith.constant 0 : i32
    return %c0_i32, %c0_i32_0, %c0_i32_1 : i32, i32, i32
  }
  func.func @transform_8(%arg0: i32) -> (i32, i32) {
    %c0_i32 = arith.constant 0 : i32
    %c0_i32_0 = arith.constant 0 : i32
    %c0_i32_1 = arith.constant 0 : i32
    return %c0_i32, %c0_i32_0 : i32, i32
  }
  func.func @transform_9(%arg0: i32) -> (i32, i32) {
    %c0_i32 = arith.constant 0 : i32
    %c0_i32_0 = arith.constant 0 : i32
    %c0_i32_1 = arith.constant 0 : i32
    return %c0_i32, %c0_i32_0 : i32, i32
  }
  func.func @transform_10(%arg0: i32) -> (i32, i32) {
    %c0_i32 = arith.constant 0 : i32
    %c0_i32_0 = arith.constant 0 : i32
    %c0_i32_1 = arith.constant 0 : i32
    return %c0_i32, %c0_i32_0 : i32, i32
  }
  func.func @transform_11(%arg0: i32) -> (i32, i32, i32) {
    %c0_i32 = arith.constant 0 : i32
    %c0_i32_0 = arith.constant 0 : i32
    %c0_i32_1 = arith.constant 0 : i32
    %c0_i32_2 = arith.constant 0 : i32
    return %c0_i32, %c0_i32_0, %c0_i32_1 : i32, i32, i32
  }
  func.func @transform_12(%arg0: i32) -> (i32, i32) {
    %c0_i32 = arith.constant 0 : i32
    %c0_i32_0 = arith.constant 0 : i32
    %c0_i32_1 = arith.constant 0 : i32
    return %c0_i32, %c0_i32_0 : i32, i32
  }
  func.func @transform_13(%arg0: i32) -> (i32, i32, i32) {
    %c0_i32 = arith.constant 0 : i32
    %c0_i32_0 = arith.constant 0 : i32
    %c0_i32_1 = arith.constant 0 : i32
    %c0_i32_2 = arith.constant 0 : i32
    return %c0_i32, %c0_i32_0, %c0_i32_1 : i32, i32, i32
  }
  func.func @transform_14(%arg0: i32) -> (i32, i32) {
    %c0_i32 = arith.constant 0 : i32
    %c0_i32_0 = arith.constant 0 : i32
    %c0_i32_1 = arith.constant 0 : i32
    return %c0_i32, %c0_i32_0 : i32, i32
  }
  func.func @transform_15(%arg0: i32) -> (i32, i32) {
    %c0_i32 = arith.constant 0 : i32
    %c0_i32_0 = arith.constant 0 : i32
    %c0_i32_1 = arith.constant 0 : i32
    return %c0_i32, %c0_i32_0 : i32, i32
  }
  func.func @transform_16(%arg0: i32) -> (i32, i32) {
    %c0_i32 = arith.constant 0 : i32
    %c0_i32_0 = arith.constant 0 : i32
    %c0_i32_1 = arith.constant 0 : i32
    return %c0_i32, %c0_i32_0 : i32, i32
  }
  func.func @transform_17(%arg0: i32) -> (i32, i32) {
    %c0_i32 = arith.constant 0 : i32
    %c0_i32_0 = arith.constant 0 : i32
    %c0_i32_1 = arith.constant 0 : i32
    return %c0_i32, %c0_i32_0 : i32, i32
  }
  func.func @transform_18(%arg0: i32) -> (i32, i32) {
    %c0_i32 = arith.constant 0 : i32
    %c0_i32_0 = arith.constant 0 : i32
    %c0_i32_1 = arith.constant 0 : i32
    return %c0_i32, %c0_i32_0 : i32, i32
  }
  func.func @transform_19(%arg0: i32) -> (i32, i32) {
    %c0_i32 = arith.constant 0 : i32
    %c0_i32_0 = arith.constant 0 : i32
    return %arg0, %c0_i32 : i32, i32
  }
}

</mosaic_0001>

<llo_original>
// kernel: tpu_custom_call.1
$region0: #{tpu_custom_call.1}
  #allocation0 [shape = 'u32[]', space=smem, size = 0x4, offset = 0x4, fixed_abs, tag = 'smem constant byte address 0x4 - core index']
  #allocation1 [shape = 'u32[144,128]{1,0:T(1,128)}', space=vmem, size = 0x12000, scoped, tag = 'internal scratch']
  %s0 = inlined_call_operand.vmem [shape: f32[16,64], index: 0, kind: input, shape index: {}]
  %s1 = inlined_call_operand.vmem [shape: bf16[64,64], index: 1, kind: input, shape index: {}]
  %s2 = inlined_call_operand.vmem [shape: bf16[64,64], index: 2, kind: input, shape index: {}]
  %s3 = inlined_call_operand.vmem [shape: f32[16,64], index: 3, kind: input, shape index: {}]
  %s4 = inlined_call_operand.hbm [shape: f32[4,64], index: 4, kind: input, shape index: {}]
  %s5 = inlined_call_operand.hbm [shape: f32[4,64], index: 5, kind: input, shape index: {}]
  %s6 = inlined_call_operand.vmem [shape: bf16[4,64,192], index: 6, kind: input, shape index: {}]
  %s7 = inlined_call_operand.vmem [shape: bf16[4,64,64], index: 7, kind: input, shape index: {}]
  %s8 = inlined_call_operand.vmem [shape: f32[4,64], index: 8, kind: input, shape index: {}]
  %s9 = inlined_call_operand.vmem [shape: f32[4,64], index: 9, kind: input, shape index: {}]
  %s10 = inlined_call_operand.vmem [shape: f32[4,64], index: 10, kind: input, shape index: {}]
  %s11 = inlined_call_operand.vmem [shape: bf16[4,64,256], index: 11, kind: input, shape index: {}]
  %s12 = inlined_call_operand.vmem [shape: f32[4,256], index: 12, kind: input, shape index: {}]
  %s13 = inlined_call_operand.vmem [shape: bf16[4,256,64], index: 13, kind: input, shape index: {}]
  %s14 = inlined_call_operand.vmem [shape: f32[4,64], index: 14, kind: input, shape index: {}]
  %s15 = inlined_call_operand.vmem [shape: f32[1,64], index: 15, kind: input, shape index: {}]
  %s16 = inlined_call_operand.vmem [shape: f32[1,64], index: 16, kind: input, shape index: {}]
  %s17 = inlined_call_operand.vmem [shape: bf16[64,128], index: 17, kind: input, shape index: {}]
  %s18 = inlined_call_operand.vmem [shape: f32[1,128], index: 18, kind: input, shape index: {}]
  %s19 = inlined_call_operand.hbm [shape: f32[16,128], index: 19, kind: output, shape index: {}]
  %s20 = sld [smem:[#allocation0]]
  $region94: #{tpu_custom_call.1} parent=0
    _
  %s22 = ssub.s32 1, %s20
  %s23 = scalar_select 0, %s22, %s20
  $region1: #{tpu_custom_call.1} parent=0
    #allocation2 [shape = 'u8[2048]{0}', space=vmem, size = 0x800, scoped, tag = 'input window, operand 4, single buffered']
    #allocation3 [shape = 's32[1]{0}', space=sflag, size = 0x4, scoped, tag = 'scoped memory for tpu_custom_call.1']
    #allocation4 [shape = 's32[1]{0}', space=sflag, size = 0x4, scoped, tag = 'scoped memory for tpu_custom_call.1']
    #allocation5 [shape = 'u8[2048]{0}', space=vmem, size = 0x800, scoped, tag = 'input window, operand 5, single buffered']
    #allocation6 [shape = 's32[1]{0}', space=sflag, size = 0x4, scoped, tag = 'scoped memory for tpu_custom_call.1']
    #allocation7 [shape = 'u8[8192]{0}', space=vmem, size = 0x2000, scoped, tag = 'output window, operand 0, single buffered']
    %24 = vsyncpa [#allocation3], 0
    %25 = vsyncpa [#allocation6], 0
    %26 = vsyncpa [#allocation4], 0
    // Predicated region
    $region2: #{tpu_custom_call.1} parent=1 // pred_check
      _
    $region3: #{tpu_custom_call.1} parent=1 // pred_check_branch
      %28 = sbr.rel (0) target = $region5
    $region4: #{tpu_custom_call.1} parent=1 // pred_region
      _
    $region5: #{tpu_custom_call.1} parent=1 // pred_fallthru
      _
    // Predicated region
    $region6: #{tpu_custom_call.1} parent=1 // pred_check
      _
    $region7: #{tpu_custom_call.1} parent=1 // pred_check_branch
      %30 = sbr.rel (0) target = $region9
    $region8: #{tpu_custom_call.1} parent=1 // pred_region
      _
    $region9: #{tpu_custom_call.1} parent=1 // pred_fallthru
      _
    // Predicated region
    $region10: #{tpu_custom_call.1} parent=1 // pred_check
      _
    $region11: #{tpu_custom_call.1} parent=1 // pred_check_branch
      %32 = sbr.rel (0) target = $region13
    $region12: #{tpu_custom_call.1} parent=1 // pred_region
      _
    $region13: #{tpu_custom_call.1} parent=1 // pred_fallthru
      _
    // Predicated region
    $region14: #{tpu_custom_call.1} parent=1 // pred_check
      _
    $region15: #{tpu_custom_call.1} parent=1 // pred_check_branch
      %34 = sbr.rel (0) target = $region17
    $region16: #{tpu_custom_call.1} parent=1 // pred_region
      _
    $region17: #{tpu_custom_call.1} parent=1 // pred_fallthru
      _
    // Predicated region
    $region18: #{tpu_custom_call.1} parent=1 // pred_check
      _
    $region19: #{tpu_custom_call.1} parent=1 // pred_check_branch
      %36 = sbr.rel (0) target = $region21
    $region20: #{tpu_custom_call.1} parent=1 // pred_region
      %s38 = ssub.s32 64, 64
      %39 = vsyncadd [#allocation3], %s38
      %s41 = sshll.u32 [#allocation2], 4
      %s42 = int_to_ptr.vmem [resolvable:$true] %s41
      %44 = dma.hbm_to_vmem [thread:$0]  %s4, 64, %s42, [#allocation3]
    $region21: #{tpu_custom_call.1} parent=1 // pred_fallthru
      _
    // Predicated region
    $region22: #{tpu_custom_call.1} parent=1 // pred_check
      _
    $region23: #{tpu_custom_call.1} parent=1 // pred_check_branch
      %46 = sbr.rel (0) target = $region25
    $region24: #{tpu_custom_call.1} parent=1 // pred_region
      %s48 = ssub.s32 64, 64
      %49 = vsyncadd [#allocation6], %s48
      %s51 = sshll.u32 [#allocation5], 4
      %s52 = int_to_ptr.vmem [resolvable:$true] %s51
      %54 = dma.hbm_to_vmem [thread:$0]  %s5, 64, %s52, [#allocation6]
    $region25: #{tpu_custom_call.1} parent=1 // pred_fallthru
      _
    // Predicated region
    $region26: #{tpu_custom_call.1} parent=1 // pred_check
      _
    $region27: #{tpu_custom_call.1} parent=1 // pred_check_branch
      %56 = sbr.rel (0) target = $region29
    $region28: #{tpu_custom_call.1} parent=1 // pred_region
      _
    $region29: #{tpu_custom_call.1} parent=1 // pred_fallthru
      _
    // Predicated region
    $region30: #{tpu_custom_call.1} parent=1 // pred_check
      _
    $region31: #{tpu_custom_call.1} parent=1 // pred_check_branch
      %58 = sbr.rel (0) target = $region33
    $region32: #{tpu_custom_call.1} parent=1 // pred_region
      _
    $region33: #{tpu_custom_call.1} parent=1 // pred_fallthru
      _
    // Predicated region
    $region34: #{tpu_custom_call.1} parent=1 // pred_check
      _
    $region35: #{tpu_custom_call.1} parent=1 // pred_check_branch
      %60 = sbr.rel (0) target = $region37
    $region36: #{tpu_custom_call.1} parent=1 // pred_region
      _
    $region37: #{tpu_custom_call.1} parent=1 // pred_fallthru
      _
    // Predicated region
    $region38: #{tpu_custom_call.1} parent=1 // pred_check
      _
    $region39: #{tpu_custom_call.1} parent=1 // pred_check_branch
      %62 = sbr.rel (0) target = $region41
    $region40: #{tpu_custom_call.1} parent=1 // pred_region
      _
    $region41: #{tpu_custom_call.1} parent=1 // pred_fallthru
      _
    // Predicated region
    $region42: #{tpu_custom_call.1} parent=1 // pred_check
      _
    $region43: #{tpu_custom_call.1} parent=1 // pred_check_branch
      %64 = sbr.rel (0) target = $region45
    $region44: #{tpu_custom_call.1} parent=1 // pred_region
      _
    $region45: #{tpu_custom_call.1} parent=1 // pred_fallthru
      _
    // Predicated region
    $region46: #{tpu_custom_call.1} parent=1 // pred_check
      _
    $region47: #{tpu_custom_call.1} parent=1 // pred_check_branch
      %66 = sbr.rel (0) target = $region49
    $region48: #{tpu_custom_call.1} parent=1 // pred_region
      _
    $region49: #{tpu_custom_call.1} parent=1 // pred_fallthru
      _
    // Predicated region
    $region50: #{tpu_custom_call.1} parent=1 // pred_check
      _
    $region51: #{tpu_custom_call.1} parent=1 // pred_check_branch
      %68 = sbr.rel (0) target = $region53
    $region52: #{tpu_custom_call.1} parent=1 // pred_region
      _
    $region53: #{tpu_custom_call.1} parent=1 // pred_fallthru
      _
    // Predicated region
    $region54: #{tpu_custom_call.1} parent=1 // pred_check
      _
    $region55: #{tpu_custom_call.1} parent=1 // pred_check_branch
      %70 = sbr.rel (0) target = $region57
    $region56: #{tpu_custom_call.1} parent=1 // pred_region
      _
    $region57: #{tpu_custom_call.1} parent=1 // pred_fallthru
      _
    // Predicated region
    $region58: #{tpu_custom_call.1} parent=1 // pred_check
      _
    $region59: #{tpu_custom_call.1} parent=1 // pred_check_branch
      %72 = sbr.rel (0) target = $region61
    $region60: #{tpu_custom_call.1} parent=1 // pred_region
      _
    $region61: #{tpu_custom_call.1} parent=1 // pred_fallthru
      _
    // Predicated region
    $region62: #{tpu_custom_call.1} parent=1 // pred_check
      _
    $region63: #{tpu_custom_call.1} parent=1 // pred_check_branch
      %74 = sbr.rel (0) target = $region65
    $region64: #{tpu_custom_call.1} parent=1 // pred_region
      _
    $region65: #{tpu_custom_call.1} parent=1 // pred_fallthru
      _
    // Predicated region
    $region66: #{tpu_custom_call.1} parent=1 // pred_check
      _
    $region67: #{tpu_custom_call.1} parent=1 // pred_check_branch
      %76 = sbr.rel (0) target = $region69
    $region68: #{tpu_custom_call.1} parent=1 // pred_region
      _
    $region69: #{tpu_custom_call.1} parent=1 // pred_fallthru
      _
    // Predicated region
    $region70: #{tpu_custom_call.1} parent=1 // pred_check
      _
    $region71: #{tpu_custom_call.1} parent=1 // pred_check_branch
      %78 = sbr.rel (0) target = $region73
    $region72: #{tpu_custom_call.1} parent=1 // pred_region
      _
    $region73: #{tpu_custom_call.1} parent=1 // pred_fallthru
      _
    // Predicated region
    $region74: #{tpu_custom_call.1} parent=1 // pred_check
      _
    $region75: #{tpu_custom_call.1} parent=1 // pred_check_branch
      %80 = sbr.rel (0) target = $region77
    $region76: #{tpu_custom_call.1} parent=1 // pred_region
      _
    $region77: #{tpu_custom_call.1} parent=1 // pred_fallthru
      _
    // Predicated region
    $region78: #{tpu_custom_call.1} parent=1 // pred_check
      _
    $region79: #{tpu_custom_call.1} parent=1 // pred_check_branch
      %82 = sbr.rel (0) target = $region81
    $region80: #{tpu_custom_call.1} parent=1 // pred_region
      %83 = dma.done [#allocation3], 64
    $region81: #{tpu_custom_call.1} parent=1 // pred_fallthru
      _
    // Predicated region
    $region82: #{tpu_custom_call.1} parent=1 // pred_check
      _
    $region83: #{tpu_custom_call.1} parent=1 // pred_check_branch
      %85 = sbr.rel (0) target = $region85
    $region84: #{tpu_custom_call.1} parent=1 // pred_region
      %86 = dma.done [#allocation6], 64
    $region85: #{tpu_custom_call.1} parent=1 // pred_fallthru
      _
    %v88 = vld [vmem:[%s1] sm:$0xf]
    %v89 = vld [vmem:[%s1 + $0x4] sm:$0xf]
    %v90 = vld [vmem:[%s1 + $0x8] sm:$0xf]
    %v91 = vld [vmem:[%s1 + $0xc] sm:$0xf]
    %v92 = vld [vmem:[%s1 + $0x10] sm:$0xf]
    %v93 = vld [vmem:[%s1 + $0x14] sm:$0xf]
    %v94 = vld [vmem:[%s1 + $0x18] sm:$0xf]
    %v95 = vld [vmem:[%s1 + $0x1c] sm:$0xf]
    %v96 = vld [vmem:[%s2] sm:$0xf]
    %v97 = vld [vmem:[%s2 + $0x4] sm:$0xf]
    %v98 = vld [vmem:[%s2 + $0x8] sm:$0xf]
    %v99 = vld [vmem:[%s2 + $0xc] sm:$0xf]
    %v100 = vld [vmem:[%s2 + $0x10] sm:$0xf]
    %v101 = vld [vmem:[%s2 + $0x14] sm:$0xf]
    %v102 = vld [vmem:[%s2 + $0x18] sm:$0xf]
    %v103 = vld [vmem:[%s2 + $0x1c] sm:$0xf]
    %v104 = vld [vmem:[%s3] sm:$0xff]
    %v105 = vld [vmem:[%s3 + $0x8] sm:$0xff]
    %v106 = vld [vmem:[%s0] sm:$0xff]
    %v107 = vld [vmem:[%s0 + $0x8] sm:$0xff]
    %v108 = vld [vmem:[#allocation2] sm:$0x1]
    %v109 = vld [vmem:[#allocation5] sm:$0x1]
    %vm110 = vcmask 523264
    %v111 = vsel %vm110, %v106, 0.0
    %112 = vadd.xlane.f32.xlu0 %v111
    %v113 = vpop.xlane.xlu0 %112
    %v114 = vsel %vm110, %v107, 0.0
    %115 = vadd.xlane.f32.xlu0 %v114
    %v116 = vpop.xlane.xlu0 %115
    %v117 = vrcp.pop 64.0
    %v118 = vmul.f32 %v113, %v117
    %v119 = vmul.f32 %v116, %v117
    %v120 = vsub.f32 %v106, %v118
    %v121 = vsub.f32 %v107, %v119
    %v122 = vmul.f32 %v120, %v120
    %v123 = vmul.f32 %v121, %v121
    %v124 = vsel %vm110, %v122, 0.0
    %125 = vadd.xlane.f32.xlu0 %v124
    %v126 = vpop.xlane.xlu0 %125
    %v127 = vsel %vm110, %v123, 0.0
    %128 = vadd.xlane.f32.xlu0 %v127
    %v129 = vpop.xlane.xlu0 %128
    %v130 = vmul.f32 %v126, %v117
    %v131 = vmul.f32 %v129, %v117
    %v132 = vadd.f32 %v130, 1e-05
    %v133 = vadd.f32 %v131, 1e-05
    %v134 = vrsqrt.pop %v132
    %v135 = vrsqrt.pop %v133
    %v136 = vmul.f32 %v120, %v134
    %v137 = vmul.f32 %v121, %v135
    %v138 = vlaneseq
    %v139 = vshrl.u32 %v138, 7
    %v140 = vsub.s32 0, %v139
    %v141 = vrot.slane %v108, %v140
    %v142 = vmul.f32 %v136, %v141
    %v143 = vmul.f32 %v137, %v141
    %v144 = vlaneseq
    %v145 = vshrl.u32 %v144, 7
    %v146 = vsub.s32 0, %v145
    %v147 = vrot.slane %v109, %v146
    %v148 = vadd.f32 %v142, %v147
    %v149 = vadd.f32 %v143, %v147
    %v150 = vpack.c.bf16 %v149, %v148
    %v151 = vld [vmem:[%s6] sm:$0xff]
    %v152 = vld [vmem:[%s6 + $0x8] sm:$0xff]
    %v153 = vld [vmem:[%s6 + $0x10] sm:$0xff]
    %v154 = vld [vmem:[%s6 + $0x18] sm:$0xff]
    %v155 = vld [vmem:[%s6 + $0x20] sm:$0xff]
    %v156 = vld [vmem:[%s6 + $0x28] sm:$0xff]
    %v157 = vld [vmem:[%s6 + $0x30] sm:$0xff]
    %v158 = vld [vmem:[%s6 + $0x38] sm:$0xff]
    %v167 = vunpack.c.l.b16 %v151
    %v168 = vunpack.c.h.b16 %v151
    %v169 = vunpack.c.l.b16 %v152
    %v170 = vunpack.c.h.b16 %v152
    %v171 = vunpack.c.l.b16 %v153
    %v172 = vunpack.c.h.b16 %v153
    %v173 = vunpack.c.l.b16 %v154
    %v174 = vunpack.c.h.b16 %v154
    %v175 = vunpack.c.l.b16 %v155
    %v176 = vunpack.c.h.b16 %v155
    %v177 = vunpack.c.l.b16 %v156
    %v178 = vunpack.c.h.b16 %v156
    %v179 = vunpack.c.l.b16 %v157
    %v180 = vunpack.c.h.b16 %v157
    %v181 = vunpack.c.l.b16 %v158
    %v182 = vunpack.c.h.b16 %v158
    %v183 = vpack.c.b16 %v169, %v167
    %v184 = vpack.c.b16 %v170, %v168
    %v185 = vpack.c.b16 %v173, %v171
    %v186 = vpack.c.b16 %v174, %v172
    %v187 = vpack.c.b16 %v177, %v175
    %v188 = vpack.c.b16 %v178, %v176
    %v189 = vpack.c.b16 %v181, %v179
    %v190 = vpack.c.b16 %v182, %v180
    %v200 = vsel %vm110, %v150, 0
    %202 = vmatprep.subr.bf16.mxu0 %v184
    %203 = vmatpush1.bf16.msra.mxu0 %v183
    %204 = vmatprep.subr.bf16.mxu0 %v186
    %205 = vmatpush1.bf16.msra.mxu0 %v185
    %206 = vmatprep.subr.bf16.mxu0 %v188
    %207 = vmatpush1.bf16.msra.mxu0 %v187
    %208 = vmatprep.subr.bf16.mxu0 %v190
    %209 = vmatpush1.bf16.msra.mxu0 %v189
    %210 = vmatprep.subr.bf16.mxu0 0
    %211 = vmatpush1.bf16.msra.mxu0 0
    %212 = vmatprep.subr.bf16.mxu0 0
    %213 = vmatpush1.bf16.msra.mxu0 0
    %214 = vmatprep.subr.bf16.mxu0 0
    %215 = vmatpush1.bf16.msra.mxu0 0
    %216 = vmatprep.subr.bf16.mxu0 0
    %217 = vmatpush1.bf16.msra.mxu0 0
    %218 = vmatprep.subr.bf16.mxu0 0
    %219 = vmatpush1.bf16.msra.mxu0 0
    %220 = vmatprep.subr.bf16.mxu0 0
    %221 = vmatpush1.bf16.msra.mxu0 0
    %222 = vmatprep.subr.bf16.mxu0 0
    %223 = vmatpush1.bf16.msra.mxu0 0
    %224 = vmatprep.subr.bf16.mxu0 0
    %225 = vmatpush1.bf16.msra.mxu0 0
    %226 = vmatprep.subr.bf16.mxu0 0
    %227 = vmatpush1.bf16.msra.mxu0 0
    %228 = vmatprep.subr.bf16.mxu0 0
    %229 = vmatpush1.bf16.msra.mxu0 0
    %230 = vmatprep.subr.bf16.mxu0 0
    %231 = vmatpush1.bf16.msra.mxu0 0
    %232 = vmatprep.subr.bf16.mxu0 0
    %233 = vmatpush1.bf16.msra.mxu0 0
    %234 = vmatprep.mubr.bf16.mxu0 0
    %235 = vmatmul.mubr.bf16.gmra.mrb[0].mxu0 %v200
    %v236 = vpop.f32.mrb[0].mxu0
    %v237 = vadd.f32 0.0, %v236
    %v238 = vpop.f32.mrb[0].mxu0
    %v239 = vadd.f32 0.0, %v238
    %v240 = vpop.f32.mrb[0].mxu0
    %v241 = vadd.f32 0.0, %v240
    %v242 = vpop.f32.mrb[0].mxu0
    %v243 = vadd.f32 0.0, %v242
    %244 = vdwg.mxu0
    %v245 = vpack.c.bf16 %v241, %v237
    %v246 = vpack.c.bf16 %v243, %v239
    %v255 = vunpack.c.l.b16 %v88
    %v256 = vunpack.c.l.b16 %v89
    %v257 = vunpack.c.l.b16 %v90
    %v258 = vunpack.c.l.b16 %v91
    %v259 = vunpack.c.l.b16 %v92
    %v260 = vunpack.c.l.b16 %v93
    %v261 = vunpack.c.l.b16 %v94
    %v262 = vunpack.c.l.b16 %v95
    %v263 = vpack.c.b16 %v256, %v255
    %v264 = vpack.c.b16 %v258, %v257
    %v265 = vpack.c.b16 %v260, %v259
    %v266 = vpack.c.b16 %v262, %v261
    %267 = vrot.lane.b32.xlu0 %v263, 64
    %v268 = vpop.permute.xlu0 %267
    %269 = vrot.lane.b32.xlu0 %v264, 64
    %v270 = vpop.permute.xlu0 %269
    %271 = vrot.lane.b32.xlu0 %v265, 64
    %v272 = vpop.permute.xlu0 %271
    %273 = vrot.lane.b32.xlu0 %v266, 64
    %v274 = vpop.permute.xlu0 %273
    %v279 = vmul.bf16 %v245, %v268
    %v280 = vmul.bf16 %v245, %v270
    %v281 = vmul.bf16 %v245, %v272
    %v282 = vmul.bf16 %v245, %v274
    %v287 = vmul.bf16 %v246, %v263
    %v288 = vmul.bf16 %v246, %v264
    %v289 = vmul.bf16 %v246, %v265
    %v290 = vmul.bf16 %v246, %v266
    %295 = vrot.lane.b32.xlu0 %v279, 64
    %v296 = vpop.permute.xlu0 %295
    %297 = vrot.lane.b32.xlu0 %v280, 64
    %v298 = vpop.permute.xlu0 %297
    %299 = vrot.lane.b32.xlu0 %v281, 64
    %v300 = vpop.permute.xlu0 %299
    %301 = vrot.lane.b32.xlu0 %v282, 64
    %v302 = vpop.permute.xlu0 %301
    %v304 = vsel %vm110, %v245, 0
    %v307 = vsel %vm110, %v296, 0
    %v310 = vsel %vm110, %v298, 0
    %v313 = vsel %vm110, %v300, 0
    %v316 = vsel %vm110, %v302, 0
    %318 = vmatprep.subr.bf16.mxu0 0
    %319 = vmatpush1.bf16.xpose.msra.mxu0 %v307
    %320 = vmatprep.subr.bf16.mxu0 0
    %321 = vmatpush1.bf16.xpose.msra.mxu0 %v310
    %322 = vmatprep.subr.bf16.mxu0 0
    %323 = vmatpush1.bf16.xpose.msra.mxu0 %v313
    %324 = vmatprep.subr.bf16.mxu0 0
    %325 = vmatpush1.bf16.xpose.msra.mxu0 %v316
    %326 = vmatprep.subr.bf16.mxu0 0
    %327 = vmatpush1.bf16.xpose.msra.mxu0 0
    %328 = vmatprep.subr.bf16.mxu0 0
    %329 = vmatpush1.bf16.xpose.msra.mxu0 0
    %330 = vmatprep.subr.bf16.mxu0 0
    %331 = vmatpush1.bf16.xpose.msra.mxu0 0
    %332 = vmatprep.subr.bf16.mxu0 0
    %333 = vmatpush1.bf16.xpose.msra.mxu0 0
    %334 = vmatprep.subr.bf16.mxu0 0
    %335 = vmatpush1.bf16.xpose.msra.mxu0 0
    %336 = vmatprep.subr.bf16.mxu0 0
    %337 = vmatpush1.bf16.xpose.msra.mxu0 0
    %338 = vmatprep.subr.bf16.mxu0 0
    %339 = vmatpush1.bf16.xpose.msra.mxu0 0
    %340 = vmatprep.subr.bf16.mxu0 0
    %341 = vmatpush1.bf16.xpose.msra.mxu0 0
    %342 = vmatprep.subr.bf16.mxu0 0
    %343 = vmatpush1.bf16.xpose.msra.mxu0 0
    %344 = vmatprep.subr.bf16.mxu0 0
    %345 = vmatpush1.bf16.xpose.msra.mxu0 0
    %346 = vmatprep.subr.bf16.mxu0 0
    %347 = vmatpush1.bf16.xpose.msra.mxu0 0
    %348 = vmatprep.subr.bf16.mxu0 0
    %349 = vmatpush1.bf16.xpose.msra.mxu0 0
    %350 = vmatprep.mubr.bf16.mxu0 0
    %351 = vmatmul.mubr.bf16.gmra.mrb[0].mxu0 %v304
    %v352 = vpop.f32.mrb[0].mxu0
    %v353 = vadd.f32 %v104, %v352
    %v354 = vpop.f32.mrb[0].mxu0
    %v355 = vpop.f32.mrb[0].mxu0
    %v356 = vadd.f32 %v105, %v355
    %v357 = vpop.f32.mrb[0].mxu0
    %358 = vdwg.mxu0
    %v359 = vsel %vm110, %v353, -inf
    %360 = vmax.xlane.f32.xlu0 %v359
    %v361 = vpop.xlane.xlu0 %360
    %v362 = vsel %vm110, %v356, -inf
    %363 = vmax.xlane.f32.xlu0 %v362
    %v364 = vpop.xlane.xlu0 %363
    %v365 = vsub.f32 %v353, %v361
    %v366 = vsub.f32 %v356, %v364
    %v367 = vmul.f32 %v365, 1.442695
    %v368 = vpow.pop %v367
    %v369 = vmul.f32 %v366, 1.442695
    %v370 = vpow.pop %v369
    %v371 = vpack.c.bf16 %v370, %v368
    %v380 = vunpack.c.l.b16 %v96
    %v381 = vunpack.c.l.b16 %v97
    %v382 = vunpack.c.l.b16 %v98
    %v383 = vunpack.c.l.b16 %v99
    %v384 = vunpack.c.l.b16 %v100
    %v385 = vunpack.c.l.b16 %v101
    %v386 = vunpack.c.l.b16 %v102
    %v387 = vunpack.c.l.b16 %v103
    %v388 = vpack.c.b16 %v381, %v380
    %v389 = vpack.c.b16 %v383, %v382
    %v390 = vpack.c.b16 %v385, %v384
    %v391 = vpack.c.b16 %v387, %v386
    %v397 = vsel %vm110, %v371, 0
    %399 = vmatprep.subr.bf16.mxu0 0
    %400 = vmatpush1.bf16.msra.mxu0 %v388
    %401 = vmatprep.subr.bf16.mxu0 0
    %402 = vmatpush1.bf16.msra.mxu0 %v389
    %403 = vmatprep.subr.bf16.mxu0 0
    %404 = vmatpush1.bf16.msra.mxu0 %v390
    %405 = vmatprep.subr.bf16.mxu0 0
    %406 = vmatpush1.bf16.msra.mxu0 %v391
    %407 = vmatprep.subr.bf16.mxu0 0
    %408 = vmatpush1.bf16.msra.mxu0 0
    %409 = vmatprep.subr.bf16.mxu0 0
    %410 = vmatpush1.bf16.msra.mxu0 0
    %411 = vmatprep.subr.bf16.mxu0 0
    %412 = vmatpush1.bf16.msra.mxu0 0
    %413 = vmatprep.subr.bf16.mxu0 0
    %414 = vmatpush1.bf16.msra.mxu0 0
    %415 = vmatprep.subr.bf16.mxu0 0
    %416 = vmatpush1.bf16.msra.mxu0 0
    %417 = vmatprep.subr.bf16.mxu0 0
    %418 = vmatpush1.bf16.msra.mxu0 0
    %419 = vmatprep.subr.bf16.mxu0 0
    %420 = vmatpush1.bf16.msra.mxu0 0
    %421 = vmatprep.subr.bf16.mxu0 0
    %422 = vmatpush1.bf16.msra.mxu0 0
    %423 = vmatprep.subr.bf16.mxu0 0
    %424 = vmatpush1.bf16.msra.mxu0 0
    %425 = vmatprep.subr.bf16.mxu0 0
    %426 = vmatpush1.bf16.msra.mxu0 0
    %427 = vmatprep.subr.bf16.mxu0 0
    %428 = vmatpush1.bf16.msra.mxu0 0
    %429 = vmatprep.subr.bf16.mxu0 0
    %430 = vmatpush1.bf16.msra.mxu0 0
    %431 = vmatprep.mubr.bf16.mxu0 0
    %432 = vmatmul.mubr.bf16.gmra.mrb[0].mxu0 %v397
    %v433 = vpop.f32.mrb[0].mxu0
    %v434 = vadd.f32 1e-30, %v433
    %v435 = vpop.f32.mrb[0].mxu0
    %v436 = vpop.f32.mrb[0].mxu0
    %v437 = vadd.f32 1e-30, %v436
    %v438 = vpop.f32.mrb[0].mxu0
    %439 = vdwg.mxu0
    %v440 = vrcp.pop %v434
    %v441 = vrcp.pop %v437
    %v442 = vmul.f32 %v368, %v440
    %v443 = vmul.f32 %v370, %v441
    %v444 = vpack.c.bf16 %v443, %v442
    %v446 = vsel %vm110, %v444, 0
    %448 = vmatprep.subr.bf16.mxu0 0
    %449 = vmatpush1.bf16.msra.mxu0 %v287
    %450 = vmatprep.subr.bf16.mxu0 0
    %451 = vmatpush1.bf16.msra.mxu0 %v288
    %452 = vmatprep.subr.bf16.mxu0 0
    %453 = vmatpush1.bf16.msra.mxu0 %v289
    %454 = vmatprep.subr.bf16.mxu0 0
    %455 = vmatpush1.bf16.msra.mxu0 %v290
    %456 = vmatprep.subr.bf16.mxu0 0
    %457 = vmatpush1.bf16.msra.mxu0 0
    %458 = vmatprep.subr.bf16.mxu0 0
    %459 = vmatpush1.bf16.msra.mxu0 0
    %460 = vmatprep.subr.bf16.mxu0 0
    %461 = vmatpush1.bf16.msra.mxu0 0
    %462 = vmatprep.subr.bf16.mxu0 0
    %463 = vmatpush1.bf16.msra.mxu0 0
    %464 = vmatprep.subr.bf16.mxu0 0
    %465 = vmatpush1.bf16.msra.mxu0 0
    %466 = vmatprep.subr.bf16.mxu0 0
    %467 = vmatpush1.bf16.msra.mxu0 0
    %468 = vmatprep.subr.bf16.mxu0 0
    %469 = vmatpush1.bf16.msra.mxu0 0
    %470 = vmatprep.subr.bf16.mxu0 0
    %471 = vmatpush1.bf16.msra.mxu0 0
    %472 = vmatprep.subr.bf16.mxu0 0
    %473 = vmatpush1.bf16.msra.mxu0 0
    %474 = vmatprep.subr.bf16.mxu0 0
    %475 = vmatpush1.bf16.msra.mxu0 0
    %476 = vmatprep.subr.bf16.mxu0 0
    %477 = vmatpush1.bf16.msra.mxu0 0
    %478 = vmatprep.subr.bf16.mxu0 0
    %479 = vmatpush1.bf16.msra.mxu0 0
    %480 = vmatprep.mubr.bf16.mxu0 0
    %481 = vmatmul.mubr.bf16.gmra.mrb[0].mxu0 %v446
    %v482 = vpop.f32.mrb[0].mxu0
    %v483 = vadd.f32 0.0, %v482
    %v484 = vpop.f32.mrb[0].mxu0
    %v485 = vpop.f32.mrb[0].mxu0
    %v486 = vadd.f32 0.0, %v485
    %v487 = vpop.f32.mrb[0].mxu0
    %488 = vdwg.mxu0
    %v489 = vpack.c.bf16 %v486, %v483
    %v490 = vld [vmem:[%s7] sm:$0xf]
    %v491 = vld [vmem:[%s7 + $0x4] sm:$0xf]
    %v492 = vld [vmem:[%s7 + $0x8] sm:$0xf]
    %v493 = vld [vmem:[%s7 + $0xc] sm:$0xf]
    %v494 = vld [vmem:[%s7 + $0x10] sm:$0xf]
    %v495 = vld [vmem:[%s7 + $0x14] sm:$0xf]
    %v496 = vld [vmem:[%s7 + $0x18] sm:$0xf]
    %v497 = vld [vmem:[%s7 + $0x1c] sm:$0xf]
    %v506 = vunpack.c.l.b16 %v490
    %v507 = vunpack.c.l.b16 %v491
    %v508 = vunpack.c.l.b16 %v492
    %v509 = vunpack.c.l.b16 %v493
    %v510 = vunpack.c.l.b16 %v494
    %v511 = vunpack.c.l.b16 %v495
    %v512 = vunpack.c.l.b16 %v496
    %v513 = vunpack.c.l.b16 %v497
    %v514 = vpack.c.b16 %v507, %v506
    %v515 = vpack.c.b16 %v509, %v508
    %v516 = vpack.c.b16 %v511, %v510
    %v517 = vpack.c.b16 %v513, %v512
    %v523 = vsel %vm110, %v489, 0
    %525 = vmatprep.subr.bf16.mxu0 0
    %526 = vmatpush1.bf16.msra.mxu0 %v514
    %527 = vmatprep.subr.bf16.mxu0 0
    %528 = vmatpush1.bf16.msra.mxu0 %v515
    %529 = vmatprep.subr.bf16.mxu0 0
    %530 = vmatpush1.bf16.msra.mxu0 %v516
    %531 = vmatprep.subr.bf16.mxu0 0
    %532 = vmatpush1.bf16.msra.mxu0 %v517
    %533 = vmatprep.subr.bf16.mxu0 0
    %534 = vmatpush1.bf16.msra.mxu0 0
    %535 = vmatprep.subr.bf16.mxu0 0
    %536 = vmatpush1.bf16.msra.mxu0 0
    %537 = vmatprep.subr.bf16.mxu0 0
    %538 = vmatpush1.bf16.msra.mxu0 0
    %539 = vmatprep.subr.bf16.mxu0 0
    %540 = vmatpush1.bf16.msra.mxu0 0
    %541 = vmatprep.subr.bf16.mxu0 0
    %542 = vmatpush1.bf16.msra.mxu0 0
    %543 = vmatprep.subr.bf16.mxu0 0
    %544 = vmatpush1.bf16.msra.mxu0 0
    %545 = vmatprep.subr.bf16.mxu0 0
    %546 = vmatpush1.bf16.msra.mxu0 0
    %547 = vmatprep.subr.bf16.mxu0 0
    %548 = vmatpush1.bf16.msra.mxu0 0
    %549 = vmatprep.subr.bf16.mxu0 0
    %550 = vmatpush1.bf16.msra.mxu0 0
    %551 = vmatprep.subr.bf16.mxu0 0
    %552 = vmatpush1.bf16.msra.mxu0 0
    %553 = vmatprep.subr.bf16.mxu0 0
    %554 = vmatpush1.bf16.msra.mxu0 0
    %555 = vmatprep.subr.bf16.mxu0 0
    %556 = vmatpush1.bf16.msra.mxu0 0
    %557 = vmatprep.mubr.bf16.mxu0 0
    %558 = vmatmul.mubr.bf16.gmra.mrb[0].mxu0 %v523
    %v559 = vpop.f32.mrb[0].mxu0
    %v560 = vadd.f32 0.0, %v559
    %v561 = vpop.f32.mrb[0].mxu0
    %v562 = vpop.f32.mrb[0].mxu0
    %v563 = vadd.f32 0.0, %v562
    %v564 = vpop.f32.mrb[0].mxu0
    %565 = vdwg.mxu0
    %v566 = vadd.f32 %v106, %v560
    %v567 = vadd.f32 %v107, %v563
    %v568 = vld [vmem:[%s8] sm:$0x1]
    %v569 = vlaneseq
    %v570 = vshrl.u32 %v569, 7
    %v571 = vsub.s32 0, %v570
    %v572 = vrot.slane %v568, %v571
    %v573 = vadd.f32 %v566, %v572
    %v574 = vadd.f32 %v567, %v572
    %v575 = vld [vmem:[%s9] sm:$0x1]
    %v576 = vld [vmem:[%s10] sm:$0x1]
    %v577 = vsel %vm110, %v573, 0.0
    %578 = vadd.xlane.f32.xlu0 %v577
    %v579 = vpop.xlane.xlu0 %578
    %v580 = vsel %vm110, %v574, 0.0
    %581 = vadd.xlane.f32.xlu0 %v580
    %v582 = vpop.xlane.xlu0 %581
    %v583 = vmul.f32 %v579, %v117
    %v584 = vmul.f32 %v582, %v117
    %v585 = vsub.f32 %v573, %v583
    %v586 = vsub.f32 %v574, %v584
    %v587 = vmul.f32 %v585, %v585
    %v588 = vmul.f32 %v586, %v586
    %v589 = vsel %vm110, %v587, 0.0
    %590 = vadd.xlane.f32.xlu0 %v589
    %v591 = vpop.xlane.xlu0 %590
    %v592 = vsel %vm110, %v588, 0.0
    %593 = vadd.xlane.f32.xlu0 %v592
    %v594 = vpop.xlane.xlu0 %593
    %v595 = vmul.f32 %v591, %v117
    %v596 = vmul.f32 %v594, %v117
    %v597 = vadd.f32 %v595, 1e-05
    %v598 = vadd.f32 %v596, 1e-05
    %v599 = vrsqrt.pop %v597
    %v600 = vrsqrt.pop %v598
    %v601 = vmul.f32 %v585, %v599
    %v602 = vmul.f32 %v586, %v600
    %v603 = vlaneseq
    %v604 = vshrl.u32 %v603, 7
    %v605 = vsub.s32 0, %v604
    %v606 = vrot.slane %v575, %v605
    %v607 = vmul.f32 %v601, %v606
    %v608 = vmul.f32 %v602, %v606
    %v609 = vlaneseq
    %v610 = vshrl.u32 %v609, 7
    %v611 = vsub.s32 0, %v610
    %v612 = vrot.slane %v576, %v611
    %v613 = vadd.f32 %v607, %v612
    %v614 = vadd.f32 %v608, %v612
    %v615 = vpack.c.bf16 %v614, %v613
    %v616 = vld [vmem:[%s11] sm:$0xff]
    %v617 = vld [vmem:[%s11 + $0x8] sm:$0xff]
    %v618 = vld [vmem:[%s11 + $0x10] sm:$0xff]
    %v619 = vld [vmem:[%s11 + $0x18] sm:$0xff]
    %v620 = vld [vmem:[%s11 + $0x20] sm:$0xff]
    %v621 = vld [vmem:[%s11 + $0x28] sm:$0xff]
    %v622 = vld [vmem:[%s11 + $0x30] sm:$0xff]
    %v623 = vld [vmem:[%s11 + $0x38] sm:$0xff]
    %v624 = vld [vmem:[%s12] ss:$4 sm:$0x3]
    %v626 = vlaneseq
    %v627 = vshrl.u32 %v626, 7
    %v628 = vsub.s32 0, %v627
    %v629 = vrot.slane %v624, %v628
    %v630 = vlaneseq
    %v631 = vshrl.u32 %v630, 7
    %v632 = vsub.s32 1, %v631
    %v633 = vrot.slane %v624, %v632
    %v644 = vunpack.c.l.b16 %v616
    %v645 = vunpack.c.h.b16 %v616
    %v646 = vunpack.c.l.b16 %v617
    %v647 = vunpack.c.h.b16 %v617
    %v648 = vunpack.c.l.b16 %v618
    %v649 = vunpack.c.h.b16 %v618
    %v650 = vunpack.c.l.b16 %v619
    %v651 = vunpack.c.h.b16 %v619
    %v652 = vunpack.c.l.b16 %v620
    %v653 = vunpack.c.h.b16 %v620
    %v654 = vunpack.c.l.b16 %v621
    %v655 = vunpack.c.h.b16 %v621
    %v656 = vunpack.c.l.b16 %v622
    %v657 = vunpack.c.h.b16 %v622
    %v658 = vunpack.c.l.b16 %v623
    %v659 = vunpack.c.h.b16 %v623
    %v660 = vpack.c.b16 %v646, %v644
    %v661 = vpack.c.b16 %v647, %v645
    %v662 = vpack.c.b16 %v650, %v648
    %v663 = vpack.c.b16 %v651, %v649
    %v664 = vpack.c.b16 %v654, %v652
    %v665 = vpack.c.b16 %v655, %v653
    %v666 = vpack.c.b16 %v658, %v656
    %v667 = vpack.c.b16 %v659, %v657
    %v677 = vsel %vm110, %v615, 0
    %679 = vmatprep.subr.bf16.mxu0 %v661
    %680 = vmatpush1.bf16.msra.mxu0 %v660
    %681 = vmatprep.subr.bf16.mxu0 %v663
    %682 = vmatpush1.bf16.msra.mxu0 %v662
    %683 = vmatprep.subr.bf16.mxu0 %v665
    %684 = vmatpush1.bf16.msra.mxu0 %v664
    %685 = vmatprep.subr.bf16.mxu0 %v667
    %686 = vmatpush1.bf16.msra.mxu0 %v666
    %687 = vmatprep.subr.bf16.mxu0 0
    %688 = vmatpush1.bf16.msra.mxu0 0
    %689 = vmatprep.subr.bf16.mxu0 0
    %690 = vmatpush1.bf16.msra.mxu0 0
    %691 = vmatprep.subr.bf16.mxu0 0
    %692 = vmatpush1.bf16.msra.mxu0 0
    %693 = vmatprep.subr.bf16.mxu0 0
    %694 = vmatpush1.bf16.msra.mxu0 0
    %695 = vmatprep.subr.bf16.mxu0 0
    %696 = vmatpush1.bf16.msra.mxu0 0
    %697 = vmatprep.subr.bf16.mxu0 0
    %698 = vmatpush1.bf16.msra.mxu0 0
    %699 = vmatprep.subr.bf16.mxu0 0
    %700 = vmatpush1.bf16.msra.mxu0 0
    %701 = vmatprep.subr.bf16.mxu0 0
    %702 = vmatpush1.bf16.msra.mxu0 0
    %703 = vmatprep.subr.bf16.mxu0 0
    %704 = vmatpush1.bf16.msra.mxu0 0
    %705 = vmatprep.subr.bf16.mxu0 0
    %706 = vmatpush1.bf16.msra.mxu0 0
    %707 = vmatprep.subr.bf16.mxu0 0
    %708 = vmatpush1.bf16.msra.mxu0 0
    %709 = vmatprep.subr.bf16.mxu0 0
    %710 = vmatpush1.bf16.msra.mxu0 0
    %711 = vmatprep.mubr.bf16.mxu0 0
    %712 = vmatmul.mubr.bf16.gmra.mrb[0].mxu0 %v677
    %v713 = vpop.f32.mrb[0].mxu0
    %v714 = vadd.f32 %v629, %v713
    %v715 = vpop.f32.mrb[0].mxu0
    %v716 = vadd.f32 %v633, %v715
    %v717 = vpop.f32.mrb[0].mxu0
    %v718 = vadd.f32 %v629, %v717
    %v719 = vpop.f32.mrb[0].mxu0
    %v720 = vadd.f32 %v633, %v719
    %721 = vdwg.mxu0
    %v722 = vmax.f32 %v714, 0.0
    %v723 = vmax.f32 %v716, 0.0
    %v724 = vmax.f32 %v718, 0.0
    %v725 = vmax.f32 %v720, 0.0
    %v726 = vpack.c.bf16 %v724, %v722
    %v727 = vpack.c.bf16 %v725, %v723
    %v728 = vld [vmem:[%s13] sm:$0xf]
    %v729 = vld [vmem:[%s13 + $0x4] sm:$0xf]
    %v730 = vld [vmem:[%s13 + $0x8] sm:$0xf]
    %v731 = vld [vmem:[%s13 + $0xc] sm:$0xf]
    %v732 = vld [vmem:[%s13 + $0x10] sm:$0xf]
    %v733 = vld [vmem:[%s13 + $0x14] sm:$0xf]
    %v734 = vld [vmem:[%s13 + $0x18] sm:$0xf]
    %v735 = vld [vmem:[%s13 + $0x1c] sm:$0xf]
    %v736 = vld [vmem:[%s13 + $0x20] sm:$0xf]
    %v737 = vld [vmem:[%s13 + $0x24] sm:$0xf]
    %v738 = vld [vmem:[%s13 + $0x28] sm:$0xf]
    %v739 = vld [vmem:[%s13 + $0x2c] sm:$0xf]
    %v740 = vld [vmem:[%s13 + $0x30] sm:$0xf]
    %v741 = vld [vmem:[%s13 + $0x34] sm:$0xf]
    %v742 = vld [vmem:[%s13 + $0x38] sm:$0xf]
    %v743 = vld [vmem:[%s13 + $0x3c] sm:$0xf]
    %v744 = vld [vmem:[%s13 + $0x40] sm:$0xf]
    %v745 = vld [vmem:[%s13 + $0x44] sm:$0xf]
    %v746 = vld [vmem:[%s13 + $0x48] sm:$0xf]
    %v747 = vld [vmem:[%s13 + $0x4c] sm:$0xf]
    %v748 = vld [vmem:[%s13 + $0x50] sm:$0xf]
    %v749 = vld [vmem:[%s13 + $0x54] sm:$0xf]
    %v750 = vld [vmem:[%s13 + $0x58] sm:$0xf]
    %v751 = vld [vmem:[%s13 + $0x5c] sm:$0xf]
    %v752 = vld [vmem:[%s13 + $0x60] sm:$0xf]
    %v753 = vld [vmem:[%s13 + $0x64] sm:$0xf]
    %v754 = vld [vmem:[%s13 + $0x68] sm:$0xf]
    %v755 = vld [vmem:[%s13 + $0x6c] sm:$0xf]
    %v756 = vld [vmem:[%s13 + $0x70] sm:$0xf]
    %v757 = vld [vmem:[%s13 + $0x74] sm:$0xf]
    %v758 = vld [vmem:[%s13 + $0x78] sm:$0xf]
    %v759 = vld [vmem:[%s13 + $0x7c] sm:$0xf]
    %v792 = vunpack.c.l.b16 %v728
    %v793 = vunpack.c.l.b16 %v729
    %v794 = vunpack.c.l.b16 %v730
    %v795 = vunpack.c.l.b16 %v731
    %v796 = vunpack.c.l.b16 %v732
    %v797 = vunpack.c.l.b16 %v733
    %v798 = vunpack.c.l.b16 %v734
    %v799 = vunpack.c.l.b16 %v735
    %v800 = vunpack.c.l.b16 %v736
    %v801 = vunpack.c.l.b16 %v737
    %v802 = vunpack.c.l.b16 %v738
    %v803 = vunpack.c.l.b16 %v739
    %v804 = vunpack.c.l.b16 %v740
    %v805 = vunpack.c.l.b16 %v741
    %v806 = vunpack.c.l.b16 %v742
    %v807 = vunpack.c.l.b16 %v743
    %v808 = vunpack.c.l.b16 %v744
    %v809 = vunpack.c.l.b16 %v745
    %v810 = vunpack.c.l.b16 %v746
    %v811 = vunpack.c.l.b16 %v747
    %v812 = vunpack.c.l.b16 %v748
    %v813 = vunpack.c.l.b16 %v749
    %v814 = vunpack.c.l.b16 %v750
    %v815 = vunpack.c.l.b16 %v751
    %v816 = vunpack.c.l.b16 %v752
    %v817 = vunpack.c.l.b16 %v753
    %v818 = vunpack.c.l.b16 %v754
    %v819 = vunpack.c.l.b16 %v755
    %v820 = vunpack.c.l.b16 %v756
    %v821 = vunpack.c.l.b16 %v757
    %v822 = vunpack.c.l.b16 %v758
    %v823 = vunpack.c.l.b16 %v759
    %v824 = vpack.c.b16 %v793, %v792
    %v825 = vpack.c.b16 %v795, %v794
    %v826 = vpack.c.b16 %v797, %v796
    %v827 = vpack.c.b16 %v799, %v798
    %v828 = vpack.c.b16 %v801, %v800
    %v829 = vpack.c.b16 %v803, %v802
    %v830 = vpack.c.b16 %v805, %v804
    %v831 = vpack.c.b16 %v807, %v806
    %v832 = vpack.c.b16 %v809, %v808
    %v833 = vpack.c.b16 %v811, %v810
    %v834 = vpack.c.b16 %v813, %v812
    %v835 = vpack.c.b16 %v815, %v814
    %v836 = vpack.c.b16 %v817, %v816
    %v837 = vpack.c.b16 %v819, %v818
    %v838 = vpack.c.b16 %v821, %v820
    %v839 = vpack.c.b16 %v823, %v822
    %856 = vmatprep.subr.bf16.mxu0 0
    %857 = vmatpush1.bf16.msra.mxu0 %v824
    %858 = vmatprep.subr.bf16.mxu0 0
    %859 = vmatpush1.bf16.msra.mxu0 %v825
    %860 = vmatprep.subr.bf16.mxu0 0
    %861 = vmatpush1.bf16.msra.mxu0 %v826
    %862 = vmatprep.subr.bf16.mxu0 0
    %863 = vmatpush1.bf16.msra.mxu0 %v827
    %864 = vmatprep.subr.bf16.mxu0 0
    %865 = vmatpush1.bf16.msra.mxu0 %v828
    %866 = vmatprep.subr.bf16.mxu0 0
    %867 = vmatpush1.bf16.msra.mxu0 %v829
    %868 = vmatprep.subr.bf16.mxu0 0
    %869 = vmatpush1.bf16.msra.mxu0 %v830
    %870 = vmatprep.subr.bf16.mxu0 0
    %871 = vmatpush1.bf16.msra.mxu0 %v831
    %872 = vmatprep.subr.bf16.mxu0 0
    %873 = vmatpush1.bf16.msra.mxu0 %v832
    %874 = vmatprep.subr.bf16.mxu0 0
    %875 = vmatpush1.bf16.msra.mxu0 %v833
    %876 = vmatprep.subr.bf16.mxu0 0
    %877 = vmatpush1.bf16.msra.mxu0 %v834
    %878 = vmatprep.subr.bf16.mxu0 0
    %879 = vmatpush1.bf16.msra.mxu0 %v835
    %880 = vmatprep.subr.bf16.mxu0 0
    %881 = vmatpush1.bf16.msra.mxu0 %v836
    %882 = vmatprep.subr.bf16.mxu0 0
    %883 = vmatpush1.bf16.msra.mxu0 %v837
    %884 = vmatprep.subr.bf16.mxu0 0
    %885 = vmatpush1.bf16.msra.mxu0 %v838
    %886 = vmatprep.subr.bf16.mxu0 0
    %887 = vmatpush1.bf16.msra.mxu0 %v839
    %888 = vmatprep.mubr.bf16.mxu0 %v727
    %889 = vmatmul.mubr.bf16.gmra.mrb[0].mxu0 %v726
    %v890 = vpop.f32.mrb[0].mxu0
    %v891 = vadd.f32 0.0, %v890
    %v892 = vpop.f32.mrb[0].mxu0
    %v893 = vpop.f32.mrb[0].mxu0
    %v894 = vadd.f32 0.0, %v893
    %v895 = vpop.f32.mrb[0].mxu0
    %896 = vdwg.mxu0
    %v897 = vadd.f32 %v573, %v891
    %v898 = vadd.f32 %v574, %v894
    %v899 = vld [vmem:[%s14] sm:$0x1]
    %v900 = vlaneseq
    %v901 = vshrl.u32 %v900, 7
    %v902 = vsub.s32 0, %v901
    %v903 = vrot.slane %v899, %v902
    %v904 = vadd.f32 %v897, %v903
    %v905 = vadd.f32 %v898, %v903
    %v906 = vld [vmem:[#allocation2 + $0x1] sm:$0x1]
    %v907 = vld [vmem:[#allocation5 + $0x1] sm:$0x1]
    %v908 = vsel %vm110, %v904, 0.0
    %909 = vadd.xlane.f32.xlu0 %v908
    %v910 = vpop.xlane.xlu0 %909
    %v911 = vsel %vm110, %v905, 0.0
    %912 = vadd.xlane.f32.xlu0 %v911
    %v913 = vpop.xlane.xlu0 %912
    %v914 = vmul.f32 %v910, %v117
    %v915 = vmul.f32 %v913, %v117
    %v916 = vsub.f32 %v904, %v914
    %v917 = vsub.f32 %v905, %v915
    %v918 = vmul.f32 %v916, %v916
    %v919 = vmul.f32 %v917, %v917
    %v920 = vsel %vm110, %v918, 0.0
    %921 = vadd.xlane.f32.xlu0 %v920
    %v922 = vpop.xlane.xlu0 %921
    %v923 = vsel %vm110, %v919, 0.0
    %924 = vadd.xlane.f32.xlu0 %v923
    %v925 = vpop.xlane.xlu0 %924
    %v926 = vmul.f32 %v922, %v117
    %v927 = vmul.f32 %v925, %v117
    %v928 = vadd.f32 %v926, 1e-05
    %v929 = vadd.f32 %v927, 1e-05
    %v930 = vrsqrt.pop %v928
    %v931 = vrsqrt.pop %v929
    %v932 = vmul.f32 %v916, %v930
    %v933 = vmul.f32 %v917, %v931
    %v934 = vlaneseq
    %v935 = vshrl.u32 %v934, 7
    %v936 = vsub.s32 0, %v935
    %v937 = vrot.slane %v906, %v936
    %v938 = vmul.f32 %v932, %v937
    %v939 = vmul.f32 %v933, %v937
    %v940 = vlaneseq
    %v941 = vshrl.u32 %v940, 7
    %v942 = vsub.s32 0, %v941
    %v943 = vrot.slane %v907, %v942
    %v944 = vadd.f32 %v938, %v943
    %v945 = vadd.f32 %v939, %v943
    %v946 = vpack.c.bf16 %v945, %v944
    %s947 = scalar_lea.vmem %s6, 64
    %v948 = vld [vmem:[%s947] sm:$0xff]
    %v949 = vld [vmem:[%s947 + $0x8] sm:$0xff]
    %v950 = vld [vmem:[%s947 + $0x10] sm:$0xff]
    %v951 = vld [vmem:[%s947 + $0x18] sm:$0xff]
    %v952 = vld [vmem:[%s947 + $0x20] sm:$0xff]
    %v953 = vld [vmem:[%s947 + $0x28] sm:$0xff]
    %v954 = vld [vmem:[%s947 + $0x30] sm:$0xff]
    %v955 = vld [vmem:[%s947 + $0x38] sm:$0xff]
    %v964 = vunpack.c.l.b16 %v948
    %v965 = vunpack.c.h.b16 %v948
    %v966 = vunpack.c.l.b16 %v949
    %v967 = vunpack.c.h.b16 %v949
    %v968 = vunpack.c.l.b16 %v950
    %v969 = vunpack.c.h.b16 %v950
    %v970 = vunpack.c.l.b16 %v951
    %v971 = vunpack.c.h.b16 %v951
    %v972 = vunpack.c.l.b16 %v952
    %v973 = vunpack.c.h.b16 %v952
    %v974 = vunpack.c.l.b16 %v953
    %v975 = vunpack.c.h.b16 %v953
    %v976 = vunpack.c.l.b16 %v954
    %v977 = vunpack.c.h.b16 %v954
    %v978 = vunpack.c.l.b16 %v955
    %v979 = vunpack.c.h.b16 %v955
    %v980 = vpack.c.b16 %v966, %v964
    %v981 = vpack.c.b16 %v967, %v965
    %v982 = vpack.c.b16 %v970, %v968
    %v983 = vpack.c.b16 %v971, %v969
    %v984 = vpack.c.b16 %v974, %v972
    %v985 = vpack.c.b16 %v975, %v973
    %v986 = vpack.c.b16 %v978, %v976
    %v987 = vpack.c.b16 %v979, %v977
    %v997 = vsel %vm110, %v946, 0
    %999 = vmatprep.subr.bf16.mxu0 %v981
    %1000 = vmatpush1.bf16.msra.mxu0 %v980
    %1001 = vmatprep.subr.bf16.mxu0 %v983
    %1002 = vmatpush1.bf16.msra.mxu0 %v982
    %1003 = vmatprep.subr.bf16.mxu0 %v985
    %1004 = vmatpush1.bf16.msra.mxu0 %v984
    %1005 = vmatprep.subr.bf16.mxu0 %v987
    %1006 = vmatpush1.bf16.msra.mxu0 %v986
    %1007 = vmatprep.subr.bf16.mxu0 0
    %1008 = vmatpush1.bf16.msra.mxu0 0
    %1009 = vmatprep.subr.bf16.mxu0 0
    %1010 = vmatpush1.bf16.msra.mxu0 0
    %1011 = vmatprep.subr.bf16.mxu0 0
    %1012 = vmatpush1.bf16.msra.mxu0 0
    %1013 = vmatprep.subr.bf16.mxu0 0
    %1014 = vmatpush1.bf16.msra.mxu0 0
    %1015 = vmatprep.subr.bf16.mxu0 0
    %1016 = vmatpush1.bf16.msra.mxu0 0
    %1017 = vmatprep.subr.bf16.mxu0 0
    %1018 = vmatpush1.bf16.msra.mxu0 0
    %1019 = vmatprep.subr.bf16.mxu0 0
    %1020 = vmatpush1.bf16.msra.mxu0 0
    %1021 = vmatprep.subr.bf16.mxu0 0
    %1022 = vmatpush1.bf16.msra.mxu0 0
    %1023 = vmatprep.subr.bf16.mxu0 0
    %1024 = vmatpush1.bf16.msra.mxu0 0
    %1025 = vmatprep.subr.bf16.mxu0 0
    %1026 = vmatpush1.bf16.msra.mxu0 0
    %1027 = vmatprep.subr.bf16.mxu0 0
    %1028 = vmatpush1.bf16.msra.mxu0 0
    %1029 = vmatprep.subr.bf16.mxu0 0
    %1030 = vmatpush1.bf16.msra.mxu0 0
    %1031 = vmatprep.mubr.bf16.mxu0 0
    %1032 = vmatmul.mubr.bf16.gmra.mrb[0].mxu0 %v997
    %v1033 = vpop.f32.mrb[0].mxu0
    %v1034 = vadd.f32 0.0, %v1033
    %v1035 = vpop.f32.mrb[0].mxu0
    %v1036 = vadd.f32 0.0, %v1035
    %v1037 = vpop.f32.mrb[0].mxu0
    %v1038 = vadd.f32 0.0, %v1037
    %v1039 = vpop.f32.mrb[0].mxu0
    %v1040 = vadd.f32 0.0, %v1039
    %1041 = vdwg.mxu0
    %v1042 = vpack.c.bf16 %v1038, %v1034
    %v1043 = vpack.c.bf16 %v1040, %v1036
    %v1044 = vmul.bf16 %v1042, %v268
    %v1045 = vmul.bf16 %v1042, %v270
    %v1046 = vmul.bf16 %v1042, %v272
    %v1047 = vmul.bf16 %v1042, %v274
    %v1048 = vmul.bf16 %v1043, %v263
    %v1049 = vmul.bf16 %v1043, %v264
    %v1050 = vmul.bf16 %v1043, %v265
    %v1051 = vmul.bf16 %v1043, %v266
    %1056 = vrot.lane.b32.xlu0 %v1044, 64
    %v1057 = vpop.permute.xlu0 %1056
    %1058 = vrot.lane.b32.xlu0 %v1045, 64
    %v1059 = vpop.permute.xlu0 %1058
    %1060 = vrot.lane.b32.xlu0 %v1046, 64
    %v1061 = vpop.permute.xlu0 %1060
    %1062 = vrot.lane.b32.xlu0 %v1047, 64
    %v1063 = vpop.permute.xlu0 %1062
    %v1065 = vsel %vm110, %v1042, 0
    %v1068 = vsel %vm110, %v1057, 0
    %v1071 = vsel %vm110, %v1059, 0
    %v1074 = vsel %vm110, %v1061, 0
    %v1077 = vsel %vm110, %v1063, 0
    %1079 = vmatprep.subr.bf16.mxu0 0
    %1080 = vmatpush1.bf16.xpose.msra.mxu0 %v1068
    %1081 = vmatprep.subr.bf16.mxu0 0
    %1082 = vmatpush1.bf16.xpose.msra.mxu0 %v1071
    %1083 = vmatprep.subr.bf16.mxu0 0
    %1084 = vmatpush1.bf16.xpose.msra.mxu0 %v1074
    %1085 = vmatprep.subr.bf16.mxu0 0
    %1086 = vmatpush1.bf16.xpose.msra.mxu0 %v1077
    %1087 = vmatprep.subr.bf16.mxu0 0
    %1088 = vmatpush1.bf16.xpose.msra.mxu0 0
    %1089 = vmatprep.subr.bf16.mxu0 0
    %1090 = vmatpush1.bf16.xpose.msra.mxu0 0
    %1091 = vmatprep.subr.bf16.mxu0 0
    %1092 = vmatpush1.bf16.xpose.msra.mxu0 0
    %1093 = vmatprep.subr.bf16.mxu0 0
    %1094 = vmatpush1.bf16.xpose.msra.mxu0 0
    %1095 = vmatprep.subr.bf16.mxu0 0
    %1096 = vmatpush1.bf16.xpose.msra.mxu0 0
    %1097 = vmatprep.subr.bf16.mxu0 0
    %1098 = vmatpush1.bf16.xpose.msra.mxu0 0
    %1099 = vmatprep.subr.bf16.mxu0 0
    %1100 = vmatpush1.bf16.xpose.msra.mxu0 0
    %1101 = vmatprep.subr.bf16.mxu0 0
    %1102 = vmatpush1.bf16.xpose.msra.mxu0 0
    %1103 = vmatprep.subr.bf16.mxu0 0
    %1104 = vmatpush1.bf16.xpose.msra.mxu0 0
    %1105 = vmatprep.subr.bf16.mxu0 0
    %1106 = vmatpush1.bf16.xpose.msra.mxu0 0
    %1107 = vmatprep.subr.bf16.mxu0 0
    %1108 = vmatpush1.bf16.xpose.msra.mxu0 0
    %1109 = vmatprep.subr.bf16.mxu0 0
    %1110 = vmatpush1.bf16.xpose.msra.mxu0 0
    %1111 = vmatprep.mubr.bf16.mxu0 0
    %1112 = vmatmul.mubr.bf16.gmra.mrb[0].mxu0 %v1065
    %v1113 = vpop.f32.mrb[0].mxu0
    %v1114 = vadd.f32 %v104, %v1113
    %v1115 = vpop.f32.mrb[0].mxu0
    %v1116 = vpop.f32.mrb[0].mxu0
    %v1117 = vadd.f32 %v105, %v1116
    %v1118 = vpop.f32.mrb[0].mxu0
    %1119 = vdwg.mxu0
    %v1120 = vsel %vm110, %v1114, -inf
    %1121 = vmax.xlane.f32.xlu0 %v1120
    %v1122 = vpop.xlane.xlu0 %1121
    %v1123 = vsel %vm110, %v1117, -inf
    %1124 = vmax.xlane.f32.xlu0 %v1123
    %v1125 = vpop.xlane.xlu0 %1124
    %v1126 = vsub.f32 %v1114, %v1122
    %v1127 = vsub.f32 %v1117, %v1125
    %v1128 = vmul.f32 %v1126, 1.442695
    %v1129 = vpow.pop %v1128
    %v1130 = vmul.f32 %v1127, 1.442695
    %v1131 = vpow.pop %v1130
    %v1132 = vpack.c.bf16 %v1131, %v1129
    %v1134 = vsel %vm110, %v1132, 0
    %1136 = vmatprep.subr.bf16.mxu0 0
    %1137 = vmatpush1.bf16.msra.mxu0 %v388
    %1138 = vmatprep.subr.bf16.mxu0 0
    %1139 = vmatpush1.bf16.msra.mxu0 %v389
    %1140 = vmatprep.subr.bf16.mxu0 0
    %1141 = vmatpush1.bf16.msra.mxu0 %v390
    %1142 = vmatprep.subr.bf16.mxu0 0
    %1143 = vmatpush1.bf16.msra.mxu0 %v391
    %1144 = vmatprep.subr.bf16.mxu0 0
    %1145 = vmatpush1.bf16.msra.mxu0 0
    %1146 = vmatprep.subr.bf16.mxu0 0
    %1147 = vmatpush1.bf16.msra.mxu0 0
    %1148 = vmatprep.subr.bf16.mxu0 0
    %1149 = vmatpush1.bf16.msra.mxu0 0
    %1150 = vmatprep.subr.bf16.mxu0 0
    %1151 = vmatpush1.bf16.msra.mxu0 0
    %1152 = vmatprep.subr.bf16.mxu0 0
    %1153 = vmatpush1.bf16.msra.mxu0 0
    %1154 = vmatprep.subr.bf16.mxu0 0
    %1155 = vmatpush1.bf16.msra.mxu0 0
    %1156 = vmatprep.subr.bf16.mxu0 0
    %1157 = vmatpush1.bf16.msra.mxu0 0
    %1158 = vmatprep.subr.bf16.mxu0 0
    %1159 = vmatpush1.bf16.msra.mxu0 0
    %1160 = vmatprep.subr.bf16.mxu0 0
    %1161 = vmatpush1.bf16.msra.mxu0 0
    %1162 = vmatprep.subr.bf16.mxu0 0
    %1163 = vmatpush1.bf16.msra.mxu0 0
    %1164 = vmatprep.subr.bf16.mxu0 0
    %1165 = vmatpush1.bf16.msra.mxu0 0
    %1166 = vmatprep.subr.bf16.mxu0 0
    %1167 = vmatpush1.bf16.msra.mxu0 0
    %1168 = vmatprep.mubr.bf16.mxu0 0
    %1169 = vmatmul.mubr.bf16.gmra.mrb[0].mxu0 %v1134
    %v1170 = vpop.f32.mrb[0].mxu0
    %v1171 = vadd.f32 1e-30, %v1170
    %v1172 = vpop.f32.mrb[0].mxu0
    %v1173 = vpop.f32.mrb[0].mxu0
    %v1174 = vadd.f32 1e-30, %v1173
    %v1175 = vpop.f32.mrb[0].mxu0
    %1176 = vdwg.mxu0
    %v1177 = vrcp.pop %v1171
    %v1178 = vrcp.pop %v1174
    %v1179 = vmul.f32 %v1129, %v1177
    %v1180 = vmul.f32 %v1131, %v1178
    %v1181 = vpack.c.bf16 %v1180, %v1179
    %v1183 = vsel %vm110, %v1181, 0
    %1185 = vmatprep.subr.bf16.mxu0 0
    %1186 = vmatpush1.bf16.msra.mxu0 %v1048
    %1187 = vmatprep.subr.bf16.mxu0 0
    %1188 = vmatpush1.bf16.msra.mxu0 %v1049
    %1189 = vmatprep.subr.bf16.mxu0 0
    %1190 = vmatpush1.bf16.msra.mxu0 %v1050
    %1191 = vmatprep.subr.bf16.mxu0 0
    %1192 = vmatpush1.bf16.msra.mxu0 %v1051
    %1193 = vmatprep.subr.bf16.mxu0 0
    %1194 = vmatpush1.bf16.msra.mxu0 0
    %1195 = vmatprep.subr.bf16.mxu0 0
    %1196 = vmatpush1.bf16.msra.mxu0 0
    %1197 = vmatprep.subr.bf16.mxu0 0
    %1198 = vmatpush1.bf16.msra.mxu0 0
    %1199 = vmatprep.subr.bf16.mxu0 0
    %1200 = vmatpush1.bf16.msra.mxu0 0
    %1201 = vmatprep.subr.bf16.mxu0 0
    %1202 = vmatpush1.bf16.msra.mxu0 0
    %1203 = vmatprep.subr.bf16.mxu0 0
    %1204 = vmatpush1.bf16.msra.mxu0 0
    %1205 = vmatprep.subr.bf16.mxu0 0
    %1206 = vmatpush1.bf16.msra.mxu0 0
    %1207 = vmatprep.subr.bf16.mxu0 0
    %1208 = vmatpush1.bf16.msra.mxu0 0
    %1209 = vmatprep.subr.bf16.mxu0 0
    %1210 = vmatpush1.bf16.msra.mxu0 0
    %1211 = vmatprep.subr.bf16.mxu0 0
    %1212 = vmatpush1.bf16.msra.mxu0 0
    %1213 = vmatprep.subr.bf16.mxu0 0
    %1214 = vmatpush1.bf16.msra.mxu0 0
    %1215 = vmatprep.subr.bf16.mxu0 0
    %1216 = vmatpush1.bf16.msra.mxu0 0
    %1217 = vmatprep.mubr.bf16.mxu0 0
    %1218 = vmatmul.mubr.bf16.gmra.mrb[0].mxu0 %v1183
    %v1219 = vpop.f32.mrb[0].mxu0
    %v1220 = vadd.f32 0.0, %v1219
    %v1221 = vpop.f32.mrb[0].mxu0
    %v1222 = vpop.f32.mrb[0].mxu0
    %v1223 = vadd.f32 0.0, %v1222
    %v1224 = vpop.f32.mrb[0].mxu0
    %1225 = vdwg.mxu0
    %v1226 = vpack.c.bf16 %v1223, %v1220
    %s1227 = scalar_lea.vmem %s7, 32
    %v1228 = vld [vmem:[%s1227] sm:$0xf]
    %v1229 = vld [vmem:[%s1227 + $0x4] sm:$0xf]
    %v1230 = vld [vmem:[%s1227 + $0x8] sm:$0xf]
    %v1231 = vld [vmem:[%s1227 + $0xc] sm:$0xf]
    %v1232 = vld [vmem:[%s1227 + $0x10] sm:$0xf]
    %v1233 = vld [vmem:[%s1227 + $0x14] sm:$0xf]
    %v1234 = vld [vmem:[%s1227 + $0x18] sm:$0xf]
    %v1235 = vld [vmem:[%s1227 + $0x1c] sm:$0xf]
    %v1244 = vunpack.c.l.b16 %v1228
    %v1245 = vunpack.c.l.b16 %v1229
    %v1246 = vunpack.c.l.b16 %v1230
    %v1247 = vunpack.c.l.b16 %v1231
    %v1248 = vunpack.c.l.b16 %v1232
    %v1249 = vunpack.c.l.b16 %v1233
    %v1250 = vunpack.c.l.b16 %v1234
    %v1251 = vunpack.c.l.b16 %v1235
    %v1252 = vpack.c.b16 %v1245, %v1244
    %v1253 = vpack.c.b16 %v1247, %v1246
    %v1254 = vpack.c.b16 %v1249, %v1248
    %v1255 = vpack.c.b16 %v1251, %v1250
    %v1261 = vsel %vm110, %v1226, 0
    %1263 = vmatprep.subr.bf16.mxu0 0
    %1264 = vmatpush1.bf16.msra.mxu0 %v1252
    %1265 = vmatprep.subr.bf16.mxu0 0
    %1266 = vmatpush1.bf16.msra.mxu0 %v1253
    %1267 = vmatprep.subr.bf16.mxu0 0
    %1268 = vmatpush1.bf16.msra.mxu0 %v1254
    %1269 = vmatprep.subr.bf16.mxu0 0
    %1270 = vmatpush1.bf16.msra.mxu0 %v1255
    %1271 = vmatprep.subr.bf16.mxu0 0
    %1272 = vmatpush1.bf16.msra.mxu0 0
    %1273 = vmatprep.subr.bf16.mxu0 0
    %1274 = vmatpush1.bf16.msra.mxu0 0
    %1275 = vmatprep.subr.bf16.mxu0 0
    %1276 = vmatpush1.bf16.msra.mxu0 0
    %1277 = vmatprep.subr.bf16.mxu0 0
    %1278 = vmatpush1.bf16.msra.mxu0 0
    %1279 = vmatprep.subr.bf16.mxu0 0
    %1280 = vmatpush1.bf16.msra.mxu0 0
    %1281 = vmatprep.subr.bf16.mxu0 0
    %1282 = vmatpush1.bf16.msra.mxu0 0
    %1283 = vmatprep.subr.bf16.mxu0 0
    %1284 = vmatpush1.bf16.msra.mxu0 0
    %1285 = vmatprep.subr.bf16.mxu0 0
    %1286 = vmatpush1.bf16.msra.mxu0 0
    %1287 = vmatprep.subr.bf16.mxu0 0
    %1288 = vmatpush1.bf16.msra.mxu0 0
    %1289 = vmatprep.subr.bf16.mxu0 0
    %1290 = vmatpush1.bf16.msra.mxu0 0
    %1291 = vmatprep.subr.bf16.mxu0 0
    %1292 = vmatpush1.bf16.msra.mxu0 0
    %1293 = vmatprep.subr.bf16.mxu0 0
    %1294 = vmatpush1.bf16.msra.mxu0 0
    %1295 = vmatprep.mubr.bf16.mxu0 0
    %1296 = vmatmul.mubr.bf16.gmra.mrb[0].mxu0 %v1261
    %v1297 = vpop.f32.mrb[0].mxu0
    %v1298 = vadd.f32 0.0, %v1297
    %v1299 = vpop.f32.mrb[0].mxu0
    %v1300 = vpop.f32.mrb[0].mxu0
    %v1301 = vadd.f32 0.0, %v1300
    %v1302 = vpop.f32.mrb[0].mxu0
    %1303 = vdwg.mxu0
    %v1304 = vadd.f32 %v904, %v1298
    %v1305 = vadd.f32 %v905, %v1301
    %v1306 = vld [vmem:[%s8 + $0x1] sm:$0x1]
    %v1307 = vlaneseq
    %v1308 = vshrl.u32 %v1307, 7
    %v1309 = vsub.s32 0, %v1308
    %v1310 = vrot.slane %v1306, %v1309
    %v1311 = vadd.f32 %v1304, %v1310
    %v1312 = vadd.f32 %v1305, %v1310
    %v1313 = vld [vmem:[%s9 + $0x1] sm:$0x1]
    %v1314 = vld [vmem:[%s10 + $0x1] sm:$0x1]
    %v1315 = vsel %vm110, %v1311, 0.0
    %1316 = vadd.xlane.f32.xlu0 %v1315
    %v1317 = vpop.xlane.xlu0 %1316
    %v1318 = vsel %vm110, %v1312, 0.0
    %1319 = vadd.xlane.f32.xlu0 %v1318
    %v1320 = vpop.xlane.xlu0 %1319
    %v1321 = vmul.f32 %v1317, %v117
    %v1322 = vmul.f32 %v1320, %v117
    %v1323 = vsub.f32 %v1311, %v1321
    %v1324 = vsub.f32 %v1312, %v1322
    %v1325 = vmul.f32 %v1323, %v1323
    %v1326 = vmul.f32 %v1324, %v1324
    %v1327 = vsel %vm110, %v1325, 0.0
    %1328 = vadd.xlane.f32.xlu0 %v1327
    %v1329 = vpop.xlane.xlu0 %1328
    %v1330 = vsel %vm110, %v1326, 0.0
    %1331 = vadd.xlane.f32.xlu0 %v1330
    %v1332 = vpop.xlane.xlu0 %1331
    %v1333 = vmul.f32 %v1329, %v117
    %v1334 = vmul.f32 %v1332, %v117
    %v1335 = vadd.f32 %v1333, 1e-05
    %v1336 = vadd.f32 %v1334, 1e-05
    %v1337 = vrsqrt.pop %v1335
    %v1338 = vrsqrt.pop %v1336
    %v1339 = vmul.f32 %v1323, %v1337
    %v1340 = vmul.f32 %v1324, %v1338
    %v1341 = vlaneseq
    %v1342 = vshrl.u32 %v1341, 7
    %v1343 = vsub.s32 0, %v1342
    %v1344 = vrot.slane %v1313, %v1343
    %v1345 = vmul.f32 %v1339, %v1344
    %v1346 = vmul.f32 %v1340, %v1344
    %v1347 = vlaneseq
    %v1348 = vshrl.u32 %v1347, 7
    %v1349 = vsub.s32 0, %v1348
    %v1350 = vrot.slane %v1314, %v1349
    %v1351 = vadd.f32 %v1345, %v1350
    %v1352 = vadd.f32 %v1346, %v1350
    %v1353 = vpack.c.bf16 %v1352, %v1351
    %s1354 = scalar_lea.vmem %s11, 64
    %v1355 = vld [vmem:[%s1354] sm:$0xff]
    %v1356 = vld [vmem:[%s1354 + $0x8] sm:$0xff]
    %v1357 = vld [vmem:[%s1354 + $0x10] sm:$0xff]
    %v1358 = vld [vmem:[%s1354 + $0x18] sm:$0xff]
    %v1359 = vld [vmem:[%s1354 + $0x20] sm:$0xff]
    %v1360 = vld [vmem:[%s1354 + $0x28] sm:$0xff]
    %v1361 = vld [vmem:[%s1354 + $0x30] sm:$0xff]
    %v1362 = vld [vmem:[%s1354 + $0x38] sm:$0xff]
    %s1363 = scalar_lea.vmem %s12, 1
    %v1364 = vld [vmem:[%s1363] ss:$4 sm:$0x3]
    %v1366 = vlaneseq
    %v1367 = vshrl.u32 %v1366, 7
    %v1368 = vsub.s32 0, %v1367
    %v1369 = vrot.slane %v1364, %v1368
    %v1370 = vlaneseq
    %v1371 = vshrl.u32 %v1370, 7
    %v1372 = vsub.s32 1, %v1371
    %v1373 = vrot.slane %v1364, %v1372
    %v1384 = vunpack.c.l.b16 %v1355
    %v1385 = vunpack.c.h.b16 %v1355
    %v1386 = vunpack.c.l.b16 %v1356
    %v1387 = vunpack.c.h.b16 %v1356
    %v1388 = vunpack.c.l.b16 %v1357
    %v1389 = vunpack.c.h.b16 %v1357
    %v1390 = vunpack.c.l.b16 %v1358
    %v1391 = vunpack.c.h.b16 %v1358
    %v1392 = vunpack.c.l.b16 %v1359
    %v1393 = vunpack.c.h.b16 %v1359
    %v1394 = vunpack.c.l.b16 %v1360
    %v1395 = vunpack.c.h.b16 %v1360
    %v1396 = vunpack.c.l.b16 %v1361
    %v1397 = vunpack.c.h.b16 %v1361
    %v1398 = vunpack.c.l.b16 %v1362
    %v1399 = vunpack.c.h.b16 %v1362
    %v1400 = vpack.c.b16 %v1386, %v1384
    %v1401 = vpack.c.b16 %v1387, %v1385
    %v1402 = vpack.c.b16 %v1390, %v1388
    %v1403 = vpack.c.b16 %v1391, %v1389
    %v1404 = vpack.c.b16 %v1394, %v1392
    %v1405 = vpack.c.b16 %v1395, %v1393
    %v1406 = vpack.c.b16 %v1398, %v1396
    %v1407 = vpack.c.b16 %v1399, %v1397
    %v1417 = vsel %vm110, %v1353, 0
    %1419 = vmatprep.subr.bf16.mxu0 %v1401
    %1420 = vmatpush1.bf16.msra.mxu0 %v1400
    %1421 = vmatprep.subr.bf16.mxu0 %v1403
    %1422 = vmatpush1.bf16.msra.mxu0 %v1402
    %1423 = vmatprep.subr.bf16.mxu0 %v1405
    %1424 = vmatpush1.bf16.msra.mxu0 %v1404
    %1425 = vmatprep.subr.bf16.mxu0 %v1407
    %1426 = vmatpush1.bf16.msra.mxu0 %v1406
    %1427 = vmatprep.subr.bf16.mxu0 0
    %1428 = vmatpush1.bf16.msra.mxu0 0
    %1429 = vmatprep.subr.bf16.mxu0 0
    %1430 = vmatpush1.bf16.msra.mxu0 0
    %1431 = vmatprep.subr.bf16.mxu0 0
    %1432 = vmatpush1.bf16.msra.mxu0 0
    %1433 = vmatprep.subr.bf16.mxu0 0
    %1434 = vmatpush1.bf16.msra.mxu0 0
    %1435 = vmatprep.subr.bf16.mxu0 0
    %1436 = vmatpush1.bf16.msra.mxu0 0
    %1437 = vmatprep.subr.bf16.mxu0 0
    %1438 = vmatpush1.bf16.msra.mxu0 0
    %1439 = vmatprep.subr.bf16.mxu0 0
    %1440 = vmatpush1.bf16.msra.mxu0 0
    %1441 = vmatprep.subr.bf16.mxu0 0
    %1442 = vmatpush1.bf16.msra.mxu0 0
    %1443 = vmatprep.subr.bf16.mxu0 0
    %1444 = vmatpush1.bf16.msra.mxu0 0
    %1445 = vmatprep.subr.bf16.mxu0 0
    %1446 = vmatpush1.bf16.msra.mxu0 0
    %1447 = vmatprep.subr.bf16.mxu0 0
    %1448 = vmatpush1.bf16.msra.mxu0 0
    %1449 = vmatprep.subr.bf16.mxu0 0
    %1450 = vmatpush1.bf16.msra.mxu0 0
    %1451 = vmatprep.mubr.bf16.mxu0 0
    %1452 = vmatmul.mubr.bf16.gmra.mrb[0].mxu0 %v1417
    %v1453 = vpop.f32.mrb[0].mxu0
    %v1454 = vadd.f32 %v1369, %v1453
    %v1455 = vpop.f32.mrb[0].mxu0
    %v1456 = vadd.f32 %v1373, %v1455
    %v1457 = vpop.f32.mrb[0].mxu0
    %v1458 = vadd.f32 %v1369, %v1457
    %v1459 = vpop.f32.mrb[0].mxu0
    %v1460 = vadd.f32 %v1373, %v1459
    %1461 = vdwg.mxu0
    %v1462 = vmax.f32 %v1454, 0.0
    %v1463 = vmax.f32 %v1456, 0.0
    %v1464 = vmax.f32 %v1458, 0.0
    %v1465 = vmax.f32 %v1460, 0.0
    %v1466 = vpack.c.bf16 %v1464, %v1462
    %v1467 = vpack.c.bf16 %v1465, %v1463
    %s1468 = scalar_lea.vmem %s13, 128
    %v1469 = vld [vmem:[%s1468] sm:$0xf]
    %v1470 = vld [vmem:[%s1468 + $0x4] sm:$0xf]
    %v1471 = vld [vmem:[%s1468 + $0x8] sm:$0xf]
    %v1472 = vld [vmem:[%s1468 + $0xc] sm:$0xf]
    %v1473 = vld [vmem:[%s1468 + $0x10] sm:$0xf]
    %v1474 = vld [vmem:[%s1468 + $0x14] sm:$0xf]
    %v1475 = vld [vmem:[%s1468 + $0x18] sm:$0xf]
    %v1476 = vld [vmem:[%s1468 + $0x1c] sm:$0xf]
    %v1477 = vld [vmem:[%s1468 + $0x20] sm:$0xf]
    %v1478 = vld [vmem:[%s1468 + $0x24] sm:$0xf]
    %v1479 = vld [vmem:[%s1468 + $0x28] sm:$0xf]
    %v1480 = vld [vmem:[%s1468 + $0x2c] sm:$0xf]
    %v1481 = vld [vmem:[%s1468 + $0x30] sm:$0xf]
    %v1482 = vld [vmem:[%s1468 + $0x34] sm:$0xf]
    %v1483 = vld [vmem:[%s1468 + $0x38] sm:$0xf]
    %v1484 = vld [vmem:[%s1468 + $0x3c] sm:$0xf]
    %v1485 = vld [vmem:[%s1468 + $0x40] sm:$0xf]
    %v1486 = vld [vmem:[%s1468 + $0x44] sm:$0xf]
    %v1487 = vld [vmem:[%s1468 + $0x48] sm:$0xf]
    %v1488 = vld [vmem:[%s1468 + $0x4c] sm:$0xf]
    %v1489 = vld [vmem:[%s1468 + $0x50] sm:$0xf]
    %v1490 = vld [vmem:[%s1468 + $0x54] sm:$0xf]
    %v1491 = vld [vmem:[%s1468 + $0x58] sm:$0xf]
    %v1492 = vld [vmem:[%s1468 + $0x5c] sm:$0xf]
    %v1493 = vld [vmem:[%s1468 + $0x60] sm:$0xf]
    %v1494 = vld [vmem:[%s1468 + $0x64] sm:$0xf]
    %v1495 = vld [vmem:[%s1468 + $0x68] sm:$0xf]
    %v1496 = vld [vmem:[%s1468 + $0x6c] sm:$0xf]
    %v1497 = vld [vmem:[%s1468 + $0x70] sm:$0xf]
    %v1498 = vld [vmem:[%s1468 + $0x74] sm:$0xf]
    %v1499 = vld [vmem:[%s1468 + $0x78] sm:$0xf]
    %v1500 = vld [vmem:[%s1468 + $0x7c] sm:$0xf]
    %v1533 = vunpack.c.l.b16 %v1469
    %v1534 = vunpack.c.l.b16 %v1470
    %v1535 = vunpack.c.l.b16 %v1471
    %v1536 = vunpack.c.l.b16 %v1472
    %v1537 = vunpack.c.l.b16 %v1473
    %v1538 = vunpack.c.l.b16 %v1474
    %v1539 = vunpack.c.l.b16 %v1475
    %v1540 = vunpack.c.l.b16 %v1476
    %v1541 = vunpack.c.l.b16 %v1477
    %v1542 = vunpack.c.l.b16 %v1478
    %v1543 = vunpack.c.l.b16 %v1479
    %v1544 = vunpack.c.l.b16 %v1480
    %v1545 = vunpack.c.l.b16 %v1481
    %v1546 = vunpack.c.l.b16 %v1482
    %v1547 = vunpack.c.l.b16 %v1483
    %v1548 = vunpack.c.l.b16 %v1484
    %v1549 = vunpack.c.l.b16 %v1485
    %v1550 = vunpack.c.l.b16 %v1486
    %v1551 = vunpack.c.l.b16 %v1487
    %v1552 = vunpack.c.l.b16 %v1488
    %v1553 = vunpack.c.l.b16 %v1489
    %v1554 = vunpack.c.l.b16 %v1490
    %v1555 = vunpack.c.l.b16 %v1491
    %v1556 = vunpack.c.l.b16 %v1492
    %v1557 = vunpack.c.l.b16 %v1493
    %v1558 = vunpack.c.l.b16 %v1494
    %v1559 = vunpack.c.l.b16 %v1495
    %v1560 = vunpack.c.l.b16 %v1496
    %v1561 = vunpack.c.l.b16 %v1497
    %v1562 = vunpack.c.l.b16 %v1498
    %v1563 = vunpack.c.l.b16 %v1499
    %v1564 = vunpack.c.l.b16 %v1500
    %v1565 = vpack.c.b16 %v1534, %v1533
    %v1566 = vpack.c.b16 %v1536, %v1535
    %v1567 = vpack.c.b16 %v1538, %v1537
    %v1568 = vpack.c.b16 %v1540, %v1539
    %v1569 = vpack.c.b16 %v1542, %v1541
    %v1570 = vpack.c.b16 %v1544, %v1543
    %v1571 = vpack.c.b16 %v1546, %v1545
    %v1572 = vpack.c.b16 %v1548, %v1547
    %v1573 = vpack.c.b16 %v1550, %v1549
    %v1574 = vpack.c.b16 %v1552, %v1551
    %v1575 = vpack.c.b16 %v1554, %v1553
    %v1576 = vpack.c.b16 %v1556, %v1555
    %v1577 = vpack.c.b16 %v1558, %v1557
    %v1578 = vpack.c.b16 %v1560, %v1559
    %v1579 = vpack.c.b16 %v1562, %v1561
    %v1580 = vpack.c.b16 %v1564, %v1563
    %1597 = vmatprep.subr.bf16.mxu0 0
    %1598 = vmatpush1.bf16.msra.mxu0 %v1565
    %1599 = vmatprep.subr.bf16.mxu0 0
    %1600 = vmatpush1.bf16.msra.mxu0 %v1566
    %1601 = vmatprep.subr.bf16.mxu0 0
    %1602 = vmatpush1.bf16.msra.mxu0 %v1567
    %1603 = vmatprep.subr.bf16.mxu0 0
    %1604 = vmatpush1.bf16.msra.mxu0 %v1568
    %1605 = vmatprep.subr.bf16.mxu0 0
    %1606 = vmatpush1.bf16.msra.mxu0 %v1569
    %1607 = vmatprep.subr.bf16.mxu0 0
    %1608 = vmatpush1.bf16.msra.mxu0 %v1570
    %1609 = vmatprep.subr.bf16.mxu0 0
    %1610 = vmatpush1.bf16.msra.mxu0 %v1571
    %1611 = vmatprep.subr.bf16.mxu0 0
    %1612 = vmatpush1.bf16.msra.mxu0 %v1572
    %1613 = vmatprep.subr.bf16.mxu0 0
    %1614 = vmatpush1.bf16.msra.mxu0 %v1573
    %1615 = vmatprep.subr.bf16.mxu0 0
    %1616 = vmatpush1.bf16.msra.mxu0 %v1574
    %1617 = vmatprep.subr.bf16.mxu0 0
    %1618 = vmatpush1.bf16.msra.mxu0 %v1575
    %1619 = vmatprep.subr.bf16.mxu0 0
    %1620 = vmatpush1.bf16.msra.mxu0 %v1576
    %1621 = vmatprep.subr.bf16.mxu0 0
    %1622 = vmatpush1.bf16.msra.mxu0 %v1577
    %1623 = vmatprep.subr.bf16.mxu0 0
    %1624 = vmatpush1.bf16.msra.mxu0 %v1578
    %1625 = vmatprep.subr.bf16.mxu0 0
    %1626 = vmatpush1.bf16.msra.mxu0 %v1579
    %1627 = vmatprep.subr.bf16.mxu0 0
    %1628 = vmatpush1.bf16.msra.mxu0 %v1580
    %1629 = vmatprep.mubr.bf16.mxu0 %v1467
    %1630 = vmatmul.mubr.bf16.gmra.mrb[0].mxu0 %v1466
    %v1631 = vpop.f32.mrb[0].mxu0
    %v1632 = vadd.f32 0.0, %v1631
    %v1633 = vpop.f32.mrb[0].mxu0
    %v1634 = vpop.f32.mrb[0].mxu0
    %v1635 = vadd.f32 0.0, %v1634
    %v1636 = vpop.f32.mrb[0].mxu0
    %1637 = vdwg.mxu0
    %v1638 = vadd.f32 %v1311, %v1632
    %v1639 = vadd.f32 %v1312, %v1635
    %v1640 = vld [vmem:[%s14 + $0x1] sm:$0x1]
    %v1641 = vlaneseq
    %v1642 = vshrl.u32 %v1641, 7
    %v1643 = vsub.s32 0, %v1642
    %v1644 = vrot.slane %v1640, %v1643
    %v1645 = vadd.f32 %v1638, %v1644
    %v1646 = vadd.f32 %v1639, %v1644
    %v1647 = vld [vmem:[#allocation2 + $0x2] sm:$0x1]
    %v1648 = vld [vmem:[#allocation5 + $0x2] sm:$0x1]
    %v1649 = vsel %vm110, %v1645, 0.0
    %1650 = vadd.xlane.f32.xlu0 %v1649
    %v1651 = vpop.xlane.xlu0 %1650
    %v1652 = vsel %vm110, %v1646, 0.0
    %1653 = vadd.xlane.f32.xlu0 %v1652
    %v1654 = vpop.xlane.xlu0 %1653
    %v1655 = vmul.f32 %v1651, %v117
    %v1656 = vmul.f32 %v1654, %v117
    %v1657 = vsub.f32 %v1645, %v1655
    %v1658 = vsub.f32 %v1646, %v1656
    %v1659 = vmul.f32 %v1657, %v1657
    %v1660 = vmul.f32 %v1658, %v1658
    %v1661 = vsel %vm110, %v1659, 0.0
    %1662 = vadd.xlane.f32.xlu0 %v1661
    %v1663 = vpop.xlane.xlu0 %1662
    %v1664 = vsel %vm110, %v1660, 0.0
    %1665 = vadd.xlane.f32.xlu0 %v1664
    %v1666 = vpop.xlane.xlu0 %1665
    %v1667 = vmul.f32 %v1663, %v117
    %v1668 = vmul.f32 %v1666, %v117
    %v1669 = vadd.f32 %v1667, 1e-05
    %v1670 = vadd.f32 %v1668, 1e-05
    %v1671 = vrsqrt.pop %v1669
    %v1672 = vrsqrt.pop %v1670
    %v1673 = vmul.f32 %v1657, %v1671
    %v1674 = vmul.f32 %v1658, %v1672
    %v1675 = vlaneseq
    %v1676 = vshrl.u32 %v1675, 7
    %v1677 = vsub.s32 0, %v1676
    %v1678 = vrot.slane %v1647, %v1677
    %v1679 = vmul.f32 %v1673, %v1678
    %v1680 = vmul.f32 %v1674, %v1678
    %v1681 = vlaneseq
    %v1682 = vshrl.u32 %v1681, 7
    %v1683 = vsub.s32 0, %v1682
    %v1684 = vrot.slane %v1648, %v1683
    %v1685 = vadd.f32 %v1679, %v1684
    %v1686 = vadd.f32 %v1680, %v1684
    %v1687 = vpack.c.bf16 %v1686, %v1685
    %s1688 = scalar_lea.vmem %s6, 128
    %v1689 = vld [vmem:[%s1688] sm:$0xff]
    %v1690 = vld [vmem:[%s1688 + $0x8] sm:$0xff]
    %v1691 = vld [vmem:[%s1688 + $0x10] sm:$0xff]
    %v1692 = vld [vmem:[%s1688 + $0x18] sm:$0xff]
    %v1693 = vld [vmem:[%s1688 + $0x20] sm:$0xff]
    %v1694 = vld [vmem:[%s1688 + $0x28] sm:$0xff]
    %v1695 = vld [vmem:[%s1688 + $0x30] sm:$0xff]
    %v1696 = vld [vmem:[%s1688 + $0x38] sm:$0xff]
    %v1705 = vunpack.c.l.b16 %v1689
    %v1706 = vunpack.c.h.b16 %v1689
    %v1707 = vunpack.c.l.b16 %v1690
    %v1708 = vunpack.c.h.b16 %v1690
    %v1709 = vunpack.c.l.b16 %v1691
    %v1710 = vunpack.c.h.b16 %v1691
    %v1711 = vunpack.c.l.b16 %v1692
    %v1712 = vunpack.c.h.b16 %v1692
    %v1713 = vunpack.c.l.b16 %v1693
    %v1714 = vunpack.c.h.b16 %v1693
    %v1715 = vunpack.c.l.b16 %v1694
    %v1716 = vunpack.c.h.b16 %v1694
    %v1717 = vunpack.c.l.b16 %v1695
    %v1718 = vunpack.c.h.b16 %v1695
    %v1719 = vunpack.c.l.b16 %v1696
    %v1720 = vunpack.c.h.b16 %v1696
    %v1721 = vpack.c.b16 %v1707, %v1705
    %v1722 = vpack.c.b16 %v1708, %v1706
    %v1723 = vpack.c.b16 %v1711, %v1709
    %v1724 = vpack.c.b16 %v1712, %v1710
    %v1725 = vpack.c.b16 %v1715, %v1713
    %v1726 = vpack.c.b16 %v1716, %v1714
    %v1727 = vpack.c.b16 %v1719, %v1717
    %v1728 = vpack.c.b16 %v1720, %v1718
    %v1738 = vsel %vm110, %v1687, 0
    %1740 = vmatprep.subr.bf16.mxu0 %v1722
    %1741 = vmatpush1.bf16.msra.mxu0 %v1721
    %1742 = vmatprep.subr.bf16.mxu0 %v1724
    %1743 = vmatpush1.bf16.msra.mxu0 %v1723
    %1744 = vmatprep.subr.bf16.mxu0 %v1726
    %1745 = vmatpush1.bf16.msra.mxu0 %v1725
    %1746 = vmatprep.subr.bf16.mxu0 %v1728
    %1747 = vmatpush1.bf16.msra.mxu0 %v1727
    %1748 = vmatprep.subr.bf16.mxu0 0
    %1749 = vmatpush1.bf16.msra.mxu0 0
    %1750 = vmatprep.subr.bf16.mxu0 0
    %1751 = vmatpush1.bf16.msra.mxu0 0
    %1752 = vmatprep.subr.bf16.mxu0 0
    %1753 = vmatpush1.bf16.msra.mxu0 0
    %1754 = vmatprep.subr.bf16.mxu0 0
    %1755 = vmatpush1.bf16.msra.mxu0 0
    %1756 = vmatprep.subr.bf16.mxu0 0
    %1757 = vmatpush1.bf16.msra.mxu0 0
    %1758 = vmatprep.subr.bf16.mxu0 0
    %1759 = vmatpush1.bf16.msra.mxu0 0
    %1760 = vmatprep.subr.bf16.mxu0 0
    %1761 = vmatpush1.bf16.msra.mxu0 0
    %1762 = vmatprep.subr.bf16.mxu0 0
    %1763 = vmatpush1.bf16.msra.mxu0 0
    %1764 = vmatprep.subr.bf16.mxu0 0
    %1765 = vmatpush1.bf16.msra.mxu0 0
    %1766 = vmatprep.subr.bf16.mxu0 0
    %1767 = vmatpush1.bf16.msra.mxu0 0
    %1768 = vmatprep.subr.bf16.mxu0 0
    %1769 = vmatpush1.bf16.msra.mxu0 0
    %1770 = vmatprep.subr.bf16.mxu0 0
    %1771 = vmatpush1.bf16.msra.mxu0 0
    %1772 = vmatprep.mubr.bf16.mxu0 0
    %1773 = vmatmul.mubr.bf16.gmra.mrb[0].mxu0 %v1738
    %v1774 = vpop.f32.mrb[0].mxu0
    %v1775 = vadd.f32 0.0, %v1774
    %v1776 = vpop.f32.mrb[0].mxu0
    %v1777 = vadd.f32 0.0, %v1776
    %v1778 = vpop.f32.mrb[0].mxu0
    %v1779 = vadd.f32 0.0, %v1778
    %v1780 = vpop.f32.mrb[0].mxu0
    %v1781 = vadd.f32 0.0, %v1780
    %1782 = vdwg.mxu0
    %v1783 = vpack.c.bf16 %v1779, %v1775
    %v1784 = vpack.c.bf16 %v1781, %v1777
    %v1785 = vmul.bf16 %v1783, %v268
    %v1786 = vmul.bf16 %v1783, %v270
    %v1787 = vmul.bf16 %v1783, %v272
    %v1788 = vmul.bf16 %v1783, %v274
    %v1789 = vmul.bf16 %v1784, %v263
    %v1790 = vmul.bf16 %v1784, %v264
    %v1791 = vmul.bf16 %v1784, %v265
    %v1792 = vmul.bf16 %v1784, %v266
    %1797 = vrot.lane.b32.xlu0 %v1785, 64
    %v1798 = vpop.permute.xlu0 %1797
    %1799 = vrot.lane.b32.xlu0 %v1786, 64
    %v1800 = vpop.permute.xlu0 %1799
    %1801 = vrot.lane.b32.xlu0 %v1787, 64
    %v1802 = vpop.permute.xlu0 %1801
    %1803 = vrot.lane.b32.xlu0 %v1788, 64
    %v1804 = vpop.permute.xlu0 %1803
    %v1806 = vsel %vm110, %v1783, 0
    %v1809 = vsel %vm110, %v1798, 0
    %v1812 = vsel %vm110, %v1800, 0
    %v1815 = vsel %vm110, %v1802, 0
    %v1818 = vsel %vm110, %v1804, 0
    %1820 = vmatprep.subr.bf16.mxu0 0
    %1821 = vmatpush1.bf16.xpose.msra.mxu0 %v1809
    %1822 = vmatprep.subr.bf16.mxu0 0
    %1823 = vmatpush1.bf16.xpose.msra.mxu0 %v1812
    %1824 = vmatprep.subr.bf16.mxu0 0
    %1825 = vmatpush1.bf16.xpose.msra.mxu0 %v1815
    %1826 = vmatprep.subr.bf16.mxu0 0
    %1827 = vmatpush1.bf16.xpose.msra.mxu0 %v1818
    %1828 = vmatprep.subr.bf16.mxu0 0
    %1829 = vmatpush1.bf16.xpose.msra.mxu0 0
    %1830 = vmatprep.subr.bf16.mxu0 0
    %1831 = vmatpush1.bf16.xpose.msra.mxu0 0
    %1832 = vmatprep.subr.bf16.mxu0 0
    %1833 = vmatpush1.bf16.xpose.msra.mxu0 0
    %1834 = vmatprep.subr.bf16.mxu0 0
    %1835 = vmatpush1.bf16.xpose.msra.mxu0 0
    %1836 = vmatprep.subr.bf16.mxu0 0
    %1837 = vmatpush1.bf16.xpose.msra.mxu0 0
    %1838 = vmatprep.subr.bf16.mxu0 0
    %1839 = vmatpush1.bf16.xpose.msra.mxu0 0
    %1840 = vmatprep.subr.bf16.mxu0 0
    %1841 = vmatpush1.bf16.xpose.msra.mxu0 0
    %1842 = vmatprep.subr.bf16.mxu0 0
    %1843 = vmatpush1.bf16.xpose.msra.mxu0 0
    %1844 = vmatprep.subr.bf16.mxu0 0
    %1845 = vmatpush1.bf16.xpose.msra.mxu0 0
    %1846 = vmatprep.subr.bf16.mxu0 0
    %1847 = vmatpush1.bf16.xpose.msra.mxu0 0
    %1848 = vmatprep.subr.bf16.mxu0 0
    %1849 = vmatpush1.bf16.xpose.msra.mxu0 0
    %1850 = vmatprep.subr.bf16.mxu0 0
    %1851 = vmatpush1.bf16.xpose.msra.mxu0 0
    %1852 = vmatprep.mubr.bf16.mxu0 0
    %1853 = vmatmul.mubr.bf16.gmra.mrb[0].mxu0 %v1806
    %v1854 = vpop.f32.mrb[0].mxu0
    %v1855 = vadd.f32 %v104, %v1854
    %v1856 = vpop.f32.mrb[0].mxu0
    %v1857 = vpop.f32.mrb[0].mxu0
    %v1858 = vadd.f32 %v105, %v1857
    %v1859 = vpop.f32.mrb[0].mxu0
    %1860 = vdwg.mxu0
    %v1861 = vsel %vm110, %v1855, -inf
    %1862 = vmax.xlane.f32.xlu0 %v1861
    %v1863 = vpop.xlane.xlu0 %1862
    %v1864 = vsel %vm110, %v1858, -inf
    %1865 = vmax.xlane.f32.xlu0 %v1864
    %v1866 = vpop.xlane.xlu0 %1865
    %v1867 = vsub.f32 %v1855, %v1863
    %v1868 = vsub.f32 %v1858, %v1866
    %v1869 = vmul.f32 %v1867, 1.442695
    %v1870 = vpow.pop %v1869
    %v1871 = vmul.f32 %v1868, 1.442695
    %v1872 = vpow.pop %v1871
    %v1873 = vpack.c.bf16 %v1872, %v1870
    %v1875 = vsel %vm110, %v1873, 0
    %1877 = vmatprep.subr.bf16.mxu0 0
    %1878 = vmatpush1.bf16.msra.mxu0 %v388
    %1879 = vmatprep.subr.bf16.mxu0 0
    %1880 = vmatpush1.bf16.msra.mxu0 %v389
    %1881 = vmatprep.subr.bf16.mxu0 0
    %1882 = vmatpush1.bf16.msra.mxu0 %v390
    %1883 = vmatprep.subr.bf16.mxu0 0
    %1884 = vmatpush1.bf16.msra.mxu0 %v391
    %1885 = vmatprep.subr.bf16.mxu0 0
    %1886 = vmatpush1.bf16.msra.mxu0 0
    %1887 = vmatprep.subr.bf16.mxu0 0
    %1888 = vmatpush1.bf16.msra.mxu0 0
    %1889 = vmatprep.subr.bf16.mxu0 0
    %1890 = vmatpush1.bf16.msra.mxu0 0
    %1891 = vmatprep.subr.bf16.mxu0 0
    %1892 = vmatpush1.bf16.msra.mxu0 0
    %1893 = vmatprep.subr.bf16.mxu0 0
    %1894 = vmatpush1.bf16.msra.mxu0 0
    %1895 = vmatprep.subr.bf16.mxu0 0
    %1896 = vmatpush1.bf16.msra.mxu0 0
    %1897 = vmatprep.subr.bf16.mxu0 0
    %1898 = vmatpush1.bf16.msra.mxu0 0
    %1899 = vmatprep.subr.bf16.mxu0 0
    %1900 = vmatpush1.bf16.msra.mxu0 0
    %1901 = vmatprep.subr.bf16.mxu0 0
    %1902 = vmatpush1.bf16.msra.mxu0 0
    %1903 = vmatprep.subr.bf16.mxu0 0
    %1904 = vmatpush1.bf16.msra.mxu0 0
    %1905 = vmatprep.subr.bf16.mxu0 0
    %1906 = vmatpush1.bf16.msra.mxu0 0
    %1907 = vmatprep.subr.bf16.mxu0 0
    %1908 = vmatpush1.bf16.msra.mxu0 0
    %1909 = vmatprep.mubr.bf16.mxu0 0
    %1910 = vmatmul.mubr.bf16.gmra.mrb[0].mxu0 %v1875
    %v1911 = vpop.f32.mrb[0].mxu0
    %v1912 = vadd.f32 1e-30, %v1911
    %v1913 = vpop.f32.mrb[0].mxu0
    %v1914 = vpop.f32.mrb[0].mxu0
    %v1915 = vadd.f32 1e-30, %v1914
    %v1916 = vpop.f32.mrb[0].mxu0
    %1917 = vdwg.mxu0
    %v1918 = vrcp.pop %v1912
    %v1919 = vrcp.pop %v1915
    %v1920 = vmul.f32 %v1870, %v1918
    %v1921 = vmul.f32 %v1872, %v1919
    %v1922 = vpack.c.bf16 %v1921, %v1920
    %v1924 = vsel %vm110, %v1922, 0
    %1926 = vmatprep.subr.bf16.mxu0 0
    %1927 = vmatpush1.bf16.msra.mxu0 %v1789
    %1928 = vmatprep.subr.bf16.mxu0 0
    %1929 = vmatpush1.bf16.msra.mxu0 %v1790
    %1930 = vmatprep.subr.bf16.mxu0 0
    %1931 = vmatpush1.bf16.msra.mxu0 %v1791
    %1932 = vmatprep.subr.bf16.mxu0 0
    %1933 = vmatpush1.bf16.msra.mxu0 %v1792
    %1934 = vmatprep.subr.bf16.mxu0 0
    %1935 = vmatpush1.bf16.msra.mxu0 0
    %1936 = vmatprep.subr.bf16.mxu0 0
    %1937 = vmatpush1.bf16.msra.mxu0 0
    %1938 = vmatprep.subr.bf16.mxu0 0
    %1939 = vmatpush1.bf16.msra.mxu0 0
    %1940 = vmatprep.subr.bf16.mxu0 0
    %1941 = vmatpush1.bf16.msra.mxu0 0
    %1942 = vmatprep.subr.bf16.mxu0 0
    %1943 = vmatpush1.bf16.msra.mxu0 0
    %1944 = vmatprep.subr.bf16.mxu0 0
    %1945 = vmatpush1.bf16.msra.mxu0 0
    %1946 = vmatprep.subr.bf16.mxu0 0
    %1947 = vmatpush1.bf16.msra.mxu0 0
    %1948 = vmatprep.subr.bf16.mxu0 0
    %1949 = vmatpush1.bf16.msra.mxu0 0
    %1950 = vmatprep.subr.bf16.mxu0 0
    %1951 = vmatpush1.bf16.msra.mxu0 0
    %1952 = vmatprep.subr.bf16.mxu0 0
    %1953 = vmatpush1.bf16.msra.mxu0 0
    %1954 = vmatprep.subr.bf16.mxu0 0
    %1955 = vmatpush1.bf16.msra.mxu0 0
    %1956 = vmatprep.subr.bf16.mxu0 0
    %1957 = vmatpush1.bf16.msra.mxu0 0
    %1958 = vmatprep.mubr.bf16.mxu0 0
    %1959 = vmatmul.mubr.bf16.gmra.mrb[0].mxu0 %v1924
    %v1960 = vpop.f32.mrb[0].mxu0
    %v1961 = vadd.f32 0.0, %v1960
    %v1962 = vpop.f32.mrb[0].mxu0
    %v1963 = vpop.f32.mrb[0].mxu0
    %v1964 = vadd.f32 0.0, %v1963
    %v1965 = vpop.f32.mrb[0].mxu0
    %1966 = vdwg.mxu0
    %v1967 = vpack.c.bf16 %v1964, %v1961
    %s1968 = scalar_lea.vmem %s7, 64
    %v1969 = vld [vmem:[%s1968] sm:$0xf]
    %v1970 = vld [vmem:[%s1968 + $0x4] sm:$0xf]
    %v1971 = vld [vmem:[%s1968 + $0x8] sm:$0xf]
    %v1972 = vld [vmem:[%s1968 + $0xc] sm:$0xf]
    %v1973 = vld [vmem:[%s1968 + $0x10] sm:$0xf]
    %v1974 = vld [vmem:[%s1968 + $0x14] sm:$0xf]
    %v1975 = vld [vmem:[%s1968 + $0x18] sm:$0xf]
    %v1976 = vld [vmem:[%s1968 + $0x1c] sm:$0xf]
    %v1985 = vunpack.c.l.b16 %v1969
    %v1986 = vunpack.c.l.b16 %v1970
    %v1987 = vunpack.c.l.b16 %v1971
    %v1988 = vunpack.c.l.b16 %v1972
    %v1989 = vunpack.c.l.b16 %v1973
    %v1990 = vunpack.c.l.b16 %v1974
    %v1991 = vunpack.c.l.b16 %v1975
    %v1992 = vunpack.c.l.b16 %v1976
    %v1993 = vpack.c.b16 %v1986, %v1985
    %v1994 = vpack.c.b16 %v1988, %v1987
    %v1995 = vpack.c.b16 %v1990, %v1989
    %v1996 = vpack.c.b16 %v1992, %v1991
    %v2002 = vsel %vm110, %v1967, 0
    %2004 = vmatprep.subr.bf16.mxu0 0
    %2005 = vmatpush1.bf16.msra.mxu0 %v1993
    %2006 = vmatprep.subr.bf16.mxu0 0
    %2007 = vmatpush1.bf16.msra.mxu0 %v1994
    %2008 = vmatprep.subr.bf16.mxu0 0
    %2009 = vmatpush1.bf16.msra.mxu0 %v1995
    %2010 = vmatprep.subr.bf16.mxu0 0
    %2011 = vmatpush1.bf16.msra.mxu0 %v1996
    %2012 = vmatprep.subr.bf16.mxu0 0
    %2013 = vmatpush1.bf16.msra.mxu0 0
    %2014 = vmatprep.subr.bf16.mxu0 0
    %2015 = vmatpush1.bf16.msra.mxu0 0
    %2016 = vmatprep.subr.bf16.mxu0 0
    %2017 = vmatpush1.bf16.msra.mxu0 0
    %2018 = vmatprep.subr.bf16.mxu0 0
    %2019 = vmatpush1.bf16.msra.mxu0 0
    %2020 = vmatprep.subr.bf16.mxu0 0
    %2021 = vmatpush1.bf16.msra.mxu0 0
    %2022 = vmatprep.subr.bf16.mxu0 0
    %2023 = vmatpush1.bf16.msra.mxu0 0
    %2024 = vmatprep.subr.bf16.mxu0 0
    %2025 = vmatpush1.bf16.msra.mxu0 0
    %2026 = vmatprep.subr.bf16.mxu0 0
    %2027 = vmatpush1.bf16.msra.mxu0 0
    %2028 = vmatprep.subr.bf16.mxu0 0
    %2029 = vmatpush1.bf16.msra.mxu0 0
    %2030 = vmatprep.subr.bf16.mxu0 0
    %2031 = vmatpush1.bf16.msra.mxu0 0
    %2032 = vmatprep.subr.bf16.mxu0 0
    %2033 = vmatpush1.bf16.msra.mxu0 0
    %2034 = vmatprep.subr.bf16.mxu0 0
    %2035 = vmatpush1.bf16.msra.mxu0 0
    %2036 = vmatprep.mubr.bf16.mxu0 0
    %2037 = vmatmul.mubr.bf16.gmra.mrb[0].mxu0 %v2002
    %v2038 = vpop.f32.mrb[0].mxu0
    %v2039 = vadd.f32 0.0, %v2038
    %v2040 = vpop.f32.mrb[0].mxu0
    %v2041 = vpop.f32.mrb[0].mxu0
    %v2042 = vadd.f32 0.0, %v2041
    %v2043 = vpop.f32.mrb[0].mxu0
    %2044 = vdwg.mxu0
    %v2045 = vadd.f32 %v1645, %v2039
    %v2046 = vadd.f32 %v1646, %v2042
    %v2047 = vld [vmem:[%s8 + $0x2] sm:$0x1]
    %v2048 = vlaneseq
    %v2049 = vshrl.u32 %v2048, 7
    %v2050 = vsub.s32 0, %v2049
    %v2051 = vrot.slane %v2047, %v2050
    %v2052 = vadd.f32 %v2045, %v2051
    %v2053 = vadd.f32 %v2046, %v2051
    %v2054 = vld [vmem:[%s9 + $0x2] sm:$0x1]
    %v2055 = vld [vmem:[%s10 + $0x2] sm:$0x1]
    %v2056 = vsel %vm110, %v2052, 0.0
    %2057 = vadd.xlane.f32.xlu0 %v2056
    %v2058 = vpop.xlane.xlu0 %2057
    %v2059 = vsel %vm110, %v2053, 0.0
    %2060 = vadd.xlane.f32.xlu0 %v2059
    %v2061 = vpop.xlane.xlu0 %2060
    %v2062 = vmul.f32 %v2058, %v117
    %v2063 = vmul.f32 %v2061, %v117
    %v2064 = vsub.f32 %v2052, %v2062
    %v2065 = vsub.f32 %v2053, %v2063
    %v2066 = vmul.f32 %v2064, %v2064
    %v2067 = vmul.f32 %v2065, %v2065
    %v2068 = vsel %vm110, %v2066, 0.0
    %2069 = vadd.xlane.f32.xlu0 %v2068
    %v2070 = vpop.xlane.xlu0 %2069
    %v2071 = vsel %vm110, %v2067, 0.0
    %2072 = vadd.xlane.f32.xlu0 %v2071
    %v2073 = vpop.xlane.xlu0 %2072
    %v2074 = vmul.f32 %v2070, %v117
    %v2075 = vmul.f32 %v2073, %v117
    %v2076 = vadd.f32 %v2074, 1e-05
    %v2077 = vadd.f32 %v2075, 1e-05
    %v2078 = vrsqrt.pop %v2076
    %v2079 = vrsqrt.pop %v2077
    %v2080 = vmul.f32 %v2064, %v2078
    %v2081 = vmul.f32 %v2065, %v2079
    %v2082 = vlaneseq
    %v2083 = vshrl.u32 %v2082, 7
    %v2084 = vsub.s32 0, %v2083
    %v2085 = vrot.slane %v2054, %v2084
    %v2086 = vmul.f32 %v2080, %v2085
    %v2087 = vmul.f32 %v2081, %v2085
    %v2088 = vlaneseq
    %v2089 = vshrl.u32 %v2088, 7
    %v2090 = vsub.s32 0, %v2089
    %v2091 = vrot.slane %v2055, %v2090
    %v2092 = vadd.f32 %v2086, %v2091
    %v2093 = vadd.f32 %v2087, %v2091
    %v2094 = vpack.c.bf16 %v2093, %v2092
    %s2095 = scalar_lea.vmem %s11, 128
    %v2096 = vld [vmem:[%s2095] sm:$0xff]
    %v2097 = vld [vmem:[%s2095 + $0x8] sm:$0xff]
    %v2098 = vld [vmem:[%s2095 + $0x10] sm:$0xff]
    %v2099 = vld [vmem:[%s2095 + $0x18] sm:$0xff]
    %v2100 = vld [vmem:[%s2095 + $0x20] sm:$0xff]
    %v2101 = vld [vmem:[%s2095 + $0x28] sm:$0xff]
    %v2102 = vld [vmem:[%s2095 + $0x30] sm:$0xff]
    %v2103 = vld [vmem:[%s2095 + $0x38] sm:$0xff]
    %s2104 = scalar_lea.vmem %s12, 2
    %v2105 = vld [vmem:[%s2104] ss:$4 sm:$0x3]
    %v2107 = vlaneseq
    %v2108 = vshrl.u32 %v2107, 7
    %v2109 = vsub.s32 0, %v2108
    %v2110 = vrot.slane %v2105, %v2109
    %v2111 = vlaneseq
    %v2112 = vshrl.u32 %v2111, 7
    %v2113 = vsub.s32 1, %v2112
    %v2114 = vrot.slane %v2105, %v2113
    %v2125 = vunpack.c.l.b16 %v2096
    %v2126 = vunpack.c.h.b16 %v2096
    %v2127 = vunpack.c.l.b16 %v2097
    %v2128 = vunpack.c.h.b16 %v2097
    %v2129 = vunpack.c.l.b16 %v2098
    %v2130 = vunpack.c.h.b16 %v2098
    %v2131 = vunpack.c.l.b16 %v2099
    %v2132 = vunpack.c.h.b16 %v2099
    %v2133 = vunpack.c.l.b16 %v2100
    %v2134 = vunpack.c.h.b16 %v2100
    %v2135 = vunpack.c.l.b16 %v2101
    %v2136 = vunpack.c.h.b16 %v2101
    %v2137 = vunpack.c.l.b16 %v2102
    %v2138 = vunpack.c.h.b16 %v2102
    %v2139 = vunpack.c.l.b16 %v2103
    %v2140 = vunpack.c.h.b16 %v2103
    %v2141 = vpack.c.b16 %v2127, %v2125
    %v2142 = vpack.c.b16 %v2128, %v2126
    %v2143 = vpack.c.b16 %v2131, %v2129
    %v2144 = vpack.c.b16 %v2132, %v2130
    %v2145 = vpack.c.b16 %v2135, %v2133
    %v2146 = vpack.c.b16 %v2136, %v2134
    %v2147 = vpack.c.b16 %v2139, %v2137
    %v2148 = vpack.c.b16 %v2140, %v2138
    %v2158 = vsel %vm110, %v2094, 0
    %2160 = vmatprep.subr.bf16.mxu0 %v2142
    %2161 = vmatpush1.bf16.msra.mxu0 %v2141
    %2162 = vmatprep.subr.bf16.mxu0 %v2144
    %2163 = vmatpush1.bf16.msra.mxu0 %v2143
    %2164 = vmatprep.subr.bf16.mxu0 %v2146
    %2165 = vmatpush1.bf16.msra.mxu0 %v2145
    %2166 = vmatprep.subr.bf16.mxu0 %v2148
    %2167 = vmatpush1.bf16.msra.mxu0 %v2147
    %2168 = vmatprep.subr.bf16.mxu0 0
    %2169 = vmatpush1.bf16.msra.mxu0 0
    %2170 = vmatprep.subr.bf16.mxu0 0
    %2171 = vmatpush1.bf16.msra.mxu0 0
    %2172 = vmatprep.subr.bf16.mxu0 0
    %2173 = vmatpush1.bf16.msra.mxu0 0
    %2174 = vmatprep.subr.bf16.mxu0 0
    %2175 = vmatpush1.bf16.msra.mxu0 0
    %2176 = vmatprep.subr.bf16.mxu0 0
    %2177 = vmatpush1.bf16.msra.mxu0 0
    %2178 = vmatprep.subr.bf16.mxu0 0
    %2179 = vmatpush1.bf16.msra.mxu0 0
    %2180 = vmatprep.subr.bf16.mxu0 0
    %2181 = vmatpush1.bf16.msra.mxu0 0
    %2182 = vmatprep.subr.bf16.mxu0 0
    %2183 = vmatpush1.bf16.msra.mxu0 0
    %2184 = vmatprep.subr.bf16.mxu0 0
    %2185 = vmatpush1.bf16.msra.mxu0 0
    %2186 = vmatprep.subr.bf16.mxu0 0
    %2187 = vmatpush1.bf16.msra.mxu0 0
    %2188 = vmatprep.subr.bf16.mxu0 0
    %2189 = vmatpush1.bf16.msra.mxu0 0
    %2190 = vmatprep.subr.bf16.mxu0 0
    %2191 = vmatpush1.bf16.msra.mxu0 0
    %2192 = vmatprep.mubr.bf16.mxu0 0
    %2193 = vmatmul.mubr.bf16.gmra.mrb[0].mxu0 %v2158
    %v2194 = vpop.f32.mrb[0].mxu0
    %v2195 = vadd.f32 %v2110, %v2194
    %v2196 = vpop.f32.mrb[0].mxu0
    %v2197 = vadd.f32 %v2114, %v2196
    %v2198 = vpop.f32.mrb[0].mxu0
    %v2199 = vadd.f32 %v2110, %v2198
    %v2200 = vpop.f32.mrb[0].mxu0
    %v2201 = vadd.f32 %v2114, %v2200
    %2202 = vdwg.mxu0
    %v2203 = vmax.f32 %v2195, 0.0
    %v2204 = vmax.f32 %v2197, 0.0
    %v2205 = vmax.f32 %v2199, 0.0
    %v2206 = vmax.f32 %v2201, 0.0
    %v2207 = vpack.c.bf16 %v2205, %v2203
    %v2208 = vpack.c.bf16 %v2206, %v2204
    %s2209 = scalar_lea.vmem %s13, 256
    %v2210 = vld [vmem:[%s2209] sm:$0xf]
    %v2211 = vld [vmem:[%s2209 + $0x4] sm:$0xf]
    %v2212 = vld [vmem:[%s2209 + $0x8] sm:$0xf]
    %v2213 = vld [vmem:[%s2209 + $0xc] sm:$0xf]
    %v2214 = vld [vmem:[%s2209 + $0x10] sm:$0xf]
    %v2215 = vld [vmem:[%s2209 + $0x14] sm:$0xf]
    %v2216 = vld [vmem:[%s2209 + $0x18] sm:$0xf]
    %v2217 = vld [vmem:[%s2209 + $0x1c] sm:$0xf]
    %v2218 = vld [vmem:[%s2209 + $0x20] sm:$0xf]
    %v2219 = vld [vmem:[%s2209 + $0x24] sm:$0xf]
    %v2220 = vld [vmem:[%s2209 + $0x28] sm:$0xf]
    %v2221 = vld [vmem:[%s2209 + $0x2c] sm:$0xf]
    %v2222 = vld [vmem:[%s2209 + $0x30] sm:$0xf]
    %v2223 = vld [vmem:[%s2209 + $0x34] sm:$0xf]
    %v2224 = vld [vmem:[%s2209 + $0x38] sm:$0xf]
    %v2225 = vld [vmem:[%s2209 + $0x3c] sm:$0xf]
    %v2226 = vld [vmem:[%s2209 + $0x40] sm:$0xf]
    %v2227 = vld [vmem:[%s2209 + $0x44] sm:$0xf]
    %v2228 = vld [vmem:[%s2209 + $0x48] sm:$0xf]
    %v2229 = vld [vmem:[%s2209 + $0x4c] sm:$0xf]
    %v2230 = vld [vmem:[%s2209 + $0x50] sm:$0xf]
    %v2231 = vld [vmem:[%s2209 + $0x54] sm:$0xf]
    %v2232 = vld [vmem:[%s2209 + $0x58] sm:$0xf]
    %v2233 = vld [vmem:[%s2209 + $0x5c] sm:$0xf]
    %v2234 = vld [vmem:[%s2209 + $0x60] sm:$0xf]
    %v2235 = vld [vmem:[%s2209 + $0x64] sm:$0xf]
    %v2236 = vld [vmem:[%s2209 + $0x68] sm:$0xf]
    %v2237 = vld [vmem:[%s2209 + $0x6c] sm:$0xf]
    %v2238 = vld [vmem:[%s2209 + $0x70] sm:$0xf]
    %v2239 = vld [vmem:[%s2209 + $0x74] sm:$0xf]
    %v2240 = vld [vmem:[%s2209 + $0x78] sm:$0xf]
    %v2241 = vld [vmem:[%s2209 + $0x7c] sm:$0xf]
    %v2274 = vunpack.c.l.b16 %v2210
    %v2275 = vunpack.c.l.b16 %v2211
    %v2276 = vunpack.c.l.b16 %v2212
    %v2277 = vunpack.c.l.b16 %v2213
    %v2278 = vunpack.c.l.b16 %v2214
    %v2279 = vunpack.c.l.b16 %v2215
    %v2280 = vunpack.c.l.b16 %v2216
    %v2281 = vunpack.c.l.b16 %v2217
    %v2282 = vunpack.c.l.b16 %v2218
    %v2283 = vunpack.c.l.b16 %v2219
    %v2284 = vunpack.c.l.b16 %v2220
    %v2285 = vunpack.c.l.b16 %v2221
    %v2286 = vunpack.c.l.b16 %v2222
    %v2287 = vunpack.c.l.b16 %v2223
    %v2288 = vunpack.c.l.b16 %v2224
    %v2289 = vunpack.c.l.b16 %v2225
    %v2290 = vunpack.c.l.b16 %v2226
    %v2291 = vunpack.c.l.b16 %v2227
    %v2292 = vunpack.c.l.b16 %v2228
    %v2293 = vunpack.c.l.b16 %v2229
    %v2294 = vunpack.c.l.b16 %v2230
    %v2295 = vunpack.c.l.b16 %v2231
    %v2296 = vunpack.c.l.b16 %v2232
    %v2297 = vunpack.c.l.b16 %v2233
    %v2298 = vunpack.c.l.b16 %v2234
    %v2299 = vunpack.c.l.b16 %v2235
    %v2300 = vunpack.c.l.b16 %v2236
    %v2301 = vunpack.c.l.b16 %v2237
    %v2302 = vunpack.c.l.b16 %v2238
    %v2303 = vunpack.c.l.b16 %v2239
    %v2304 = vunpack.c.l.b16 %v2240
    %v2305 = vunpack.c.l.b16 %v2241
    %v2306 = vpack.c.b16 %v2275, %v2274
    %v2307 = vpack.c.b16 %v2277, %v2276
    %v2308 = vpack.c.b16 %v2279, %v2278
    %v2309 = vpack.c.b16 %v2281, %v2280
    %v2310 = vpack.c.b16 %v2283, %v2282
    %v2311 = vpack.c.b16 %v2285, %v2284
    %v2312 = vpack.c.b16 %v2287, %v2286
    %v2313 = vpack.c.b16 %v2289, %v2288
    %v2314 = vpack.c.b16 %v2291, %v2290
    %v2315 = vpack.c.b16 %v2293, %v2292
    %v2316 = vpack.c.b16 %v2295, %v2294
    %v2317 = vpack.c.b16 %v2297, %v2296
    %v2318 = vpack.c.b16 %v2299, %v2298
    %v2319 = vpack.c.b16 %v2301, %v2300
    %v2320 = vpack.c.b16 %v2303, %v2302
    %v2321 = vpack.c.b16 %v2305, %v2304
    %2338 = vmatprep.subr.bf16.mxu0 0
    %2339 = vmatpush1.bf16.msra.mxu0 %v2306
    %2340 = vmatprep.subr.bf16.mxu0 0
    %2341 = vmatpush1.bf16.msra.mxu0 %v2307
    %2342 = vmatprep.subr.bf16.mxu0 0
    %2343 = vmatpush1.bf16.msra.mxu0 %v2308
    %2344 = vmatprep.subr.bf16.mxu0 0
    %2345 = vmatpush1.bf16.msra.mxu0 %v2309
    %2346 = vmatprep.subr.bf16.mxu0 0
    %2347 = vmatpush1.bf16.msra.mxu0 %v2310
    %2348 = vmatprep.subr.bf16.mxu0 0
    %2349 = vmatpush1.bf16.msra.mxu0 %v2311
    %2350 = vmatprep.subr.bf16.mxu0 0
    %2351 = vmatpush1.bf16.msra.mxu0 %v2312
    %2352 = vmatprep.subr.bf16.mxu0 0
    %2353 = vmatpush1.bf16.msra.mxu0 %v2313
    %2354 = vmatprep.subr.bf16.mxu0 0
    %2355 = vmatpush1.bf16.msra.mxu0 %v2314
    %2356 = vmatprep.subr.bf16.mxu0 0
    %2357 = vmatpush1.bf16.msra.mxu0 %v2315
    %2358 = vmatprep.subr.bf16.mxu0 0
    %2359 = vmatpush1.bf16.msra.mxu0 %v2316
    %2360 = vmatprep.subr.bf16.mxu0 0
    %2361 = vmatpush1.bf16.msra.mxu0 %v2317
    %2362 = vmatprep.subr.bf16.mxu0 0
    %2363 = vmatpush1.bf16.msra.mxu0 %v2318
    %2364 = vmatprep.subr.bf16.mxu0 0
    %2365 = vmatpush1.bf16.msra.mxu0 %v2319
    %2366 = vmatprep.subr.bf16.mxu0 0
    %2367 = vmatpush1.bf16.msra.mxu0 %v2320
    %2368 = vmatprep.subr.bf16.mxu0 0
    %2369 = vmatpush1.bf16.msra.mxu0 %v2321
    %2370 = vmatprep.mubr.bf16.mxu0 %v2208
    %2371 = vmatmul.mubr.bf16.gmra.mrb[0].mxu0 %v2207
    %v2372 = vpop.f32.mrb[0].mxu0
    %v2373 = vadd.f32 0.0, %v2372
    %v2374 = vpop.f32.mrb[0].mxu0
    %v2375 = vpop.f32.mrb[0].mxu0
    %v2376 = vadd.f32 0.0, %v2375
    %v2377 = vpop.f32.mrb[0].mxu0
    %2378 = vdwg.mxu0
    %v2379 = vadd.f32 %v2052, %v2373
    %v2380 = vadd.f32 %v2053, %v2376
    %v2381 = vld [vmem:[%s14 + $0x2] sm:$0x1]
    %v2382 = vlaneseq
    %v2383 = vshrl.u32 %v2382, 7
    %v2384 = vsub.s32 0, %v2383
    %v2385 = vrot.slane %v2381, %v2384
    %v2386 = vadd.f32 %v2379, %v2385
    %v2387 = vadd.f32 %v2380, %v2385
    %v2388 = vld [vmem:[#allocation2 + $0x3] sm:$0x1]
    %v2389 = vld [vmem:[#allocation5 + $0x3] sm:$0x1]
    %v2390 = vsel %vm110, %v2386, 0.0
    %2391 = vadd.xlane.f32.xlu0 %v2390
    %v2392 = vpop.xlane.xlu0 %2391
    %v2393 = vsel %vm110, %v2387, 0.0
    %2394 = vadd.xlane.f32.xlu0 %v2393
    %v2395 = vpop.xlane.xlu0 %2394
    %v2396 = vmul.f32 %v2392, %v117
    %v2397 = vmul.f32 %v2395, %v117
    %v2398 = vsub.f32 %v2386, %v2396
    %v2399 = vsub.f32 %v2387, %v2397
    %v2400 = vmul.f32 %v2398, %v2398
    %v2401 = vmul.f32 %v2399, %v2399
    %v2402 = vsel %vm110, %v2400, 0.0
    %2403 = vadd.xlane.f32.xlu0 %v2402
    %v2404 = vpop.xlane.xlu0 %2403
    %v2405 = vsel %vm110, %v2401, 0.0
    %2406 = vadd.xlane.f32.xlu0 %v2405
    %v2407 = vpop.xlane.xlu0 %2406
    %v2408 = vmul.f32 %v2404, %v117
    %v2409 = vmul.f32 %v2407, %v117
    %v2410 = vadd.f32 %v2408, 1e-05
    %v2411 = vadd.f32 %v2409, 1e-05
    %v2412 = vrsqrt.pop %v2410
    %v2413 = vrsqrt.pop %v2411
    %v2414 = vmul.f32 %v2398, %v2412
    %v2415 = vmul.f32 %v2399, %v2413
    %v2416 = vlaneseq
    %v2417 = vshrl.u32 %v2416, 7
    %v2418 = vsub.s32 0, %v2417
    %v2419 = vrot.slane %v2388, %v2418
    %v2420 = vmul.f32 %v2414, %v2419
    %v2421 = vmul.f32 %v2415, %v2419
    %v2422 = vlaneseq
    %v2423 = vshrl.u32 %v2422, 7
    %v2424 = vsub.s32 0, %v2423
    %v2425 = vrot.slane %v2389, %v2424
    %v2426 = vadd.f32 %v2420, %v2425
    %v2427 = vadd.f32 %v2421, %v2425
    %v2428 = vpack.c.bf16 %v2427, %v2426
    %s2429 = scalar_lea.vmem %s6, 192
    %v2430 = vld [vmem:[%s2429] sm:$0xff]
    %v2431 = vld [vmem:[%s2429 + $0x8] sm:$0xff]
    %v2432 = vld [vmem:[%s2429 + $0x10] sm:$0xff]
    %v2433 = vld [vmem:[%s2429 + $0x18] sm:$0xff]
    %v2434 = vld [vmem:[%s2429 + $0x20] sm:$0xff]
    %v2435 = vld [vmem:[%s2429 + $0x28] sm:$0xff]
    %v2436 = vld [vmem:[%s2429 + $0x30] sm:$0xff]
    %v2437 = vld [vmem:[%s2429 + $0x38] sm:$0xff]
    %v2446 = vunpack.c.l.b16 %v2430
    %v2447 = vunpack.c.h.b16 %v2430
    %v2448 = vunpack.c.l.b16 %v2431
    %v2449 = vunpack.c.h.b16 %v2431
    %v2450 = vunpack.c.l.b16 %v2432
    %v2451 = vunpack.c.h.b16 %v2432
    %v2452 = vunpack.c.l.b16 %v2433
    %v2453 = vunpack.c.h.b16 %v2433
    %v2454 = vunpack.c.l.b16 %v2434
    %v2455 = vunpack.c.h.b16 %v2434
    %v2456 = vunpack.c.l.b16 %v2435
    %v2457 = vunpack.c.h.b16 %v2435
    %v2458 = vunpack.c.l.b16 %v2436
    %v2459 = vunpack.c.h.b16 %v2436
    %v2460 = vunpack.c.l.b16 %v2437
    %v2461 = vunpack.c.h.b16 %v2437
    %v2462 = vpack.c.b16 %v2448, %v2446
    %v2463 = vpack.c.b16 %v2449, %v2447
    %v2464 = vpack.c.b16 %v2452, %v2450
    %v2465 = vpack.c.b16 %v2453, %v2451
    %v2466 = vpack.c.b16 %v2456, %v2454
    %v2467 = vpack.c.b16 %v2457, %v2455
    %v2468 = vpack.c.b16 %v2460, %v2458
    %v2469 = vpack.c.b16 %v2461, %v2459
    %v2479 = vsel %vm110, %v2428, 0
    %2481 = vmatprep.subr.bf16.mxu0 %v2463
    %2482 = vmatpush1.bf16.msra.mxu0 %v2462
    %2483 = vmatprep.subr.bf16.mxu0 %v2465
    %2484 = vmatpush1.bf16.msra.mxu0 %v2464
    %2485 = vmatprep.subr.bf16.mxu0 %v2467
    %2486 = vmatpush1.bf16.msra.mxu0 %v2466
    %2487 = vmatprep.subr.bf16.mxu0 %v2469
    %2488 = vmatpush1.bf16.msra.mxu0 %v2468
    %2489 = vmatprep.subr.bf16.mxu0 0
    %2490 = vmatpush1.bf16.msra.mxu0 0
    %2491 = vmatprep.subr.bf16.mxu0 0
    %2492 = vmatpush1.bf16.msra.mxu0 0
    %2493 = vmatprep.subr.bf16.mxu0 0
    %2494 = vmatpush1.bf16.msra.mxu0 0
    %2495 = vmatprep.subr.bf16.mxu0 0
    %2496 = vmatpush1.bf16.msra.mxu0 0
    %2497 = vmatprep.subr.bf16.mxu0 0
    %2498 = vmatpush1.bf16.msra.mxu0 0
    %2499 = vmatprep.subr.bf16.mxu0 0
    %2500 = vmatpush1.bf16.msra.mxu0 0
    %2501 = vmatprep.subr.bf16.mxu0 0
    %2502 = vmatpush1.bf16.msra.mxu0 0
    %2503 = vmatprep.subr.bf16.mxu0 0
    %2504 = vmatpush1.bf16.msra.mxu0 0
    %2505 = vmatprep.subr.bf16.mxu0 0
    %2506 = vmatpush1.bf16.msra.mxu0 0
    %2507 = vmatprep.subr.bf16.mxu0 0
    %2508 = vmatpush1.bf16.msra.mxu0 0
    %2509 = vmatprep.subr.bf16.mxu0 0
    %2510 = vmatpush1.bf16.msra.mxu0 0
    %2511 = vmatprep.subr.bf16.mxu0 0
    %2512 = vmatpush1.bf16.msra.mxu0 0
    %2513 = vmatprep.mubr.bf16.mxu0 0
    %2514 = vmatmul.mubr.bf16.gmra.mrb[0].mxu0 %v2479
    %v2515 = vpop.f32.mrb[0].mxu0
    %v2516 = vadd.f32 0.0, %v2515
    %v2517 = vpop.f32.mrb[0].mxu0
    %v2518 = vadd.f32 0.0, %v2517
    %v2519 = vpop.f32.mrb[0].mxu0
    %v2520 = vadd.f32 0.0, %v2519
    %v2521 = vpop.f32.mrb[0].mxu0
    %v2522 = vadd.f32 0.0, %v2521
    %2523 = vdwg.mxu0
    %v2524 = vpack.c.bf16 %v2520, %v2516
    %v2525 = vpack.c.bf16 %v2522, %v2518
    %v2526 = vmul.bf16 %v2524, %v268
    %v2527 = vmul.bf16 %v2524, %v270
    %v2528 = vmul.bf16 %v2524, %v272
    %v2529 = vmul.bf16 %v2524, %v274
    %v2530 = vmul.bf16 %v2525, %v263
    %v2531 = vmul.bf16 %v2525, %v264
    %v2532 = vmul.bf16 %v2525, %v265
    %v2533 = vmul.bf16 %v2525, %v266
    %2538 = vrot.lane.b32.xlu0 %v2526, 64
    %v2539 = vpop.permute.xlu0 %2538
    %2540 = vrot.lane.b32.xlu0 %v2527, 64
    %v2541 = vpop.permute.xlu0 %2540
    %2542 = vrot.lane.b32.xlu0 %v2528, 64
    %v2543 = vpop.permute.xlu0 %2542
    %2544 = vrot.lane.b32.xlu0 %v2529, 64
    %v2545 = vpop.permute.xlu0 %2544
    %v2547 = vsel %vm110, %v2524, 0
    %v2550 = vsel %vm110, %v2539, 0
    %v2553 = vsel %vm110, %v2541, 0
    %v2556 = vsel %vm110, %v2543, 0
    %v2559 = vsel %vm110, %v2545, 0
    %2561 = vmatprep.subr.bf16.mxu0 0
    %2562 = vmatpush1.bf16.xpose.msra.mxu0 %v2550
    %2563 = vmatprep.subr.bf16.mxu0 0
    %2564 = vmatpush1.bf16.xpose.msra.mxu0 %v2553
    %2565 = vmatprep.subr.bf16.mxu0 0
    %2566 = vmatpush1.bf16.xpose.msra.mxu0 %v2556
    %2567 = vmatprep.subr.bf16.mxu0 0
    %2568 = vmatpush1.bf16.xpose.msra.mxu0 %v2559
    %2569 = vmatprep.subr.bf16.mxu0 0
    %2570 = vmatpush1.bf16.xpose.msra.mxu0 0
    %2571 = vmatprep.subr.bf16.mxu0 0
    %2572 = vmatpush1.bf16.xpose.msra.mxu0 0
    %2573 = vmatprep.subr.bf16.mxu0 0
    %2574 = vmatpush1.bf16.xpose.msra.mxu0 0
    %2575 = vmatprep.subr.bf16.mxu0 0
    %2576 = vmatpush1.bf16.xpose.msra.mxu0 0
    %2577 = vmatprep.subr.bf16.mxu0 0
    %2578 = vmatpush1.bf16.xpose.msra.mxu0 0
    %2579 = vmatprep.subr.bf16.mxu0 0
    %2580 = vmatpush1.bf16.xpose.msra.mxu0 0
    %2581 = vmatprep.subr.bf16.mxu0 0
    %2582 = vmatpush1.bf16.xpose.msra.mxu0 0
    %2583 = vmatprep.subr.bf16.mxu0 0
    %2584 = vmatpush1.bf16.xpose.msra.mxu0 0
    %2585 = vmatprep.subr.bf16.mxu0 0
    %2586 = vmatpush1.bf16.xpose.msra.mxu0 0
    %2587 = vmatprep.subr.bf16.mxu0 0
    %2588 = vmatpush1.bf16.xpose.msra.mxu0 0
    %2589 = vmatprep.subr.bf16.mxu0 0
    %2590 = vmatpush1.bf16.xpose.msra.mxu0 0
    %2591 = vmatprep.subr.bf16.mxu0 0
    %2592 = vmatpush1.bf16.xpose.msra.mxu0 0
    %2593 = vmatprep.mubr.bf16.mxu0 0
    %2594 = vmatmul.mubr.bf16.gmra.mrb[0].mxu0 %v2547
    %v2595 = vpop.f32.mrb[0].mxu0
    %v2596 = vadd.f32 %v104, %v2595
    %v2597 = vpop.f32.mrb[0].mxu0
    %v2598 = vpop.f32.mrb[0].mxu0
    %v2599 = vadd.f32 %v105, %v2598
    %v2600 = vpop.f32.mrb[0].mxu0
    %2601 = vdwg.mxu0
    %v2602 = vsel %vm110, %v2596, -inf
    %2603 = vmax.xlane.f32.xlu0 %v2602
    %v2604 = vpop.xlane.xlu0 %2603
    %v2605 = vsel %vm110, %v2599, -inf
    %2606 = vmax.xlane.f32.xlu0 %v2605
    %v2607 = vpop.xlane.xlu0 %2606
    %v2608 = vsub.f32 %v2596, %v2604
    %v2609 = vsub.f32 %v2599, %v2607
    %v2610 = vmul.f32 %v2608, 1.442695
    %v2611 = vpow.pop %v2610
    %v2612 = vmul.f32 %v2609, 1.442695
    %v2613 = vpow.pop %v2612
    %v2614 = vpack.c.bf16 %v2613, %v2611
    %v2616 = vsel %vm110, %v2614, 0
    %2618 = vmatprep.subr.bf16.mxu0 0
    %2619 = vmatpush1.bf16.msra.mxu0 %v388
    %2620 = vmatprep.subr.bf16.mxu0 0
    %2621 = vmatpush1.bf16.msra.mxu0 %v389
    %2622 = vmatprep.subr.bf16.mxu0 0
    %2623 = vmatpush1.bf16.msra.mxu0 %v390
    %2624 = vmatprep.subr.bf16.mxu0 0
    %2625 = vmatpush1.bf16.msra.mxu0 %v391
    %2626 = vmatprep.subr.bf16.mxu0 0
    %2627 = vmatpush1.bf16.msra.mxu0 0
    %2628 = vmatprep.subr.bf16.mxu0 0
    %2629 = vmatpush1.bf16.msra.mxu0 0
    %2630 = vmatprep.subr.bf16.mxu0 0
    %2631 = vmatpush1.bf16.msra.mxu0 0
    %2632 = vmatprep.subr.bf16.mxu0 0
    %2633 = vmatpush1.bf16.msra.mxu0 0
    %2634 = vmatprep.subr.bf16.mxu0 0
    %2635 = vmatpush1.bf16.msra.mxu0 0
    %2636 = vmatprep.subr.bf16.mxu0 0
    %2637 = vmatpush1.bf16.msra.mxu0 0
    %2638 = vmatprep.subr.bf16.mxu0 0
    %2639 = vmatpush1.bf16.msra.mxu0 0
    %2640 = vmatprep.subr.bf16.mxu0 0
    %2641 = vmatpush1.bf16.msra.mxu0 0
    %2642 = vmatprep.subr.bf16.mxu0 0
    %2643 = vmatpush1.bf16.msra.mxu0 0
    %2644 = vmatprep.subr.bf16.mxu0 0
    %2645 = vmatpush1.bf16.msra.mxu0 0
    %2646 = vmatprep.subr.bf16.mxu0 0
    %2647 = vmatpush1.bf16.msra.mxu0 0
    %2648 = vmatprep.subr.bf16.mxu0 0
    %2649 = vmatpush1.bf16.msra.mxu0 0
    %2650 = vmatprep.mubr.bf16.mxu0 0
    %2651 = vmatmul.mubr.bf16.gmra.mrb[0].mxu0 %v2616
    %v2652 = vpop.f32.mrb[0].mxu0
    %v2653 = vadd.f32 1e-30, %v2652
    %v2654 = vpop.f32.mrb[0].mxu0
    %v2655 = vpop.f32.mrb[0].mxu0
    %v2656 = vadd.f32 1e-30, %v2655
    %v2657 = vpop.f32.mrb[0].mxu0
    %2658 = vdwg.mxu0
    %v2659 = vrcp.pop %v2653
    %v2660 = vrcp.pop %v2656
    %v2661 = vmul.f32 %v2611, %v2659
    %v2662 = vmul.f32 %v2613, %v2660
    %v2663 = vpack.c.bf16 %v2662, %v2661
    %v2665 = vsel %vm110, %v2663, 0
    %2667 = vmatprep.subr.bf16.mxu0 0
    %2668 = vmatpush1.bf16.msra.mxu0 %v2530
    %2669 = vmatprep.subr.bf16.mxu0 0
    %2670 = vmatpush1.bf16.msra.mxu0 %v2531
    %2671 = vmatprep.subr.bf16.mxu0 0
    %2672 = vmatpush1.bf16.msra.mxu0 %v2532
    %2673 = vmatprep.subr.bf16.mxu0 0
    %2674 = vmatpush1.bf16.msra.mxu0 %v2533
    %2675 = vmatprep.subr.bf16.mxu0 0
    %2676 = vmatpush1.bf16.msra.mxu0 0
    %2677 = vmatprep.subr.bf16.mxu0 0
    %2678 = vmatpush1.bf16.msra.mxu0 0
    %2679 = vmatprep.subr.bf16.mxu0 0
    %2680 = vmatpush1.bf16.msra.mxu0 0
    %2681 = vmatprep.subr.bf16.mxu0 0
    %2682 = vmatpush1.bf16.msra.mxu0 0
    %2683 = vmatprep.subr.bf16.mxu0 0
    %2684 = vmatpush1.bf16.msra.mxu0 0
    %2685 = vmatprep.subr.bf16.mxu0 0
    %2686 = vmatpush1.bf16.msra.mxu0 0
    %2687 = vmatprep.subr.bf16.mxu0 0
    %2688 = vmatpush1.bf16.msra.mxu0 0
    %2689 = vmatprep.subr.bf16.mxu0 0
    %2690 = vmatpush1.bf16.msra.mxu0 0
    %2691 = vmatprep.subr.bf16.mxu0 0
    %2692 = vmatpush1.bf16.msra.mxu0 0
    %2693 = vmatprep.subr.bf16.mxu0 0
    %2694 = vmatpush1.bf16.msra.mxu0 0
    %2695 = vmatprep.subr.bf16.mxu0 0
    %2696 = vmatpush1.bf16.msra.mxu0 0
    %2697 = vmatprep.subr.bf16.mxu0 0
    %2698 = vmatpush1.bf16.msra.mxu0 0
    %2699 = vmatprep.mubr.bf16.mxu0 0
    %2700 = vmatmul.mubr.bf16.gmra.mrb[0].mxu0 %v2665
    %v2701 = vpop.f32.mrb[0].mxu0
    %v2702 = vadd.f32 0.0, %v2701
    %v2703 = vpop.f32.mrb[0].mxu0
    %v2704 = vpop.f32.mrb[0].mxu0
    %v2705 = vadd.f32 0.0, %v2704
    %v2706 = vpop.f32.mrb[0].mxu0
    %2707 = vdwg.mxu0
    %v2708 = vpack.c.bf16 %v2705, %v2702
    %s2709 = scalar_lea.vmem %s7, 96
    %v2710 = vld [vmem:[%s2709] sm:$0xf]
    %v2711 = vld [vmem:[%s2709 + $0x4] sm:$0xf]
    %v2712 = vld [vmem:[%s2709 + $0x8] sm:$0xf]
    %v2713 = vld [vmem:[%s2709 + $0xc] sm:$0xf]
    %v2714 = vld [vmem:[%s2709 + $0x10] sm:$0xf]
    %v2715 = vld [vmem:[%s2709 + $0x14] sm:$0xf]
    %v2716 = vld [vmem:[%s2709 + $0x18] sm:$0xf]
    %v2717 = vld [vmem:[%s2709 + $0x1c] sm:$0xf]
    %v2726 = vunpack.c.l.b16 %v2710
    %v2727 = vunpack.c.l.b16 %v2711
    %v2728 = vunpack.c.l.b16 %v2712
    %v2729 = vunpack.c.l.b16 %v2713
    %v2730 = vunpack.c.l.b16 %v2714
    %v2731 = vunpack.c.l.b16 %v2715
    %v2732 = vunpack.c.l.b16 %v2716
    %v2733 = vunpack.c.l.b16 %v2717
    %v2734 = vpack.c.b16 %v2727, %v2726
    %v2735 = vpack.c.b16 %v2729, %v2728
    %v2736 = vpack.c.b16 %v2731, %v2730
    %v2737 = vpack.c.b16 %v2733, %v2732
    %v2743 = vsel %vm110, %v2708, 0
    %2745 = vmatprep.subr.bf16.mxu0 0
    %2746 = vmatpush1.bf16.msra.mxu0 %v2734
    %2747 = vmatprep.subr.bf16.mxu0 0
    %2748 = vmatpush1.bf16.msra.mxu0 %v2735
    %2749 = vmatprep.subr.bf16.mxu0 0
    %2750 = vmatpush1.bf16.msra.mxu0 %v2736
    %2751 = vmatprep.subr.bf16.mxu0 0
    %2752 = vmatpush1.bf16.msra.mxu0 %v2737
    %2753 = vmatprep.subr.bf16.mxu0 0
    %2754 = vmatpush1.bf16.msra.mxu0 0
    %2755 = vmatprep.subr.bf16.mxu0 0
    %2756 = vmatpush1.bf16.msra.mxu0 0
    %2757 = vmatprep.subr.bf16.mxu0 0
    %2758 = vmatpush1.bf16.msra.mxu0 0
    %2759 = vmatprep.subr.bf16.mxu0 0
    %2760 = vmatpush1.bf16.msra.mxu0 0
    %2761 = vmatprep.subr.bf16.mxu0 0
    %2762 = vmatpush1.bf16.msra.mxu0 0
    %2763 = vmatprep.subr.bf16.mxu0 0
    %2764 = vmatpush1.bf16.msra.mxu0 0
    %2765 = vmatprep.subr.bf16.mxu0 0
    %2766 = vmatpush1.bf16.msra.mxu0 0
    %2767 = vmatprep.subr.bf16.mxu0 0
    %2768 = vmatpush1.bf16.msra.mxu0 0
    %2769 = vmatprep.subr.bf16.mxu0 0
    %2770 = vmatpush1.bf16.msra.mxu0 0
    %2771 = vmatprep.subr.bf16.mxu0 0
    %2772 = vmatpush1.bf16.msra.mxu0 0
    %2773 = vmatprep.subr.bf16.mxu0 0
    %2774 = vmatpush1.bf16.msra.mxu0 0
    %2775 = vmatprep.subr.bf16.mxu0 0
    %2776 = vmatpush1.bf16.msra.mxu0 0
    %2777 = vmatprep.mubr.bf16.mxu0 0
    %2778 = vmatmul.mubr.bf16.gmra.mrb[0].mxu0 %v2743
    %v2779 = vpop.f32.mrb[0].mxu0
    %v2780 = vadd.f32 0.0, %v2779
    %v2781 = vpop.f32.mrb[0].mxu0
    %v2782 = vpop.f32.mrb[0].mxu0
    %v2783 = vadd.f32 0.0, %v2782
    %v2784 = vpop.f32.mrb[0].mxu0
    %2785 = vdwg.mxu0
    %v2786 = vadd.f32 %v2386, %v2780
    %v2787 = vadd.f32 %v2387, %v2783
    %v2788 = vld [vmem:[%s8 + $0x3] sm:$0x1]
    %v2789 = vlaneseq
    %v2790 = vshrl.u32 %v2789, 7
    %v2791 = vsub.s32 0, %v2790
    %v2792 = vrot.slane %v2788, %v2791
    %v2793 = vadd.f32 %v2786, %v2792
    %v2794 = vadd.f32 %v2787, %v2792
    %v2795 = vld [vmem:[%s9 + $0x3] sm:$0x1]
    %v2796 = vld [vmem:[%s10 + $0x3] sm:$0x1]
    %v2797 = vsel %vm110, %v2793, 0.0
    %2798 = vadd.xlane.f32.xlu0 %v2797
    %v2799 = vpop.xlane.xlu0 %2798
    %v2800 = vsel %vm110, %v2794, 0.0
    %2801 = vadd.xlane.f32.xlu0 %v2800
    %v2802 = vpop.xlane.xlu0 %2801
    %v2803 = vmul.f32 %v2799, %v117
    %v2804 = vmul.f32 %v2802, %v117
    %v2805 = vsub.f32 %v2793, %v2803
    %v2806 = vsub.f32 %v2794, %v2804
    %v2807 = vmul.f32 %v2805, %v2805
    %v2808 = vmul.f32 %v2806, %v2806
    %v2809 = vsel %vm110, %v2807, 0.0
    %2810 = vadd.xlane.f32.xlu0 %v2809
    %v2811 = vpop.xlane.xlu0 %2810
    %v2812 = vsel %vm110, %v2808, 0.0
    %2813 = vadd.xlane.f32.xlu0 %v2812
    %v2814 = vpop.xlane.xlu0 %2813
    %v2815 = vmul.f32 %v2811, %v117
    %v2816 = vmul.f32 %v2814, %v117
    %v2817 = vadd.f32 %v2815, 1e-05
    %v2818 = vadd.f32 %v2816, 1e-05
    %v2819 = vrsqrt.pop %v2817
    %v2820 = vrsqrt.pop %v2818
    %v2821 = vmul.f32 %v2805, %v2819
    %v2822 = vmul.f32 %v2806, %v2820
    %v2823 = vlaneseq
    %v2824 = vshrl.u32 %v2823, 7
    %v2825 = vsub.s32 0, %v2824
    %v2826 = vrot.slane %v2795, %v2825
    %v2827 = vmul.f32 %v2821, %v2826
    %v2828 = vmul.f32 %v2822, %v2826
    %v2829 = vlaneseq
    %v2830 = vshrl.u32 %v2829, 7
    %v2831 = vsub.s32 0, %v2830
    %v2832 = vrot.slane %v2796, %v2831
    %v2833 = vadd.f32 %v2827, %v2832
    %v2834 = vadd.f32 %v2828, %v2832
    %v2835 = vpack.c.bf16 %v2834, %v2833
    %s2836 = scalar_lea.vmem %s11, 192
    %v2837 = vld [vmem:[%s2836] sm:$0xff]
    %v2838 = vld [vmem:[%s2836 + $0x8] sm:$0xff]
    %v2839 = vld [vmem:[%s2836 + $0x10] sm:$0xff]
    %v2840 = vld [vmem:[%s2836 + $0x18] sm:$0xff]
    %v2841 = vld [vmem:[%s2836 + $0x20] sm:$0xff]
    %v2842 = vld [vmem:[%s2836 + $0x28] sm:$0xff]
    %v2843 = vld [vmem:[%s2836 + $0x30] sm:$0xff]
    %v2844 = vld [vmem:[%s2836 + $0x38] sm:$0xff]
    %s2845 = scalar_lea.vmem %s12, 3
    %v2846 = vld [vmem:[%s2845] ss:$4 sm:$0x3]
    %v2848 = vlaneseq
    %v2849 = vshrl.u32 %v2848, 7
    %v2850 = vsub.s32 0, %v2849
    %v2851 = vrot.slane %v2846, %v2850
    %v2852 = vlaneseq
    %v2853 = vshrl.u32 %v2852, 7
    %v2854 = vsub.s32 1, %v2853
    %v2855 = vrot.slane %v2846, %v2854
    %v2866 = vunpack.c.l.b16 %v2837
    %v2867 = vunpack.c.h.b16 %v2837
    %v2868 = vunpack.c.l.b16 %v2838
    %v2869 = vunpack.c.h.b16 %v2838
    %v2870 = vunpack.c.l.b16 %v2839
    %v2871 = vunpack.c.h.b16 %v2839
    %v2872 = vunpack.c.l.b16 %v2840
    %v2873 = vunpack.c.h.b16 %v2840
    %v2874 = vunpack.c.l.b16 %v2841
    %v2875 = vunpack.c.h.b16 %v2841
    %v2876 = vunpack.c.l.b16 %v2842
    %v2877 = vunpack.c.h.b16 %v2842
    %v2878 = vunpack.c.l.b16 %v2843
    %v2879 = vunpack.c.h.b16 %v2843
    %v2880 = vunpack.c.l.b16 %v2844
    %v2881 = vunpack.c.h.b16 %v2844
    %v2882 = vpack.c.b16 %v2868, %v2866
    %v2883 = vpack.c.b16 %v2869, %v2867
    %v2884 = vpack.c.b16 %v2872, %v2870
    %v2885 = vpack.c.b16 %v2873, %v2871
    %v2886 = vpack.c.b16 %v2876, %v2874
    %v2887 = vpack.c.b16 %v2877, %v2875
    %v2888 = vpack.c.b16 %v2880, %v2878
    %v2889 = vpack.c.b16 %v2881, %v2879
    %v2899 = vsel %vm110, %v2835, 0
    %2901 = vmatprep.subr.bf16.mxu0 %v2883
    %2902 = vmatpush1.bf16.msra.mxu0 %v2882
    %2903 = vmatprep.subr.bf16.mxu0 %v2885
    %2904 = vmatpush1.bf16.msra.mxu0 %v2884
    %2905 = vmatprep.subr.bf16.mxu0 %v2887
    %2906 = vmatpush1.bf16.msra.mxu0 %v2886
    %2907 = vmatprep.subr.bf16.mxu0 %v2889
    %2908 = vmatpush1.bf16.msra.mxu0 %v2888
    %2909 = vmatprep.subr.bf16.mxu0 0
    %2910 = vmatpush1.bf16.msra.mxu0 0
    %2911 = vmatprep.subr.bf16.mxu0 0
    %2912 = vmatpush1.bf16.msra.mxu0 0
    %2913 = vmatprep.subr.bf16.mxu0 0
    %2914 = vmatpush1.bf16.msra.mxu0 0
    %2915 = vmatprep.subr.bf16.mxu0 0
    %2916 = vmatpush1.bf16.msra.mxu0 0
    %2917 = vmatprep.subr.bf16.mxu0 0
    %2918 = vmatpush1.bf16.msra.mxu0 0
    %2919 = vmatprep.subr.bf16.mxu0 0
    %2920 = vmatpush1.bf16.msra.mxu0 0
    %2921 = vmatprep.subr.bf16.mxu0 0
    %2922 = vmatpush1.bf16.msra.mxu0 0
    %2923 = vmatprep.subr.bf16.mxu0 0
    %2924 = vmatpush1.bf16.msra.mxu0 0
    %2925 = vmatprep.subr.bf16.mxu0 0
    %2926 = vmatpush1.bf16.msra.mxu0 0
    %2927 = vmatprep.subr.bf16.mxu0 0
    %2928 = vmatpush1.bf16.msra.mxu0 0
    %2929 = vmatprep.subr.bf16.mxu0 0
    %2930 = vmatpush1.bf16.msra.mxu0 0
    %2931 = vmatprep.subr.bf16.mxu0 0
    %2932 = vmatpush1.bf16.msra.mxu0 0
    %2933 = vmatprep.mubr.bf16.mxu0 0
    %2934 = vmatmul.mubr.bf16.gmra.mrb[0].mxu0 %v2899
    %v2935 = vpop.f32.mrb[0].mxu0
    %v2936 = vadd.f32 %v2851, %v2935
    %v2937 = vpop.f32.mrb[0].mxu0
    %v2938 = vadd.f32 %v2855, %v2937
    %v2939 = vpop.f32.mrb[0].mxu0
    %v2940 = vadd.f32 %v2851, %v2939
    %v2941 = vpop.f32.mrb[0].mxu0
    %v2942 = vadd.f32 %v2855, %v2941
    %2943 = vdwg.mxu0
    %v2944 = vmax.f32 %v2936, 0.0
    %v2945 = vmax.f32 %v2938, 0.0
    %v2946 = vmax.f32 %v2940, 0.0
    %v2947 = vmax.f32 %v2942, 0.0
    %v2948 = vpack.c.bf16 %v2946, %v2944
    %v2949 = vpack.c.bf16 %v2947, %v2945
    %s2950 = scalar_lea.vmem %s13, 384
    %v2951 = vld [vmem:[%s2950] sm:$0xf]
    %v2952 = vld [vmem:[%s2950 + $0x4] sm:$0xf]
    %v2953 = vld [vmem:[%s2950 + $0x8] sm:$0xf]
    %v2954 = vld [vmem:[%s2950 + $0xc] sm:$0xf]
    %v2955 = vld [vmem:[%s2950 + $0x10] sm:$0xf]
    %v2956 = vld [vmem:[%s2950 + $0x14] sm:$0xf]
    %v2957 = vld [vmem:[%s2950 + $0x18] sm:$0xf]
    %v2958 = vld [vmem:[%s2950 + $0x1c] sm:$0xf]
    %v2959 = vld [vmem:[%s2950 + $0x20] sm:$0xf]
    %v2960 = vld [vmem:[%s2950 + $0x24] sm:$0xf]
    %v2961 = vld [vmem:[%s2950 + $0x28] sm:$0xf]
    %v2962 = vld [vmem:[%s2950 + $0x2c] sm:$0xf]
    %v2963 = vld [vmem:[%s2950 + $0x30] sm:$0xf]
    %v2964 = vld [vmem:[%s2950 + $0x34] sm:$0xf]
    %v2965 = vld [vmem:[%s2950 + $0x38] sm:$0xf]
    %v2966 = vld [vmem:[%s2950 + $0x3c] sm:$0xf]
    %v2967 = vld [vmem:[%s2950 + $0x40] sm:$0xf]
    %v2968 = vld [vmem:[%s2950 + $0x44] sm:$0xf]
    %v2969 = vld [vmem:[%s2950 + $0x48] sm:$0xf]
    %v2970 = vld [vmem:[%s2950 + $0x4c] sm:$0xf]
    %v2971 = vld [vmem:[%s2950 + $0x50] sm:$0xf]
    %v2972 = vld [vmem:[%s2950 + $0x54] sm:$0xf]
    %v2973 = vld [vmem:[%s2950 + $0x58] sm:$0xf]
    %v2974 = vld [vmem:[%s2950 + $0x5c] sm:$0xf]
    %v2975 = vld [vmem:[%s2950 + $0x60] sm:$0xf]
    %v2976 = vld [vmem:[%s2950 + $0x64] sm:$0xf]
    %v2977 = vld [vmem:[%s2950 + $0x68] sm:$0xf]
    %v2978 = vld [vmem:[%s2950 + $0x6c] sm:$0xf]
    %v2979 = vld [vmem:[%s2950 + $0x70] sm:$0xf]
    %v2980 = vld [vmem:[%s2950 + $0x74] sm:$0xf]
    %v2981 = vld [vmem:[%s2950 + $0x78] sm:$0xf]
    %v2982 = vld [vmem:[%s2950 + $0x7c] sm:$0xf]
    %v3015 = vunpack.c.l.b16 %v2951
    %v3016 = vunpack.c.l.b16 %v2952
    %v3017 = vunpack.c.l.b16 %v2953
    %v3018 = vunpack.c.l.b16 %v2954
    %v3019 = vunpack.c.l.b16 %v2955
    %v3020 = vunpack.c.l.b16 %v2956
    %v3021 = vunpack.c.l.b16 %v2957
    %v3022 = vunpack.c.l.b16 %v2958
    %v3023 = vunpack.c.l.b16 %v2959
    %v3024 = vunpack.c.l.b16 %v2960
    %v3025 = vunpack.c.l.b16 %v2961
    %v3026 = vunpack.c.l.b16 %v2962
    %v3027 = vunpack.c.l.b16 %v2963
    %v3028 = vunpack.c.l.b16 %v2964
    %v3029 = vunpack.c.l.b16 %v2965
    %v3030 = vunpack.c.l.b16 %v2966
    %v3031 = vunpack.c.l.b16 %v2967
    %v3032 = vunpack.c.l.b16 %v2968
    %v3033 = vunpack.c.l.b16 %v2969
    %v3034 = vunpack.c.l.b16 %v2970
    %v3035 = vunpack.c.l.b16 %v2971
    %v3036 = vunpack.c.l.b16 %v2972
    %v3037 = vunpack.c.l.b16 %v2973
    %v3038 = vunpack.c.l.b16 %v2974
    %v3039 = vunpack.c.l.b16 %v2975
    %v3040 = vunpack.c.l.b16 %v2976
    %v3041 = vunpack.c.l.b16 %v2977
    %v3042 = vunpack.c.l.b16 %v2978
    %v3043 = vunpack.c.l.b16 %v2979
    %v3044 = vunpack.c.l.b16 %v2980
    %v3045 = vunpack.c.l.b16 %v2981
    %v3046 = vunpack.c.l.b16 %v2982
    %v3047 = vpack.c.b16 %v3016, %v3015
    %v3048 = vpack.c.b16 %v3018, %v3017
    %v3049 = vpack.c.b16 %v3020, %v3019
    %v3050 = vpack.c.b16 %v3022, %v3021
    %v3051 = vpack.c.b16 %v3024, %v3023
    %v3052 = vpack.c.b16 %v3026, %v3025
    %v3053 = vpack.c.b16 %v3028, %v3027
    %v3054 = vpack.c.b16 %v3030, %v3029
    %v3055 = vpack.c.b16 %v3032, %v3031
    %v3056 = vpack.c.b16 %v3034, %v3033
    %v3057 = vpack.c.b16 %v3036, %v3035
    %v3058 = vpack.c.b16 %v3038, %v3037
    %v3059 = vpack.c.b16 %v3040, %v3039
    %v3060 = vpack.c.b16 %v3042, %v3041
    %v3061 = vpack.c.b16 %v3044, %v3043
    %v3062 = vpack.c.b16 %v3046, %v3045
    %3079 = vmatprep.subr.bf16.mxu0 0
    %3080 = vmatpush1.bf16.msra.mxu0 %v3047
    %3081 = vmatprep.subr.bf16.mxu0 0
    %3082 = vmatpush1.bf16.msra.mxu0 %v3048
    %3083 = vmatprep.subr.bf16.mxu0 0
    %3084 = vmatpush1.bf16.msra.mxu0 %v3049
    %3085 = vmatprep.subr.bf16.mxu0 0
    %3086 = vmatpush1.bf16.msra.mxu0 %v3050
    %3087 = vmatprep.subr.bf16.mxu0 0
    %3088 = vmatpush1.bf16.msra.mxu0 %v3051
    %3089 = vmatprep.subr.bf16.mxu0 0
    %3090 = vmatpush1.bf16.msra.mxu0 %v3052
    %3091 = vmatprep.subr.bf16.mxu0 0
    %3092 = vmatpush1.bf16.msra.mxu0 %v3053
    %3093 = vmatprep.subr.bf16.mxu0 0
    %3094 = vmatpush1.bf16.msra.mxu0 %v3054
    %3095 = vmatprep.subr.bf16.mxu0 0
    %3096 = vmatpush1.bf16.msra.mxu0 %v3055
    %3097 = vmatprep.subr.bf16.mxu0 0
    %3098 = vmatpush1.bf16.msra.mxu0 %v3056
    %3099 = vmatprep.subr.bf16.mxu0 0
    %3100 = vmatpush1.bf16.msra.mxu0 %v3057
    %3101 = vmatprep.subr.bf16.mxu0 0
    %3102 = vmatpush1.bf16.msra.mxu0 %v3058
    %3103 = vmatprep.subr.bf16.mxu0 0
    %3104 = vmatpush1.bf16.msra.mxu0 %v3059
    %3105 = vmatprep.subr.bf16.mxu0 0
    %3106 = vmatpush1.bf16.msra.mxu0 %v3060
    %3107 = vmatprep.subr.bf16.mxu0 0
    %3108 = vmatpush1.bf16.msra.mxu0 %v3061
    %3109 = vmatprep.subr.bf16.mxu0 0
    %3110 = vmatpush1.bf16.msra.mxu0 %v3062
    %3111 = vmatprep.mubr.bf16.mxu0 %v2949
    %3112 = vmatmul.mubr.bf16.gmra.mrb[0].mxu0 %v2948
    %v3113 = vpop.f32.mrb[0].mxu0
    %v3114 = vadd.f32 0.0, %v3113
    %v3115 = vpop.f32.mrb[0].mxu0
    %v3116 = vpop.f32.mrb[0].mxu0
    %v3117 = vadd.f32 0.0, %v3116
    %v3118 = vpop.f32.mrb[0].mxu0
    %3119 = vdwg.mxu0
    %v3120 = vadd.f32 %v2793, %v3114
    %v3121 = vadd.f32 %v2794, %v3117
    %v3122 = vld [vmem:[%s14 + $0x3] sm:$0x1]
    %v3123 = vlaneseq
    %v3124 = vshrl.u32 %v3123, 7
    %v3125 = vsub.s32 0, %v3124
    %v3126 = vrot.slane %v3122, %v3125
    %v3127 = vadd.f32 %v3120, %v3126
    %v3128 = vadd.f32 %v3121, %v3126
    %v3129 = vld [vmem:[%s15] sm:$0x1]
    %v3130 = vld [vmem:[%s16] sm:$0x1]
    %v3131 = vsel %vm110, %v3127, 0.0
    %3132 = vadd.xlane.f32.xlu0 %v3131
    %v3133 = vpop.xlane.xlu0 %3132
    %v3134 = vsel %vm110, %v3128, 0.0
    %3135 = vadd.xlane.f32.xlu0 %v3134
    %v3136 = vpop.xlane.xlu0 %3135
    %v3137 = vmul.f32 %v3133, %v117
    %v3138 = vmul.f32 %v3136, %v117
    %v3139 = vsub.f32 %v3127, %v3137
    %v3140 = vsub.f32 %v3128, %v3138
    %v3141 = vmul.f32 %v3139, %v3139
    %v3142 = vmul.f32 %v3140, %v3140
    %v3143 = vsel %vm110, %v3141, 0.0
    %3144 = vadd.xlane.f32.xlu0 %v3143
    %v3145 = vpop.xlane.xlu0 %3144
    %v3146 = vsel %vm110, %v3142, 0.0
    %3147 = vadd.xlane.f32.xlu0 %v3146
    %v3148 = vpop.xlane.xlu0 %3147
    %v3149 = vmul.f32 %v3145, %v117
    %v3150 = vmul.f32 %v3148, %v117
    %v3151 = vadd.f32 %v3149, 1e-05
    %v3152 = vadd.f32 %v3150, 1e-05
    %v3153 = vrsqrt.pop %v3151
    %v3154 = vrsqrt.pop %v3152
    %v3155 = vmul.f32 %v3139, %v3153
    %v3156 = vmul.f32 %v3140, %v3154
    %v3158 = vlaneseq
    %v3159 = vshrl.u32 %v3158, 7
    %v3160 = vsub.s32 0, %v3159
    %v3161 = vrot.slane %v3129, %v3160
    %v3163 = vmul.f32 %v3155, %v3161
    %v3164 = vmul.f32 %v3156, %v3161
    %v3166 = vlaneseq
    %v3167 = vshrl.u32 %v3166, 7
    %v3168 = vsub.s32 0, %v3167
    %v3169 = vrot.slane %v3130, %v3168
    %v3171 = vadd.f32 %v3163, %v3169
    %v3172 = vadd.f32 %v3164, %v3169
    %v3173 = vpack.c.bf16 %v3172, %v3171
    %v3174 = vld [vmem:[%s17] sm:$0xf]
    %v3175 = vld [vmem:[%s17 + $0x4] sm:$0xf]
    %v3176 = vld [vmem:[%s17 + $0x8] sm:$0xf]
    %v3177 = vld [vmem:[%s17 + $0xc] sm:$0xf]
    %v3178 = vld [vmem:[%s17 + $0x10] sm:$0xf]
    %v3179 = vld [vmem:[%s17 + $0x14] sm:$0xf]
    %v3180 = vld [vmem:[%s17 + $0x18] sm:$0xf]
    %v3181 = vld [vmem:[%s17 + $0x1c] sm:$0xf]
    %v3182 = vld [vmem:[%s18] sm:$0x1]
    %v3184 = vlaneseq
    %v3185 = vshrl.u32 %v3184, 7
    %v3186 = vsub.s32 0, %v3185
    %v3187 = vrot.slane %v3182, %v3186
    %v3197 = vunpack.c.l.b16 %v3174
    %v3198 = vunpack.c.l.b16 %v3175
    %v3199 = vunpack.c.l.b16 %v3176
    %v3200 = vunpack.c.l.b16 %v3177
    %v3201 = vunpack.c.l.b16 %v3178
    %v3202 = vunpack.c.l.b16 %v3179
    %v3203 = vunpack.c.l.b16 %v3180
    %v3204 = vunpack.c.l.b16 %v3181
    %v3205 = vpack.c.b16 %v3198, %v3197
    %v3206 = vpack.c.b16 %v3200, %v3199
    %v3207 = vpack.c.b16 %v3202, %v3201
    %v3208 = vpack.c.b16 %v3204, %v3203
    %v3214 = vsel %vm110, %v3173, 0
    %3216 = vmatprep.subr.bf16.mxu0 0
    %3217 = vmatpush1.bf16.msra.mxu0 %v3205
    %3218 = vmatprep.subr.bf16.mxu0 0
    %3219 = vmatpush1.bf16.msra.mxu0 %v3206
    %3220 = vmatprep.subr.bf16.mxu0 0
    %3221 = vmatpush1.bf16.msra.mxu0 %v3207
    %3222 = vmatprep.subr.bf16.mxu0 0
    %3223 = vmatpush1.bf16.msra.mxu0 %v3208
    %3224 = vmatprep.subr.bf16.mxu0 0
    %3225 = vmatpush1.bf16.msra.mxu0 0
    %3226 = vmatprep.subr.bf16.mxu0 0
    %3227 = vmatpush1.bf16.msra.mxu0 0
    %3228 = vmatprep.subr.bf16.mxu0 0
    %3229 = vmatpush1.bf16.msra.mxu0 0
    %3230 = vmatprep.subr.bf16.mxu0 0
    %3231 = vmatpush1.bf16.msra.mxu0 0
    %3232 = vmatprep.subr.bf16.mxu0 0
    %3233 = vmatpush1.bf16.msra.mxu0 0
    %3234 = vmatprep.subr.bf16.mxu0 0
    %3235 = vmatpush1.bf16.msra.mxu0 0
    %3236 = vmatprep.subr.bf16.mxu0 0
    %3237 = vmatpush1.bf16.msra.mxu0 0
    %3238 = vmatprep.subr.bf16.mxu0 0
    %3239 = vmatpush1.bf16.msra.mxu0 0
    %3240 = vmatprep.subr.bf16.mxu0 0
    %3241 = vmatpush1.bf16.msra.mxu0 0
    %3242 = vmatprep.subr.bf16.mxu0 0
    %3243 = vmatpush1.bf16.msra.mxu0 0
    %3244 = vmatprep.subr.bf16.mxu0 0
    %3245 = vmatpush1.bf16.msra.mxu0 0
    %3246 = vmatprep.subr.bf16.mxu0 0
    %3247 = vmatpush1.bf16.msra.mxu0 0
    %3248 = vmatprep.mubr.bf16.mxu0 0
    %3249 = vmatmul.mubr.bf16.gmra.mrb[0].mxu0 %v3214
    %v3250 = vpop.f32.mrb[0].mxu0
    %v3251 = vadd.f32 %v3187, %v3250
    %v3252 = vpop.f32.mrb[0].mxu0
    %v3253 = vpop.f32.mrb[0].mxu0
    %v3254 = vadd.f32 %v3187, %v3253
    %v3255 = vpop.f32.mrb[0].mxu0
    %3256 = vdwg.mxu0
    %3257 = vst [vmem:[#allocation7] sm:$0xff] %v3251
    %3258 = vst [vmem:[#allocation7 + $0x8] sm:$0xff] %v3254
    // Predicated region
    $region86: #{tpu_custom_call.1} parent=1 // pred_check
      _
    $region87: #{tpu_custom_call.1} parent=1 // pred_check_branch
      %3260 = sbr.rel (0) target = $region89
    $region88: #{tpu_custom_call.1} parent=1 // pred_region
      %s3262 = ssub.s32 256, 256
      %3263 = vsyncadd [#allocation4], %s3262
      %s3264 = sshll.u32 [#allocation7], 4
      %s3265 = int_to_ptr.vmem [resolvable:$true] %s3264
      %3270 = dma.vmem_to_hbm [thread:$0]  %s3265, 256, %s19, [#allocation4], 128, 128, 8
    $region89: #{tpu_custom_call.1} parent=1 // pred_fallthru
      _
    // Predicated region
    $region90: #{tpu_custom_call.1} parent=1 // pred_check
      _
    $region91: #{tpu_custom_call.1} parent=1 // pred_check_branch
      %3272 = sbr.rel (0) target = $region93
    $region92: #{tpu_custom_call.1} parent=1 // pred_region
      %3273 = dma.done [#allocation4], 256
    $region93: #{tpu_custom_call.1} parent=1 // pred_fallthru
      _
    %3274 = vsyncpa [#allocation3], 1
    %3275 = vsyncpa [#allocation6], 1
    %3276 = vsyncpa [#allocation4], 1

</llo_original>
